<compile_context>
chip_gen: v7x
topology: tpu7x:2x2x1
jax: 0.10.0
libtpu: 0.0.40
codegen_flags: <defaults>
</compile_context>

<pallas_src>
import jax
import jax.numpy as jnp
from jax.experimental import pallas as pl
from jax.experimental.pallas import tpu as pltpu

# ----------------------------- model config ---------------------------------
B = 2          # batch
T = 8          # target (query) sequence length
S = 16         # source (memory) sequence length
D = 32         # d_model
H = 4          # number of attention heads
DH = D // H    # head dim
DFF = 64       # feed-forward hidden dim
NUM_LAYERS = 2
SCALE = 1.0 / (DH ** 0.5)
EPS = 1e-5

# canonical per-layer parameter layout (matches the pure-JAX reference)
PARAM_ORDER = [
    "sa_w", "sa_b", "sa_ow", "sa_ob",          # self-attention in/out proj
    "ca_w", "ca_b", "ca_ow", "ca_ob",          # cross-attention in/out proj
    "l1w", "l1b", "l2w", "l2b",                # feed-forward
    "n1g", "n1b", "n2g", "n2b", "n3g", "n3b",  # layer norms
]

# layout actually fed to the kernel (cross-attn in-proj pre-split into Q / KV)
STACKED_ORDER = [
    "sa_w", "sa_b", "sa_ow", "sa_ob",
    "ca_qw", "ca_qb", "ca_kvw", "ca_kvb", "ca_ow", "ca_ob",
    "l1w", "l1b", "l2w", "l2b",
    "n1g", "n1b", "n2g", "n2b", "n3g", "n3b",
]


# ------------------------------ Pallas kernel --------------------------------
def _decoder_kernel(tgt_ref, src_ref,
                    sa_w_ref, sa_b_ref, sa_ow_ref, sa_ob_ref,
                    ca_qw_ref, ca_qb_ref, ca_kvw_ref, ca_kvb_ref,
                    ca_ow_ref, ca_ob_ref,
                    l1w_ref, l1b_ref, l2w_ref, l2b_ref,
                    n1g_ref, n1b_ref, n2g_ref, n2b_ref, n3g_ref, n3b_ref,
                    out_ref, x_scr):
    l = pl.program_id(0)

    # load the initial activation only once; it then lives in VMEM scratch
    @pl.when(l == 0)
    def _():
        x_scr[...] = tgt_ref[...].astype(jnp.float32)

    x = x_scr[...]                              # (B*T, D) f32
    src = src_ref[...].astype(jnp.float32)      # (B*S, D) f32

    def layer_norm(v, g, b):
        mu = jnp.mean(v, axis=-1, keepdims=True)
        var = jnp.mean((v - mu) ** 2, axis=-1, keepdims=True)
        return (v - mu) * jax.lax.rsqrt(var + EPS) * g + b

    def attention(q, k, v, q_len, kv_len, ow, ob):
        # q: (B*q_len, D)   k, v: (B*kv_len, D)
        # 1) per-(batch, head) score tiles, stacked along sublanes so the
        #    softmax reductions / exp / reciprocal run once over one block.
        tiles = []
        for b in range(B):
            qb = q[b * q_len:(b + 1) * q_len, :]
            kb = k[b * kv_len:(b + 1) * kv_len, :]
            for h in range(H):
                lo, hi = h * DH, (h + 1) * DH
                tiles.append(jnp.dot(qb[:, lo:hi], kb[:, lo:hi].T,
                                     preferred_element_type=jnp.float32))
        s = jnp.concatenate(tiles, axis=0) * SCALE      # (B*H*q_len, kv_len)
        s = s - jnp.max(s, axis=-1, keepdims=True)
        p = jnp.exp(s)
        p = p * pl.reciprocal(jnp.sum(p, axis=-1, keepdims=True), approx=True)
        # 2) per-(batch, head) P @ V, assembled into one (B*q_len, D) block so
        #    the output projection is a single matmul.
        rows = []
        for b in range(B):
            vb = v[b * kv_len:(b + 1) * kv_len, :]
            heads = []
            for h in range(H):
                lo, hi = h * DH, (h + 1) * DH
                off = (b * H + h) * q_len
                heads.append(jnp.dot(p[off:off + q_len, :], vb[:, lo:hi],
                                     preferred_element_type=jnp.float32))
            rows.append(jnp.concatenate(heads, axis=1))  # (q_len, D)
        o = jnp.concatenate(rows, axis=0)                # (B*q_len, D)
        return jnp.dot(o, ow, preferred_element_type=jnp.float32) + ob

    # ---- self-attention block (fused QKV projection: one matmul) ----
    qkv = jnp.dot(x, sa_w_ref[0], preferred_element_type=jnp.float32) + sa_b_ref[0]
    sa = attention(qkv[:, :D], qkv[:, D:2 * D], qkv[:, 2 * D:],
                   T, T, sa_ow_ref[0], sa_ob_ref[0])
    x = layer_norm(x + sa, n1g_ref[0], n1b_ref[0])

    # ---- cross-attention block (Q from tgt, fused K|V from src) ----
    q_c = jnp.dot(x, ca_qw_ref[0], preferred_element_type=jnp.float32) + ca_qb_ref[0]
    kv_c = jnp.dot(src, ca_kvw_ref[0], preferred_element_type=jnp.float32) + ca_kvb_ref[0]
    ca = attention(q_c, kv_c[:, :D], kv_c[:, D:],
                   T, S, ca_ow_ref[0], ca_ob_ref[0])
    x = layer_norm(x + ca, n2g_ref[0], n2b_ref[0])

    # ---- feed-forward block ----
    h1 = jnp.maximum(
        jnp.dot(x, l1w_ref[0], preferred_element_type=jnp.float32) + l1b_ref[0], 0.0)
    ff = jnp.dot(h1, l2w_ref[0], preferred_element_type=jnp.float32) + l2b_ref[0]
    x = layer_norm(x + ff, n3g_ref[0], n3b_ref[0])

    # carry activation to the next layer; write the result only at the end
    x_scr[...] = x

    @pl.when(l == pl.num_programs(0) - 1)
    def _():
        out_ref[...] = x.astype(out_ref.dtype)


# ------------------------------- wrapper --------------------------------------
def transformer_decoder(tgt, src, layer_params):
    """TransformerDecoder.forward: all layers fused into a single pallas_call."""
    num_layers = len(layer_params)
    Bq, Tq, Dm = tgt.shape
    _, Sq, _ = src.shape

    # stack per-layer params with a leading layer axis
    stacked = {k: jnp.stack([p[k] for p in layer_params]) for k in PARAM_ORDER}
    # split the cross-attention in-projection so the kernel never lane-slices
    # a weight ref: Q part (applied to tgt) and fused K|V part (applied to src)
    stacked["ca_qw"] = stacked["ca_w"][:, :, :D]
    stacked["ca_kvw"] = stacked["ca_w"][:, :, D:]
    stacked["ca_qb"] = stacked["ca_b"][:, :, :D]
    stacked["ca_kvb"] = stacked["ca_b"][:, :, D:]

    weight_args = [stacked[k] for k in STACKED_ORDER]

    # whole batch in one block: flatten to (B*T, D) / (B*S, D)
    tgt2 = tgt.reshape(Bq * Tq, Dm)
    src2 = src.reshape(Bq * Sq, Dm)

    in_specs = [
        pl.BlockSpec((Bq * Tq, Dm), lambda l: (0, 0)),   # tgt (read at layer 0)
        pl.BlockSpec((Bq * Sq, Dm), lambda l: (0, 0)),   # src (memory)
    ]
    # per-layer weight block: leading axis indexed by the layer grid position,
    # so layer l+1's weights are prefetched while layer l computes.
    in_specs += [pl.BlockSpec((1,) + w.shape[1:], lambda l: (l, 0, 0))
                 for w in weight_args]

    out = pl.pallas_call(
        _decoder_kernel,
        out_shape=jax.ShapeDtypeStruct((Bq * Tq, Dm), tgt.dtype),
        grid_spec=pltpu.PrefetchScalarGridSpec(
            num_scalar_prefetch=0,
            grid=(num_layers,),
            in_specs=in_specs,
            out_specs=pl.BlockSpec((Bq * Tq, Dm), lambda l: (0, 0)),
            scratch_shapes=[pltpu.VMEM((Bq * Tq, Dm), jnp.float32)],
        ),
        compiler_params=pltpu.CompilerParams(
            dimension_semantics=("arbitrary",)),   # layers are sequential
    )(tgt2, src2, *weight_args)

    return out.reshape(Bq, Tq, Dm)


# -------------------------- deterministic params -----------------------------
def init_layer_params(key):
    ks = jax.random.split(key, 6)
    w = lambda k, shape: (0.02 * jax.random.normal(k, shape, jnp.float32))
    zeros = lambda shape: jnp.zeros(shape, jnp.float32)
    ones = lambda shape: jnp.ones(shape, jnp.float32)
    return {
        "sa_w": w(ks[0], (D, 3 * D)), "sa_b": zeros((1, 3 * D)),
        "sa_ow": w(ks[1], (D, D)),    "sa_ob": zeros((1, D)),
        "ca_w": w(ks[2], (D, 3 * D)), "ca_b": zeros((1, 3 * D)),
        "ca_ow": w(ks[3], (D, D)),    "ca_ob": zeros((1, D)),
        "l1w": w(ks[4], (D, DFF)),    "l1b": zeros((1, DFF)),
        "l2w": w(ks[5], (DFF, D)),    "l2b": zeros((1, D)),
        "n1g": ones((1, D)), "n1b": zeros((1, D)),
        "n2g": ones((1, D)), "n2b": zeros((1, D)),
        "n3g": ones((1, D)), "n3b": zeros((1, D)),
    }


# ----------------------------- pure-JAX reference ----------------------------
def _ref_layer(tgt, src, p):
    def ln(v, g, b):
        mu = jnp.mean(v, axis=-1, keepdims=True)
        var = jnp.mean((v - mu) ** 2, axis=-1, keepdims=True)
        return (v - mu) / jnp.sqrt(var + EPS) * g + b

    def mha(q_in, kv_in, w, bias, ow, ob):
        q = q_in @ w[:, :D] + bias[:, :D]
        k = kv_in @ w[:, D:2 * D] + bias[:, D:2 * D]
        v = kv_in @ w[:, 2 * D:] + bias[:, 2 * D:]
        Bq, Tq, _ = q.shape
        q = q.reshape(Bq, Tq, H, DH).transpose(0, 2, 1, 3)
        k = k.reshape(Bq, -1, H, DH).transpose(0, 2, 1, 3)
        v = v.reshape(Bq, -1, H, DH).transpose(0, 2, 1, 3)
        s = jnp.einsum("bhqd,bhkd->bhqk", q, k) * SCALE
        p_ = jax.nn.softmax(s, axis=-1)
        o = jnp.einsum("bhqk,bhkd->bhqd", p_, v).transpose(0, 2, 1, 3).reshape(Bq, Tq, D)
        return o @ ow + ob

    x = tgt
    x = ln(x + mha(x, x, p["sa_w"], p["sa_b"], p["sa_ow"], p["sa_ob"]), p["n1g"], p["n1b"])
    x = ln(x + mha(x, src, p["ca_w"], p["ca_b"], p["ca_ow"], p["ca_ob"]), p["n2g"], p["n2b"])
    ff = jnp.maximum(x @ p["l1w"] + p["l1b"], 0.0) @ p["l2w"] + p["l2b"]
    x = ln(x + ff, p["n3g"], p["n3b"])
    return x


def _ref_decoder(tgt, src, layer_params):
    out = tgt
    for p in layer_params:
        out = _ref_layer(out, src, p)
    return out


# ---------------------------------- main --------------------------------------
if __name__ == "__main__":
    key = jax.random.PRNGKey(0)
    k_tgt, k_src, k_params = jax.random.split(key, 3)

    tgt = jax.random.normal(k_tgt, (B, T, D), jnp.float32)
    src = jax.random.normal(k_src, (B, S, D), jnp.float32)

    layer_keys = jax.random.split(k_params, NUM_LAYERS)
    layer_params = [init_layer_params(k) for k in layer_keys]

    out = transformer_decoder(tgt, src, layer_params)
    out = jax.block_until_ready(out)

    ref = _ref_decoder(tgt, src, layer_params)
    assert out.shape == (B, T, D)
    # tolerance widened slightly to accommodate the EUP approximate reciprocal
    assert jnp.allclose(out, ref, atol=2e-3, rtol=2e-3), "mismatch vs JAX reference"

    print("KERNEL_OK")
</pallas_src>

<mosaic_0001>
module attributes {stable_mosaic.version = 11 : i64} {
  func.func @_decoder_kernel(%arg0: i32, %arg1: memref<16x32xf32, #tpu.memory_space<vmem>>, %arg2: memref<32x32xf32, #tpu.memory_space<vmem>>, %arg3: memref<1x32x96xf32, #tpu.memory_space<vmem>>, %arg4: memref<1x1x96xf32, #tpu.memory_space<vmem>>, %arg5: memref<1x32x32xf32, #tpu.memory_space<vmem>>, %arg6: memref<1x1x32xf32, #tpu.memory_space<vmem>>, %arg7: memref<1x32x32xf32, #tpu.memory_space<vmem>>, %arg8: memref<1x1x32xf32, #tpu.memory_space<vmem>>, %arg9: memref<1x32x64xf32, #tpu.memory_space<vmem>>, %arg10: memref<1x1x64xf32, #tpu.memory_space<vmem>>, %arg11: memref<1x32x32xf32, #tpu.memory_space<vmem>>, %arg12: memref<1x1x32xf32, #tpu.memory_space<vmem>>, %arg13: memref<1x32x64xf32, #tpu.memory_space<vmem>>, %arg14: memref<1x1x64xf32, #tpu.memory_space<vmem>>, %arg15: memref<1x64x32xf32, #tpu.memory_space<vmem>>, %arg16: memref<1x1x32xf32, #tpu.memory_space<vmem>>, %arg17: memref<1x1x32xf32, #tpu.memory_space<vmem>>, %arg18: memref<1x1x32xf32, #tpu.memory_space<vmem>>, %arg19: memref<1x1x32xf32, #tpu.memory_space<vmem>>, %arg20: memref<1x1x32xf32, #tpu.memory_space<vmem>>, %arg21: memref<1x1x32xf32, #tpu.memory_space<vmem>>, %arg22: memref<1x1x32xf32, #tpu.memory_space<vmem>>, %arg23: memref<16x32xf32, #tpu.memory_space<vmem>>, %arg24: memref<16x32xf32, #tpu.memory_space<vmem>>) attributes {dimension_semantics = [#tpu.dimension_semantics<arbitrary>], iteration_bounds = array<i64: 2>, scalar_prefetch = 0 : i64, scratch_operands = 1 : i64, tpu.core_type = #tpu.core_type<tc>, window_params = [{pipeline_mode = #tpu.pipeline_mode<synchronous>, transform_indices = @transform_0, window_bounds = array<i64: 16, 32>}, {pipeline_mode = #tpu.pipeline_mode<synchronous>, transform_indices = @transform_1, window_bounds = array<i64: 32, 32>}, {transform_indices = @transform_2, window_bounds = array<i64: 1, 32, 96>}, {transform_indices = @transform_3, window_bounds = array<i64: 1, 1, 96>}, {transform_indices = @transform_4, window_bounds = array<i64: 1, 32, 32>}, {transform_indices = @transform_5, window_bounds = array<i64: 1, 1, 32>}, {transform_indices = @transform_6, window_bounds = array<i64: 1, 32, 32>}, {transform_indices = @transform_7, window_bounds = array<i64: 1, 1, 32>}, {transform_indices = @transform_8, window_bounds = array<i64: 1, 32, 64>}, {transform_indices = @transform_9, window_bounds = array<i64: 1, 1, 64>}, {transform_indices = @transform_10, window_bounds = array<i64: 1, 32, 32>}, {transform_indices = @transform_11, window_bounds = array<i64: 1, 1, 32>}, {transform_indices = @transform_12, window_bounds = array<i64: 1, 32, 64>}, {transform_indices = @transform_13, window_bounds = array<i64: 1, 1, 64>}, {transform_indices = @transform_14, window_bounds = array<i64: 1, 64, 32>}, {transform_indices = @transform_15, window_bounds = array<i64: 1, 1, 32>}, {transform_indices = @transform_16, window_bounds = array<i64: 1, 1, 32>}, {transform_indices = @transform_17, window_bounds = array<i64: 1, 1, 32>}, {transform_indices = @transform_18, window_bounds = array<i64: 1, 1, 32>}, {transform_indices = @transform_19, window_bounds = array<i64: 1, 1, 32>}, {transform_indices = @transform_20, window_bounds = array<i64: 1, 1, 32>}, {transform_indices = @transform_21, window_bounds = array<i64: 1, 1, 32>}, {pipeline_mode = #tpu.pipeline_mode<synchronous>, transform_indices = @transform_22, window_bounds = array<i64: 16, 32>}]} {
    %c0_i32 = arith.constant 0 : i32
    %0 = arith.cmpi eq, %arg0, %c0_i32 : i32
    %1 = arith.extui %0 : i1 to i32
    %c0_i32_0 = arith.constant 0 : i32
    %2 = arith.cmpi ne, %1, %c0_i32_0 : i32
    scf.if %2 {
      %c0_127 = arith.constant 0 : index
      %c0_128 = arith.constant 0 : index
      %302 = vector.load %arg1[%c0_127, %c0_128] : memref<16x32xf32, #tpu.memory_space<vmem>>, vector<16x32xf32>
      %c0_129 = arith.constant 0 : index
      %c0_130 = arith.constant 0 : index
      %303 = vector.load %arg24[%c0_129, %c0_130] : memref<16x32xf32, #tpu.memory_space<vmem>>, vector<16x32xf32>
      tpu.vector_store %arg24[%c0_129, %c0_130], %302 {strides = array<i32>} : memref<16x32xf32, #tpu.memory_space<vmem>>, vector<16x32xf32>,
    } else {
    }
    %c0 = arith.constant 0 : index
    %c0_1 = arith.constant 0 : index
    %3 = vector.load %arg24[%c0, %c0_1] : memref<16x32xf32, #tpu.memory_space<vmem>>, vector<16x32xf32>
    %c0_2 = arith.constant 0 : index
    %c0_3 = arith.constant 0 : index
    %4 = vector.load %arg2[%c0_2, %c0_3] : memref<32x32xf32, #tpu.memory_space<vmem>>, vector<32x32xf32>
    %c0_4 = arith.constant 0 : index
    %c0_5 = arith.constant 0 : index
    %c0_6 = arith.constant 0 : index
    %5 = vector.load %arg3[%c0_4, %c0_5, %c0_6] : memref<1x32x96xf32, #tpu.memory_space<vmem>>, vector<1x32x96xf32>
    %6 = vector.shape_cast %5 : vector<1x32x96xf32> to vector<32x96xf32>
    %cst = arith.constant dense<0.000000e+00> : vector<16x96xf32>
    %7 = tpu.matmul %3, %6, %cst {dimension_numbers = #tpu.dot_dimension_numbers<[1], [0], [0], [1], [0, 0, 1, 1], [], []>} : vector<16x32xf32>, vector<32x96xf32>, vector<16x96xf32> -> vector<16x96xf32>
    %c0_7 = arith.constant 0 : index
    %c0_8 = arith.constant 0 : index
    %c0_9 = arith.constant 0 : index
    %8 = vector.load %arg4[%c0_7, %c0_8, %c0_9] : memref<1x1x96xf32, #tpu.memory_space<vmem>>, vector<1x1x96xf32>
    %9 = vector.shape_cast %8 : vector<1x1x96xf32> to vector<1x96xf32>
    %10 = vector.broadcast %9 : vector<1x96xf32> to vector<16x96xf32>
    %11 = arith.addf %7, %10 : vector<16x96xf32>
    %12 = vector.extract_strided_slice %11 {offsets = [0, 0], sizes = [16, 32], strides = [1, 1]} : vector<16x96xf32> to vector<16x32xf32>
    %13 = vector.extract_strided_slice %11 {offsets = [0, 32], sizes = [16, 32], strides = [1, 1]} : vector<16x96xf32> to vector<16x32xf32>
    %14 = vector.extract_strided_slice %11 {offsets = [0, 64], sizes = [16, 32], strides = [1, 1]} : vector<16x96xf32> to vector<16x32xf32>
    %c0_10 = arith.constant 0 : index
    %c0_11 = arith.constant 0 : index
    %c0_12 = arith.constant 0 : index
    %15 = vector.load %arg5[%c0_10, %c0_11, %c0_12] : memref<1x32x32xf32, #tpu.memory_space<vmem>>, vector<1x32x32xf32>
    %16 = vector.shape_cast %15 : vector<1x32x32xf32> to vector<32x32xf32>
    %c0_13 = arith.constant 0 : index
    %c0_14 = arith.constant 0 : index
    %c0_15 = arith.constant 0 : index
    %17 = vector.load %arg6[%c0_13, %c0_14, %c0_15] : memref<1x1x32xf32, #tpu.memory_space<vmem>>, vector<1x1x32xf32>
    %18 = vector.shape_cast %17 : vector<1x1x32xf32> to vector<1x32xf32>
    %19 = vector.extract_strided_slice %12 {offsets = [0, 0], sizes = [8, 32], strides = [1, 1]} : vector<16x32xf32> to vector<8x32xf32>
    %20 = vector.extract_strided_slice %13 {offsets = [0, 0], sizes = [8, 32], strides = [1, 1]} : vector<16x32xf32> to vector<8x32xf32>
    %21 = vector.extract_strided_slice %19 {offsets = [0, 0], sizes = [8, 8], strides = [1, 1]} : vector<8x32xf32> to vector<8x8xf32>
    %22 = vector.extract_strided_slice %20 {offsets = [0, 0], sizes = [8, 8], strides = [1, 1]} : vector<8x32xf32> to vector<8x8xf32>
    %23 = tpu.transpose %22, [1, 0] : vector<8x8xf32> -> vector<8x8xf32>
    %cst_16 = arith.constant dense<0.000000e+00> : vector<8x8xf32>
    %24 = tpu.matmul %21, %23, %cst_16 {dimension_numbers = #tpu.dot_dimension_numbers<[1], [0], [0], [1], [0, 0, 1, 1], [], []>} : vector<8x8xf32>, vector<8x8xf32>, vector<8x8xf32> -> vector<8x8xf32>
    %25 = vector.extract_strided_slice %19 {offsets = [0, 8], sizes = [8, 8], strides = [1, 1]} : vector<8x32xf32> to vector<8x8xf32>
    %26 = vector.extract_strided_slice %20 {offsets = [0, 8], sizes = [8, 8], strides = [1, 1]} : vector<8x32xf32> to vector<8x8xf32>
    %27 = tpu.transpose %26, [1, 0] : vector<8x8xf32> -> vector<8x8xf32>
    %cst_17 = arith.constant dense<0.000000e+00> : vector<8x8xf32>
    %28 = tpu.matmul %25, %27, %cst_17 {dimension_numbers = #tpu.dot_dimension_numbers<[1], [0], [0], [1], [0, 0, 1, 1], [], []>} : vector<8x8xf32>, vector<8x8xf32>, vector<8x8xf32> -> vector<8x8xf32>
    %29 = vector.extract_strided_slice %19 {offsets = [0, 16], sizes = [8, 8], strides = [1, 1]} : vector<8x32xf32> to vector<8x8xf32>
    %30 = vector.extract_strided_slice %20 {offsets = [0, 16], sizes = [8, 8], strides = [1, 1]} : vector<8x32xf32> to vector<8x8xf32>
    %31 = tpu.transpose %30, [1, 0] : vector<8x8xf32> -> vector<8x8xf32>
    %cst_18 = arith.constant dense<0.000000e+00> : vector<8x8xf32>
    %32 = tpu.matmul %29, %31, %cst_18 {dimension_numbers = #tpu.dot_dimension_numbers<[1], [0], [0], [1], [0, 0, 1, 1], [], []>} : vector<8x8xf32>, vector<8x8xf32>, vector<8x8xf32> -> vector<8x8xf32>
    %33 = vector.extract_strided_slice %19 {offsets = [0, 24], sizes = [8, 8], strides = [1, 1]} : vector<8x32xf32> to vector<8x8xf32>
    %34 = vector.extract_strided_slice %20 {offsets = [0, 24], sizes = [8, 8], strides = [1, 1]} : vector<8x32xf32> to vector<8x8xf32>
    %35 = tpu.transpose %34, [1, 0] : vector<8x8xf32> -> vector<8x8xf32>
    %cst_19 = arith.constant dense<0.000000e+00> : vector<8x8xf32>
    %36 = tpu.matmul %33, %35, %cst_19 {dimension_numbers = #tpu.dot_dimension_numbers<[1], [0], [0], [1], [0, 0, 1, 1], [], []>} : vector<8x8xf32>, vector<8x8xf32>, vector<8x8xf32> -> vector<8x8xf32>
    %37 = vector.extract_strided_slice %12 {offsets = [8, 0], sizes = [8, 32], strides = [1, 1]} : vector<16x32xf32> to vector<8x32xf32>
    %38 = vector.extract_strided_slice %13 {offsets = [8, 0], sizes = [8, 32], strides = [1, 1]} : vector<16x32xf32> to vector<8x32xf32>
    %39 = vector.extract_strided_slice %37 {offsets = [0, 0], sizes = [8, 8], strides = [1, 1]} : vector<8x32xf32> to vector<8x8xf32>
    %40 = vector.extract_strided_slice %38 {offsets = [0, 0], sizes = [8, 8], strides = [1, 1]} : vector<8x32xf32> to vector<8x8xf32>
    %41 = tpu.transpose %40, [1, 0] : vector<8x8xf32> -> vector<8x8xf32>
    %cst_20 = arith.constant dense<0.000000e+00> : vector<8x8xf32>
    %42 = tpu.matmul %39, %41, %cst_20 {dimension_numbers = #tpu.dot_dimension_numbers<[1], [0], [0], [1], [0, 0, 1, 1], [], []>} : vector<8x8xf32>, vector<8x8xf32>, vector<8x8xf32> -> vector<8x8xf32>
    %43 = vector.extract_strided_slice %37 {offsets = [0, 8], sizes = [8, 8], strides = [1, 1]} : vector<8x32xf32> to vector<8x8xf32>
    %44 = vector.extract_strided_slice %38 {offsets = [0, 8], sizes = [8, 8], strides = [1, 1]} : vector<8x32xf32> to vector<8x8xf32>
    %45 = tpu.transpose %44, [1, 0] : vector<8x8xf32> -> vector<8x8xf32>
    %cst_21 = arith.constant dense<0.000000e+00> : vector<8x8xf32>
    %46 = tpu.matmul %43, %45, %cst_21 {dimension_numbers = #tpu.dot_dimension_numbers<[1], [0], [0], [1], [0, 0, 1, 1], [], []>} : vector<8x8xf32>, vector<8x8xf32>, vector<8x8xf32> -> vector<8x8xf32>
    %47 = vector.extract_strided_slice %37 {offsets = [0, 16], sizes = [8, 8], strides = [1, 1]} : vector<8x32xf32> to vector<8x8xf32>
    %48 = vector.extract_strided_slice %38 {offsets = [0, 16], sizes = [8, 8], strides = [1, 1]} : vector<8x32xf32> to vector<8x8xf32>
    %49 = tpu.transpose %48, [1, 0] : vector<8x8xf32> -> vector<8x8xf32>
    %cst_22 = arith.constant dense<0.000000e+00> : vector<8x8xf32>
    %50 = tpu.matmul %47, %49, %cst_22 {dimension_numbers = #tpu.dot_dimension_numbers<[1], [0], [0], [1], [0, 0, 1, 1], [], []>} : vector<8x8xf32>, vector<8x8xf32>, vector<8x8xf32> -> vector<8x8xf32>
    %51 = vector.extract_strided_slice %37 {offsets = [0, 24], sizes = [8, 8], strides = [1, 1]} : vector<8x32xf32> to vector<8x8xf32>
    %52 = vector.extract_strided_slice %38 {offsets = [0, 24], sizes = [8, 8], strides = [1, 1]} : vector<8x32xf32> to vector<8x8xf32>
    %53 = tpu.transpose %52, [1, 0] : vector<8x8xf32> -> vector<8x8xf32>
    %cst_23 = arith.constant dense<0.000000e+00> : vector<8x8xf32>
    %54 = tpu.matmul %51, %53, %cst_23 {dimension_numbers = #tpu.dot_dimension_numbers<[1], [0], [0], [1], [0, 0, 1, 1], [], []>} : vector<8x8xf32>, vector<8x8xf32>, vector<8x8xf32> -> vector<8x8xf32>
    %55 = tpu.concatenate %24, %28, %32, %36, %42, %46, %50, %54 in 0 : vector<8x8xf32>, vector<8x8xf32>, vector<8x8xf32>, vector<8x8xf32>, vector<8x8xf32>, vector<8x8xf32>, vector<8x8xf32>, vector<8x8xf32> -> vector<64x8xf32>
    %cst_24 = arith.constant 0.353553385 : f32
    %56 = vector.broadcast %cst_24 : f32 to vector<64x8xf32>
    %57 = arith.mulf %55, %56 : vector<64x8xf32>
    %cst_25 = arith.constant dense<0xFF800000> : vector<64xf32>
    %58 = vector.multi_reduction <maximumf>, %57, %cst_25 [1] : vector<64x8xf32> to vector<64xf32>
    %59 = vector.shape_cast %58 : vector<64xf32> to vector<64x1xf32>
    %60 = vector.broadcast %59 : vector<64x1xf32> to vector<64x8xf32>
    %61 = arith.subf %57, %60 : vector<64x8xf32>
    %62 = math.exp %61 : vector<64x8xf32>
    %cst_26 = arith.constant dense<0.000000e+00> : vector<64xf32>
    %63 = vector.multi_reduction <add>, %62, %cst_26 [1] : vector<64x8xf32> to vector<64xf32>
    %64 = vector.shape_cast %63 : vector<64xf32> to vector<64x1xf32>
    %65 = tpu.reciprocal %64 {approx = true} : vector<64x1xf32> -> vector<64x1xf32>
    %66 = vector.broadcast %65 : vector<64x1xf32> to vector<64x8xf32>
    %67 = arith.mulf %62, %66 : vector<64x8xf32>
    %68 = vector.extract_strided_slice %14 {offsets = [0, 0], sizes = [8, 32], strides = [1, 1]} : vector<16x32xf32> to vector<8x32xf32>
    %69 = vector.extract_strided_slice %67 {offsets = [0, 0], sizes = [8, 8], strides = [1, 1]} : vector<64x8xf32> to vector<8x8xf32>
    %70 = vector.extract_strided_slice %68 {offsets = [0, 0], sizes = [8, 8], strides = [1, 1]} : vector<8x32xf32> to vector<8x8xf32>
    %cst_27 = arith.constant dense<0.000000e+00> : vector<8x8xf32>
    %71 = tpu.matmul %69, %70, %cst_27 {dimension_numbers = #tpu.dot_dimension_numbers<[1], [0], [0], [1], [0, 0, 1, 1], [], []>} : vector<8x8xf32>, vector<8x8xf32>, vector<8x8xf32> -> vector<8x8xf32>
    %72 = vector.extract_strided_slice %67 {offsets = [8, 0], sizes = [8, 8], strides = [1, 1]} : vector<64x8xf32> to vector<8x8xf32>
    %73 = vector.extract_strided_slice %68 {offsets = [0, 8], sizes = [8, 8], strides = [1, 1]} : vector<8x32xf32> to vector<8x8xf32>
    %cst_28 = arith.constant dense<0.000000e+00> : vector<8x8xf32>
    %74 = tpu.matmul %72, %73, %cst_28 {dimension_numbers = #tpu.dot_dimension_numbers<[1], [0], [0], [1], [0, 0, 1, 1], [], []>} : vector<8x8xf32>, vector<8x8xf32>, vector<8x8xf32> -> vector<8x8xf32>
    %75 = vector.extract_strided_slice %67 {offsets = [16, 0], sizes = [8, 8], strides = [1, 1]} : vector<64x8xf32> to vector<8x8xf32>
    %76 = vector.extract_strided_slice %68 {offsets = [0, 16], sizes = [8, 8], strides = [1, 1]} : vector<8x32xf32> to vector<8x8xf32>
    %cst_29 = arith.constant dense<0.000000e+00> : vector<8x8xf32>
    %77 = tpu.matmul %75, %76, %cst_29 {dimension_numbers = #tpu.dot_dimension_numbers<[1], [0], [0], [1], [0, 0, 1, 1], [], []>} : vector<8x8xf32>, vector<8x8xf32>, vector<8x8xf32> -> vector<8x8xf32>
    %78 = vector.extract_strided_slice %67 {offsets = [24, 0], sizes = [8, 8], strides = [1, 1]} : vector<64x8xf32> to vector<8x8xf32>
    %79 = vector.extract_strided_slice %68 {offsets = [0, 24], sizes = [8, 8], strides = [1, 1]} : vector<8x32xf32> to vector<8x8xf32>
    %cst_30 = arith.constant dense<0.000000e+00> : vector<8x8xf32>
    %80 = tpu.matmul %78, %79, %cst_30 {dimension_numbers = #tpu.dot_dimension_numbers<[1], [0], [0], [1], [0, 0, 1, 1], [], []>} : vector<8x8xf32>, vector<8x8xf32>, vector<8x8xf32> -> vector<8x8xf32>
    %81 = tpu.concatenate %71, %74, %77, %80 in 1 : vector<8x8xf32>, vector<8x8xf32>, vector<8x8xf32>, vector<8x8xf32> -> vector<8x32xf32>
    %82 = vector.extract_strided_slice %14 {offsets = [8, 0], sizes = [8, 32], strides = [1, 1]} : vector<16x32xf32> to vector<8x32xf32>
    %83 = vector.extract_strided_slice %67 {offsets = [32, 0], sizes = [8, 8], strides = [1, 1]} : vector<64x8xf32> to vector<8x8xf32>
    %84 = vector.extract_strided_slice %82 {offsets = [0, 0], sizes = [8, 8], strides = [1, 1]} : vector<8x32xf32> to vector<8x8xf32>
    %cst_31 = arith.constant dense<0.000000e+00> : vector<8x8xf32>
    %85 = tpu.matmul %83, %84, %cst_31 {dimension_numbers = #tpu.dot_dimension_numbers<[1], [0], [0], [1], [0, 0, 1, 1], [], []>} : vector<8x8xf32>, vector<8x8xf32>, vector<8x8xf32> -> vector<8x8xf32>
    %86 = vector.extract_strided_slice %67 {offsets = [40, 0], sizes = [8, 8], strides = [1, 1]} : vector<64x8xf32> to vector<8x8xf32>
    %87 = vector.extract_strided_slice %82 {offsets = [0, 8], sizes = [8, 8], strides = [1, 1]} : vector<8x32xf32> to vector<8x8xf32>
    %cst_32 = arith.constant dense<0.000000e+00> : vector<8x8xf32>
    %88 = tpu.matmul %86, %87, %cst_32 {dimension_numbers = #tpu.dot_dimension_numbers<[1], [0], [0], [1], [0, 0, 1, 1], [], []>} : vector<8x8xf32>, vector<8x8xf32>, vector<8x8xf32> -> vector<8x8xf32>
    %89 = vector.extract_strided_slice %67 {offsets = [48, 0], sizes = [8, 8], strides = [1, 1]} : vector<64x8xf32> to vector<8x8xf32>
    %90 = vector.extract_strided_slice %82 {offsets = [0, 16], sizes = [8, 8], strides = [1, 1]} : vector<8x32xf32> to vector<8x8xf32>
    %cst_33 = arith.constant dense<0.000000e+00> : vector<8x8xf32>
    %91 = tpu.matmul %89, %90, %cst_33 {dimension_numbers = #tpu.dot_dimension_numbers<[1], [0], [0], [1], [0, 0, 1, 1], [], []>} : vector<8x8xf32>, vector<8x8xf32>, vector<8x8xf32> -> vector<8x8xf32>
    %92 = vector.extract_strided_slice %67 {offsets = [56, 0], sizes = [8, 8], strides = [1, 1]} : vector<64x8xf32> to vector<8x8xf32>
    %93 = vector.extract_strided_slice %82 {offsets = [0, 24], sizes = [8, 8], strides = [1, 1]} : vector<8x32xf32> to vector<8x8xf32>
    %cst_34 = arith.constant dense<0.000000e+00> : vector<8x8xf32>
    %94 = tpu.matmul %92, %93, %cst_34 {dimension_numbers = #tpu.dot_dimension_numbers<[1], [0], [0], [1], [0, 0, 1, 1], [], []>} : vector<8x8xf32>, vector<8x8xf32>, vector<8x8xf32> -> vector<8x8xf32>
    %95 = tpu.concatenate %85, %88, %91, %94 in 1 : vector<8x8xf32>, vector<8x8xf32>, vector<8x8xf32>, vector<8x8xf32> -> vector<8x32xf32>
    %96 = tpu.concatenate %81, %95 in 0 : vector<8x32xf32>, vector<8x32xf32> -> vector<16x32xf32>
    %cst_35 = arith.constant dense<0.000000e+00> : vector<16x32xf32>
    %97 = tpu.matmul %96, %16, %cst_35 {dimension_numbers = #tpu.dot_dimension_numbers<[1], [0], [0], [1], [0, 0, 1, 1], [], []>} : vector<16x32xf32>, vector<32x32xf32>, vector<16x32xf32> -> vector<16x32xf32>
    %98 = vector.broadcast %18 : vector<1x32xf32> to vector<16x32xf32>
    %99 = arith.addf %97, %98 : vector<16x32xf32>
    %100 = arith.addf %3, %99 : vector<16x32xf32>
    %c0_36 = arith.constant 0 : index
    %c0_37 = arith.constant 0 : index
    %c0_38 = arith.constant 0 : index
    %101 = vector.load %arg17[%c0_36, %c0_37, %c0_38] : memref<1x1x32xf32, #tpu.memory_space<vmem>>, vector<1x1x32xf32>
    %102 = vector.shape_cast %101 : vector<1x1x32xf32> to vector<1x32xf32>
    %c0_39 = arith.constant 0 : index
    %c0_40 = arith.constant 0 : index
    %c0_41 = arith.constant 0 : index
    %103 = vector.load %arg18[%c0_39, %c0_40, %c0_41] : memref<1x1x32xf32, #tpu.memory_space<vmem>>, vector<1x1x32xf32>
    %104 = vector.shape_cast %103 : vector<1x1x32xf32> to vector<1x32xf32>
    %cst_42 = arith.constant dense<0.000000e+00> : vector<16xf32>
    %105 = vector.multi_reduction <add>, %100, %cst_42 [1] : vector<16x32xf32> to vector<16xf32>
    %106 = vector.shape_cast %105 : vector<16xf32> to vector<16x1xf32>
    %cst_43 = arith.constant 3.200000e+01 : f32
    %107 = vector.broadcast %cst_43 : f32 to vector<16x1xf32>
    %108 = arith.divf %106, %107 : vector<16x1xf32>
    %109 = vector.broadcast %108 : vector<16x1xf32> to vector<16x32xf32>
    %110 = arith.subf %100, %109 : vector<16x32xf32>
    %111 = arith.mulf %110, %110 : vector<16x32xf32>
    %cst_44 = arith.constant dense<0.000000e+00> : vector<16xf32>
    %112 = vector.multi_reduction <add>, %111, %cst_44 [1] : vector<16x32xf32> to vector<16xf32>
    %113 = vector.shape_cast %112 : vector<16xf32> to vector<16x1xf32>
    %cst_45 = arith.constant 3.200000e+01 : f32
    %114 = vector.broadcast %cst_45 : f32 to vector<16x1xf32>
    %115 = arith.divf %113, %114 : vector<16x1xf32>
    %116 = vector.broadcast %108 : vector<16x1xf32> to vector<16x32xf32>
    %117 = arith.subf %100, %116 : vector<16x32xf32>
    %cst_46 = arith.constant 9.99999974E-6 : f32
    %118 = vector.broadcast %cst_46 : f32 to vector<16x1xf32>
    %119 = arith.addf %115, %118 : vector<16x1xf32>
    %120 = math.rsqrt %119 : vector<16x1xf32>
    %121 = vector.broadcast %120 : vector<16x1xf32> to vector<16x32xf32>
    %122 = arith.mulf %117, %121 : vector<16x32xf32>
    %123 = vector.broadcast %102 : vector<1x32xf32> to vector<16x32xf32>
    %124 = arith.mulf %122, %123 : vector<16x32xf32>
    %125 = vector.broadcast %104 : vector<1x32xf32> to vector<16x32xf32>
    %126 = arith.addf %124, %125 : vector<16x32xf32>
    %c0_47 = arith.constant 0 : index
    %c0_48 = arith.constant 0 : index
    %c0_49 = arith.constant 0 : index
    %127 = vector.load %arg7[%c0_47, %c0_48, %c0_49] : memref<1x32x32xf32, #tpu.memory_space<vmem>>, vector<1x32x32xf32>
    %128 = vector.shape_cast %127 : vector<1x32x32xf32> to vector<32x32xf32>
    %cst_50 = arith.constant dense<0.000000e+00> : vector<16x32xf32>
    %129 = tpu.matmul %126, %128, %cst_50 {dimension_numbers = #tpu.dot_dimension_numbers<[1], [0], [0], [1], [0, 0, 1, 1], [], []>} : vector<16x32xf32>, vector<32x32xf32>, vector<16x32xf32> -> vector<16x32xf32>
    %c0_51 = arith.constant 0 : index
    %c0_52 = arith.constant 0 : index
    %c0_53 = arith.constant 0 : index
    %130 = vector.load %arg8[%c0_51, %c0_52, %c0_53] : memref<1x1x32xf32, #tpu.memory_space<vmem>>, vector<1x1x32xf32>
    %131 = vector.shape_cast %130 : vector<1x1x32xf32> to vector<1x32xf32>
    %132 = vector.broadcast %131 : vector<1x32xf32> to vector<16x32xf32>
    %133 = arith.addf %129, %132 : vector<16x32xf32>
    %c0_54 = arith.constant 0 : index
    %c0_55 = arith.constant 0 : index
    %c0_56 = arith.constant 0 : index
    %134 = vector.load %arg9[%c0_54, %c0_55, %c0_56] : memref<1x32x64xf32, #tpu.memory_space<vmem>>, vector<1x32x64xf32>
    %135 = vector.shape_cast %134 : vector<1x32x64xf32> to vector<32x64xf32>
    %cst_57 = arith.constant dense<0.000000e+00> : vector<32x64xf32>
    %136 = tpu.matmul %4, %135, %cst_57 {dimension_numbers = #tpu.dot_dimension_numbers<[1], [0], [0], [1], [0, 0, 1, 1], [], []>} : vector<32x32xf32>, vector<32x64xf32>, vector<32x64xf32> -> vector<32x64xf32>
    %c0_58 = arith.constant 0 : index
    %c0_59 = arith.constant 0 : index
    %c0_60 = arith.constant 0 : index
    %137 = vector.load %arg10[%c0_58, %c0_59, %c0_60] : memref<1x1x64xf32, #tpu.memory_space<vmem>>, vector<1x1x64xf32>
    %138 = vector.shape_cast %137 : vector<1x1x64xf32> to vector<1x64xf32>
    %139 = vector.broadcast %138 : vector<1x64xf32> to vector<32x64xf32>
    %140 = arith.addf %136, %139 : vector<32x64xf32>
    %141 = vector.extract_strided_slice %140 {offsets = [0, 0], sizes = [32, 32], strides = [1, 1]} : vector<32x64xf32> to vector<32x32xf32>
    %142 = vector.extract_strided_slice %140 {offsets = [0, 32], sizes = [32, 32], strides = [1, 1]} : vector<32x64xf32> to vector<32x32xf32>
    %c0_61 = arith.constant 0 : index
    %c0_62 = arith.constant 0 : index
    %c0_63 = arith.constant 0 : index
    %143 = vector.load %arg11[%c0_61, %c0_62, %c0_63] : memref<1x32x32xf32, #tpu.memory_space<vmem>>, vector<1x32x32xf32>
    %144 = vector.shape_cast %143 : vector<1x32x32xf32> to vector<32x32xf32>
    %c0_64 = arith.constant 0 : index
    %c0_65 = arith.constant 0 : index
    %c0_66 = arith.constant 0 : index
    %145 = vector.load %arg12[%c0_64, %c0_65, %c0_66] : memref<1x1x32xf32, #tpu.memory_space<vmem>>, vector<1x1x32xf32>
    %146 = vector.shape_cast %145 : vector<1x1x32xf32> to vector<1x32xf32>
    %147 = vector.extract_strided_slice %133 {offsets = [0, 0], sizes = [8, 32], strides = [1, 1]} : vector<16x32xf32> to vector<8x32xf32>
    %148 = vector.extract_strided_slice %141 {offsets = [0, 0], sizes = [16, 32], strides = [1, 1]} : vector<32x32xf32> to vector<16x32xf32>
    %149 = vector.extract_strided_slice %147 {offsets = [0, 0], sizes = [8, 8], strides = [1, 1]} : vector<8x32xf32> to vector<8x8xf32>
    %150 = vector.extract_strided_slice %148 {offsets = [0, 0], sizes = [16, 8], strides = [1, 1]} : vector<16x32xf32> to vector<16x8xf32>
    %151 = tpu.transpose %150, [1, 0] : vector<16x8xf32> -> vector<8x16xf32>
    %cst_67 = arith.constant dense<0.000000e+00> : vector<8x16xf32>
    %152 = tpu.matmul %149, %151, %cst_67 {dimension_numbers = #tpu.dot_dimension_numbers<[1], [0], [0], [1], [0, 0, 1, 1], [], []>} : vector<8x8xf32>, vector<8x16xf32>, vector<8x16xf32> -> vector<8x16xf32>
    %153 = vector.extract_strided_slice %147 {offsets = [0, 8], sizes = [8, 8], strides = [1, 1]} : vector<8x32xf32> to vector<8x8xf32>
    %154 = vector.extract_strided_slice %148 {offsets = [0, 8], sizes = [16, 8], strides = [1, 1]} : vector<16x32xf32> to vector<16x8xf32>
    %155 = tpu.transpose %154, [1, 0] : vector<16x8xf32> -> vector<8x16xf32>
    %cst_68 = arith.constant dense<0.000000e+00> : vector<8x16xf32>
    %156 = tpu.matmul %153, %155, %cst_68 {dimension_numbers = #tpu.dot_dimension_numbers<[1], [0], [0], [1], [0, 0, 1, 1], [], []>} : vector<8x8xf32>, vector<8x16xf32>, vector<8x16xf32> -> vector<8x16xf32>
    %157 = vector.extract_strided_slice %147 {offsets = [0, 16], sizes = [8, 8], strides = [1, 1]} : vector<8x32xf32> to vector<8x8xf32>
    %158 = vector.extract_strided_slice %148 {offsets = [0, 16], sizes = [16, 8], strides = [1, 1]} : vector<16x32xf32> to vector<16x8xf32>
    %159 = tpu.transpose %158, [1, 0] : vector<16x8xf32> -> vector<8x16xf32>
    %cst_69 = arith.constant dense<0.000000e+00> : vector<8x16xf32>
    %160 = tpu.matmul %157, %159, %cst_69 {dimension_numbers = #tpu.dot_dimension_numbers<[1], [0], [0], [1], [0, 0, 1, 1], [], []>} : vector<8x8xf32>, vector<8x16xf32>, vector<8x16xf32> -> vector<8x16xf32>
    %161 = vector.extract_strided_slice %147 {offsets = [0, 24], sizes = [8, 8], strides = [1, 1]} : vector<8x32xf32> to vector<8x8xf32>
    %162 = vector.extract_strided_slice %148 {offsets = [0, 24], sizes = [16, 8], strides = [1, 1]} : vector<16x32xf32> to vector<16x8xf32>
    %163 = tpu.transpose %162, [1, 0] : vector<16x8xf32> -> vector<8x16xf32>
    %cst_70 = arith.constant dense<0.000000e+00> : vector<8x16xf32>
    %164 = tpu.matmul %161, %163, %cst_70 {dimension_numbers = #tpu.dot_dimension_numbers<[1], [0], [0], [1], [0, 0, 1, 1], [], []>} : vector<8x8xf32>, vector<8x16xf32>, vector<8x16xf32> -> vector<8x16xf32>
    %165 = vector.extract_strided_slice %133 {offsets = [8, 0], sizes = [8, 32], strides = [1, 1]} : vector<16x32xf32> to vector<8x32xf32>
    %166 = vector.extract_strided_slice %141 {offsets = [16, 0], sizes = [16, 32], strides = [1, 1]} : vector<32x32xf32> to vector<16x32xf32>
    %167 = vector.extract_strided_slice %165 {offsets = [0, 0], sizes = [8, 8], strides = [1, 1]} : vector<8x32xf32> to vector<8x8xf32>
    %168 = vector.extract_strided_slice %166 {offsets = [0, 0], sizes = [16, 8], strides = [1, 1]} : vector<16x32xf32> to vector<16x8xf32>
    %169 = tpu.transpose %168, [1, 0] : vector<16x8xf32> -> vector<8x16xf32>
    %cst_71 = arith.constant dense<0.000000e+00> : vector<8x16xf32>
    %170 = tpu.matmul %167, %169, %cst_71 {dimension_numbers = #tpu.dot_dimension_numbers<[1], [0], [0], [1], [0, 0, 1, 1], [], []>} : vector<8x8xf32>, vector<8x16xf32>, vector<8x16xf32> -> vector<8x16xf32>
    %171 = vector.extract_strided_slice %165 {offsets = [0, 8], sizes = [8, 8], strides = [1, 1]} : vector<8x32xf32> to vector<8x8xf32>
    %172 = vector.extract_strided_slice %166 {offsets = [0, 8], sizes = [16, 8], strides = [1, 1]} : vector<16x32xf32> to vector<16x8xf32>
    %173 = tpu.transpose %172, [1, 0] : vector<16x8xf32> -> vector<8x16xf32>
    %cst_72 = arith.constant dense<0.000000e+00> : vector<8x16xf32>
    %174 = tpu.matmul %171, %173, %cst_72 {dimension_numbers = #tpu.dot_dimension_numbers<[1], [0], [0], [1], [0, 0, 1, 1], [], []>} : vector<8x8xf32>, vector<8x16xf32>, vector<8x16xf32> -> vector<8x16xf32>
    %175 = vector.extract_strided_slice %165 {offsets = [0, 16], sizes = [8, 8], strides = [1, 1]} : vector<8x32xf32> to vector<8x8xf32>
    %176 = vector.extract_strided_slice %166 {offsets = [0, 16], sizes = [16, 8], strides = [1, 1]} : vector<16x32xf32> to vector<16x8xf32>
    %177 = tpu.transpose %176, [1, 0] : vector<16x8xf32> -> vector<8x16xf32>
    %cst_73 = arith.constant dense<0.000000e+00> : vector<8x16xf32>
    %178 = tpu.matmul %175, %177, %cst_73 {dimension_numbers = #tpu.dot_dimension_numbers<[1], [0], [0], [1], [0, 0, 1, 1], [], []>} : vector<8x8xf32>, vector<8x16xf32>, vector<8x16xf32> -> vector<8x16xf32>
    %179 = vector.extract_strided_slice %165 {offsets = [0, 24], sizes = [8, 8], strides = [1, 1]} : vector<8x32xf32> to vector<8x8xf32>
    %180 = vector.extract_strided_slice %166 {offsets = [0, 24], sizes = [16, 8], strides = [1, 1]} : vector<16x32xf32> to vector<16x8xf32>
    %181 = tpu.transpose %180, [1, 0] : vector<16x8xf32> -> vector<8x16xf32>
    %cst_74 = arith.constant dense<0.000000e+00> : vector<8x16xf32>
    %182 = tpu.matmul %179, %181, %cst_74 {dimension_numbers = #tpu.dot_dimension_numbers<[1], [0], [0], [1], [0, 0, 1, 1], [], []>} : vector<8x8xf32>, vector<8x16xf32>, vector<8x16xf32> -> vector<8x16xf32>
    %183 = tpu.concatenate %152, %156, %160, %164, %170, %174, %178, %182 in 0 : vector<8x16xf32>, vector<8x16xf32>, vector<8x16xf32>, vector<8x16xf32>, vector<8x16xf32>, vector<8x16xf32>, vector<8x16xf32>, vector<8x16xf32> -> vector<64x16xf32>
    %cst_75 = arith.constant 0.353553385 : f32
    %184 = vector.broadcast %cst_75 : f32 to vector<64x16xf32>
    %185 = arith.mulf %183, %184 : vector<64x16xf32>
    %cst_76 = arith.constant dense<0xFF800000> : vector<64xf32>
    %186 = vector.multi_reduction <maximumf>, %185, %cst_76 [1] : vector<64x16xf32> to vector<64xf32>
    %187 = vector.shape_cast %186 : vector<64xf32> to vector<64x1xf32>
    %188 = vector.broadcast %187 : vector<64x1xf32> to vector<64x16xf32>
    %189 = arith.subf %185, %188 : vector<64x16xf32>
    %190 = math.exp %189 : vector<64x16xf32>
    %cst_77 = arith.constant dense<0.000000e+00> : vector<64xf32>
    %191 = vector.multi_reduction <add>, %190, %cst_77 [1] : vector<64x16xf32> to vector<64xf32>
    %192 = vector.shape_cast %191 : vector<64xf32> to vector<64x1xf32>
    %193 = tpu.reciprocal %192 {approx = true} : vector<64x1xf32> -> vector<64x1xf32>
    %194 = vector.broadcast %193 : vector<64x1xf32> to vector<64x16xf32>
    %195 = arith.mulf %190, %194 : vector<64x16xf32>
    %196 = vector.extract_strided_slice %142 {offsets = [0, 0], sizes = [16, 32], strides = [1, 1]} : vector<32x32xf32> to vector<16x32xf32>
    %197 = vector.extract_strided_slice %195 {offsets = [0, 0], sizes = [8, 16], strides = [1, 1]} : vector<64x16xf32> to vector<8x16xf32>
    %198 = vector.extract_strided_slice %196 {offsets = [0, 0], sizes = [16, 8], strides = [1, 1]} : vector<16x32xf32> to vector<16x8xf32>
    %cst_78 = arith.constant dense<0.000000e+00> : vector<8x8xf32>
    %199 = tpu.matmul %197, %198, %cst_78 {dimension_numbers = #tpu.dot_dimension_numbers<[1], [0], [0], [1], [0, 0, 1, 1], [], []>} : vector<8x16xf32>, vector<16x8xf32>, vector<8x8xf32> -> vector<8x8xf32>
    %200 = vector.extract_strided_slice %195 {offsets = [8, 0], sizes = [8, 16], strides = [1, 1]} : vector<64x16xf32> to vector<8x16xf32>
    %201 = vector.extract_strided_slice %196 {offsets = [0, 8], sizes = [16, 8], strides = [1, 1]} : vector<16x32xf32> to vector<16x8xf32>
    %cst_79 = arith.constant dense<0.000000e+00> : vector<8x8xf32>
    %202 = tpu.matmul %200, %201, %cst_79 {dimension_numbers = #tpu.dot_dimension_numbers<[1], [0], [0], [1], [0, 0, 1, 1], [], []>} : vector<8x16xf32>, vector<16x8xf32>, vector<8x8xf32> -> vector<8x8xf32>
    %203 = vector.extract_strided_slice %195 {offsets = [16, 0], sizes = [8, 16], strides = [1, 1]} : vector<64x16xf32> to vector<8x16xf32>
    %204 = vector.extract_strided_slice %196 {offsets = [0, 16], sizes = [16, 8], strides = [1, 1]} : vector<16x32xf32> to vector<16x8xf32>
    %cst_80 = arith.constant dense<0.000000e+00> : vector<8x8xf32>
    %205 = tpu.matmul %203, %204, %cst_80 {dimension_numbers = #tpu.dot_dimension_numbers<[1], [0], [0], [1], [0, 0, 1, 1], [], []>} : vector<8x16xf32>, vector<16x8xf32>, vector<8x8xf32> -> vector<8x8xf32>
    %206 = vector.extract_strided_slice %195 {offsets = [24, 0], sizes = [8, 16], strides = [1, 1]} : vector<64x16xf32> to vector<8x16xf32>
    %207 = vector.extract_strided_slice %196 {offsets = [0, 24], sizes = [16, 8], strides = [1, 1]} : vector<16x32xf32> to vector<16x8xf32>
    %cst_81 = arith.constant dense<0.000000e+00> : vector<8x8xf32>
    %208 = tpu.matmul %206, %207, %cst_81 {dimension_numbers = #tpu.dot_dimension_numbers<[1], [0], [0], [1], [0, 0, 1, 1], [], []>} : vector<8x16xf32>, vector<16x8xf32>, vector<8x8xf32> -> vector<8x8xf32>
    %209 = tpu.concatenate %199, %202, %205, %208 in 1 : vector<8x8xf32>, vector<8x8xf32>, vector<8x8xf32>, vector<8x8xf32> -> vector<8x32xf32>
    %210 = vector.extract_strided_slice %142 {offsets = [16, 0], sizes = [16, 32], strides = [1, 1]} : vector<32x32xf32> to vector<16x32xf32>
    %211 = vector.extract_strided_slice %195 {offsets = [32, 0], sizes = [8, 16], strides = [1, 1]} : vector<64x16xf32> to vector<8x16xf32>
    %212 = vector.extract_strided_slice %210 {offsets = [0, 0], sizes = [16, 8], strides = [1, 1]} : vector<16x32xf32> to vector<16x8xf32>
    %cst_82 = arith.constant dense<0.000000e+00> : vector<8x8xf32>
    %213 = tpu.matmul %211, %212, %cst_82 {dimension_numbers = #tpu.dot_dimension_numbers<[1], [0], [0], [1], [0, 0, 1, 1], [], []>} : vector<8x16xf32>, vector<16x8xf32>, vector<8x8xf32> -> vector<8x8xf32>
    %214 = vector.extract_strided_slice %195 {offsets = [40, 0], sizes = [8, 16], strides = [1, 1]} : vector<64x16xf32> to vector<8x16xf32>
    %215 = vector.extract_strided_slice %210 {offsets = [0, 8], sizes = [16, 8], strides = [1, 1]} : vector<16x32xf32> to vector<16x8xf32>
    %cst_83 = arith.constant dense<0.000000e+00> : vector<8x8xf32>
    %216 = tpu.matmul %214, %215, %cst_83 {dimension_numbers = #tpu.dot_dimension_numbers<[1], [0], [0], [1], [0, 0, 1, 1], [], []>} : vector<8x16xf32>, vector<16x8xf32>, vector<8x8xf32> -> vector<8x8xf32>
    %217 = vector.extract_strided_slice %195 {offsets = [48, 0], sizes = [8, 16], strides = [1, 1]} : vector<64x16xf32> to vector<8x16xf32>
    %218 = vector.extract_strided_slice %210 {offsets = [0, 16], sizes = [16, 8], strides = [1, 1]} : vector<16x32xf32> to vector<16x8xf32>
    %cst_84 = arith.constant dense<0.000000e+00> : vector<8x8xf32>
    %219 = tpu.matmul %217, %218, %cst_84 {dimension_numbers = #tpu.dot_dimension_numbers<[1], [0], [0], [1], [0, 0, 1, 1], [], []>} : vector<8x16xf32>, vector<16x8xf32>, vector<8x8xf32> -> vector<8x8xf32>
    %220 = vector.extract_strided_slice %195 {offsets = [56, 0], sizes = [8, 16], strides = [1, 1]} : vector<64x16xf32> to vector<8x16xf32>
    %221 = vector.extract_strided_slice %210 {offsets = [0, 24], sizes = [16, 8], strides = [1, 1]} : vector<16x32xf32> to vector<16x8xf32>
    %cst_85 = arith.constant dense<0.000000e+00> : vector<8x8xf32>
    %222 = tpu.matmul %220, %221, %cst_85 {dimension_numbers = #tpu.dot_dimension_numbers<[1], [0], [0], [1], [0, 0, 1, 1], [], []>} : vector<8x16xf32>, vector<16x8xf32>, vector<8x8xf32> -> vector<8x8xf32>
    %223 = tpu.concatenate %213, %216, %219, %222 in 1 : vector<8x8xf32>, vector<8x8xf32>, vector<8x8xf32>, vector<8x8xf32> -> vector<8x32xf32>
    %224 = tpu.concatenate %209, %223 in 0 : vector<8x32xf32>, vector<8x32xf32> -> vector<16x32xf32>
    %cst_86 = arith.constant dense<0.000000e+00> : vector<16x32xf32>
    %225 = tpu.matmul %224, %144, %cst_86 {dimension_numbers = #tpu.dot_dimension_numbers<[1], [0], [0], [1], [0, 0, 1, 1], [], []>} : vector<16x32xf32>, vector<32x32xf32>, vector<16x32xf32> -> vector<16x32xf32>
    %226 = vector.broadcast %146 : vector<1x32xf32> to vector<16x32xf32>
    %227 = arith.addf %225, %226 : vector<16x32xf32>
    %228 = arith.addf %126, %227 : vector<16x32xf32>
    %c0_87 = arith.constant 0 : index
    %c0_88 = arith.constant 0 : index
    %c0_89 = arith.constant 0 : index
    %229 = vector.load %arg19[%c0_87, %c0_88, %c0_89] : memref<1x1x32xf32, #tpu.memory_space<vmem>>, vector<1x1x32xf32>
    %230 = vector.shape_cast %229 : vector<1x1x32xf32> to vector<1x32xf32>
    %c0_90 = arith.constant 0 : index
    %c0_91 = arith.constant 0 : index
    %c0_92 = arith.constant 0 : index
    %231 = vector.load %arg20[%c0_90, %c0_91, %c0_92] : memref<1x1x32xf32, #tpu.memory_space<vmem>>, vector<1x1x32xf32>
    %232 = vector.shape_cast %231 : vector<1x1x32xf32> to vector<1x32xf32>
    %cst_93 = arith.constant dense<0.000000e+00> : vector<16xf32>
    %233 = vector.multi_reduction <add>, %228, %cst_93 [1] : vector<16x32xf32> to vector<16xf32>
    %234 = vector.shape_cast %233 : vector<16xf32> to vector<16x1xf32>
    %cst_94 = arith.constant 3.200000e+01 : f32
    %235 = vector.broadcast %cst_94 : f32 to vector<16x1xf32>
    %236 = arith.divf %234, %235 : vector<16x1xf32>
    %237 = vector.broadcast %236 : vector<16x1xf32> to vector<16x32xf32>
    %238 = arith.subf %228, %237 : vector<16x32xf32>
    %239 = arith.mulf %238, %238 : vector<16x32xf32>
    %cst_95 = arith.constant dense<0.000000e+00> : vector<16xf32>
    %240 = vector.multi_reduction <add>, %239, %cst_95 [1] : vector<16x32xf32> to vector<16xf32>
    %241 = vector.shape_cast %240 : vector<16xf32> to vector<16x1xf32>
    %cst_96 = arith.constant 3.200000e+01 : f32
    %242 = vector.broadcast %cst_96 : f32 to vector<16x1xf32>
    %243 = arith.divf %241, %242 : vector<16x1xf32>
    %244 = vector.broadcast %236 : vector<16x1xf32> to vector<16x32xf32>
    %245 = arith.subf %228, %244 : vector<16x32xf32>
    %cst_97 = arith.constant 9.99999974E-6 : f32
    %246 = vector.broadcast %cst_97 : f32 to vector<16x1xf32>
    %247 = arith.addf %243, %246 : vector<16x1xf32>
    %248 = math.rsqrt %247 : vector<16x1xf32>
    %249 = vector.broadcast %248 : vector<16x1xf32> to vector<16x32xf32>
    %250 = arith.mulf %245, %249 : vector<16x32xf32>
    %251 = vector.broadcast %230 : vector<1x32xf32> to vector<16x32xf32>
    %252 = arith.mulf %250, %251 : vector<16x32xf32>
    %253 = vector.broadcast %232 : vector<1x32xf32> to vector<16x32xf32>
    %254 = arith.addf %252, %253 : vector<16x32xf32>
    %c0_98 = arith.constant 0 : index
    %c0_99 = arith.constant 0 : index
    %c0_100 = arith.constant 0 : index
    %255 = vector.load %arg13[%c0_98, %c0_99, %c0_100] : memref<1x32x64xf32, #tpu.memory_space<vmem>>, vector<1x32x64xf32>
    %256 = vector.shape_cast %255 : vector<1x32x64xf32> to vector<32x64xf32>
    %cst_101 = arith.constant dense<0.000000e+00> : vector<16x64xf32>
    %257 = tpu.matmul %254, %256, %cst_101 {dimension_numbers = #tpu.dot_dimension_numbers<[1], [0], [0], [1], [0, 0, 1, 1], [], []>} : vector<16x32xf32>, vector<32x64xf32>, vector<16x64xf32> -> vector<16x64xf32>
    %c0_102 = arith.constant 0 : index
    %c0_103 = arith.constant 0 : index
    %c0_104 = arith.constant 0 : index
    %258 = vector.load %arg14[%c0_102, %c0_103, %c0_104] : memref<1x1x64xf32, #tpu.memory_space<vmem>>, vector<1x1x64xf32>
    %259 = vector.shape_cast %258 : vector<1x1x64xf32> to vector<1x64xf32>
    %260 = vector.broadcast %259 : vector<1x64xf32> to vector<16x64xf32>
    %261 = arith.addf %257, %260 : vector<16x64xf32>
    %cst_105 = arith.constant 0.000000e+00 : f32
    %262 = vector.broadcast %cst_105 : f32 to vector<16x64xf32>
    %263 = arith.maximumf %261, %262 : vector<16x64xf32>
    %c0_106 = arith.constant 0 : index
    %c0_107 = arith.constant 0 : index
    %c0_108 = arith.constant 0 : index
    %264 = vector.load %arg15[%c0_106, %c0_107, %c0_108] : memref<1x64x32xf32, #tpu.memory_space<vmem>>, vector<1x64x32xf32>
    %265 = vector.shape_cast %264 : vector<1x64x32xf32> to vector<64x32xf32>
    %cst_109 = arith.constant dense<0.000000e+00> : vector<16x32xf32>
    %266 = tpu.matmul %263, %265, %cst_109 {dimension_numbers = #tpu.dot_dimension_numbers<[1], [0], [0], [1], [0, 0, 1, 1], [], []>} : vector<16x64xf32>, vector<64x32xf32>, vector<16x32xf32> -> vector<16x32xf32>
    %c0_110 = arith.constant 0 : index
    %c0_111 = arith.constant 0 : index
    %c0_112 = arith.constant 0 : index
    %267 = vector.load %arg16[%c0_110, %c0_111, %c0_112] : memref<1x1x32xf32, #tpu.memory_space<vmem>>, vector<1x1x32xf32>
    %268 = vector.shape_cast %267 : vector<1x1x32xf32> to vector<1x32xf32>
    %269 = vector.broadcast %268 : vector<1x32xf32> to vector<16x32xf32>
    %270 = arith.addf %266, %269 : vector<16x32xf32>
    %271 = arith.addf %254, %270 : vector<16x32xf32>
    %c0_113 = arith.constant 0 : index
    %c0_114 = arith.constant 0 : index
    %c0_115 = arith.constant 0 : index
    %272 = vector.load %arg21[%c0_113, %c0_114, %c0_115] : memref<1x1x32xf32, #tpu.memory_space<vmem>>, vector<1x1x32xf32>
    %273 = vector.shape_cast %272 : vector<1x1x32xf32> to vector<1x32xf32>
    %c0_116 = arith.constant 0 : index
    %c0_117 = arith.constant 0 : index
    %c0_118 = arith.constant 0 : index
    %274 = vector.load %arg22[%c0_116, %c0_117, %c0_118] : memref<1x1x32xf32, #tpu.memory_space<vmem>>, vector<1x1x32xf32>
    %275 = vector.shape_cast %274 : vector<1x1x32xf32> to vector<1x32xf32>
    %cst_119 = arith.constant dense<0.000000e+00> : vector<16xf32>
    %276 = vector.multi_reduction <add>, %271, %cst_119 [1] : vector<16x32xf32> to vector<16xf32>
    %277 = vector.shape_cast %276 : vector<16xf32> to vector<16x1xf32>
    %cst_120 = arith.constant 3.200000e+01 : f32
    %278 = vector.broadcast %cst_120 : f32 to vector<16x1xf32>
    %279 = arith.divf %277, %278 : vector<16x1xf32>
    %280 = vector.broadcast %279 : vector<16x1xf32> to vector<16x32xf32>
    %281 = arith.subf %271, %280 : vector<16x32xf32>
    %282 = arith.mulf %281, %281 : vector<16x32xf32>
    %cst_121 = arith.constant dense<0.000000e+00> : vector<16xf32>
    %283 = vector.multi_reduction <add>, %282, %cst_121 [1] : vector<16x32xf32> to vector<16xf32>
    %284 = vector.shape_cast %283 : vector<16xf32> to vector<16x1xf32>
    %cst_122 = arith.constant 3.200000e+01 : f32
    %285 = vector.broadcast %cst_122 : f32 to vector<16x1xf32>
    %286 = arith.divf %284, %285 : vector<16x1xf32>
    %287 = vector.broadcast %279 : vector<16x1xf32> to vector<16x32xf32>
    %288 = arith.subf %271, %287 : vector<16x32xf32>
    %cst_123 = arith.constant 9.99999974E-6 : f32
    %289 = vector.broadcast %cst_123 : f32 to vector<16x1xf32>
    %290 = arith.addf %286, %289 : vector<16x1xf32>
    %291 = math.rsqrt %290 : vector<16x1xf32>
    %292 = vector.broadcast %291 : vector<16x1xf32> to vector<16x32xf32>
    %293 = arith.mulf %288, %292 : vector<16x32xf32>
    %294 = vector.broadcast %273 : vector<1x32xf32> to vector<16x32xf32>
    %295 = arith.mulf %293, %294 : vector<16x32xf32>
    %296 = vector.broadcast %275 : vector<1x32xf32> to vector<16x32xf32>
    %297 = arith.addf %295, %296 : vector<16x32xf32>
    %c0_124 = arith.constant 0 : index
    %c0_125 = arith.constant 0 : index
    %298 = vector.load %arg24[%c0_124, %c0_125] : memref<16x32xf32, #tpu.memory_space<vmem>>, vector<16x32xf32>
    tpu.vector_store %arg24[%c0_124, %c0_125], %297 {strides = array<i32>} : memref<16x32xf32, #tpu.memory_space<vmem>>, vector<16x32xf32>,
    %c1_i32 = arith.constant 1 : i32
    %299 = arith.cmpi eq, %arg0, %c1_i32 : i32
    %300 = arith.extui %299 : i1 to i32
    %c0_i32_126 = arith.constant 0 : i32
    %301 = arith.cmpi ne, %300, %c0_i32_126 : i32
    scf.if %301 {
      %c0_127 = arith.constant 0 : index
      %c0_128 = arith.constant 0 : index
      %302 = vector.load %arg23[%c0_127, %c0_128] : memref<16x32xf32, #tpu.memory_space<vmem>>, vector<16x32xf32>
      tpu.vector_store %arg23[%c0_127, %c0_128], %297 {strides = array<i32>} : memref<16x32xf32, #tpu.memory_space<vmem>>, vector<16x32xf32>,
    } else {
    }
    return
  }
  func.func @transform_0(%arg0: i32) -> (i32, i32) {
    %c0_i32 = arith.constant 0 : i32
    %c0_i32_0 = arith.constant 0 : i32
    %c0_i32_1 = arith.constant 0 : i32
    return %c0_i32, %c0_i32_0 : i32, i32
  }
  func.func @transform_1(%arg0: i32) -> (i32, i32) {
    %c0_i32 = arith.constant 0 : i32
    %c0_i32_0 = arith.constant 0 : i32
    %c0_i32_1 = arith.constant 0 : i32
    return %c0_i32, %c0_i32_0 : i32, i32
  }
  func.func @transform_2(%arg0: i32) -> (i32, i32, i32) {
    %c0_i32 = arith.constant 0 : i32
    %c0_i32_0 = arith.constant 0 : i32
    %c0_i32_1 = arith.constant 0 : i32
    return %arg0, %c0_i32, %c0_i32_0 : i32, i32, i32
  }
  func.func @transform_3(%arg0: i32) -> (i32, i32, i32) {
    %c0_i32 = arith.constant 0 : i32
    %c0_i32_0 = arith.constant 0 : i32
    %c0_i32_1 = arith.constant 0 : i32
    return %arg0, %c0_i32, %c0_i32_0 : i32, i32, i32
  }
  func.func @transform_4(%arg0: i32) -> (i32, i32, i32) {
    %c0_i32 = arith.constant 0 : i32
    %c0_i32_0 = arith.constant 0 : i32
    %c0_i32_1 = arith.constant 0 : i32
    return %arg0, %c0_i32, %c0_i32_0 : i32, i32, i32
  }
  func.func @transform_5(%arg0: i32) -> (i32, i32, i32) {
    %c0_i32 = arith.constant 0 : i32
    %c0_i32_0 = arith.constant 0 : i32
    %c0_i32_1 = arith.constant 0 : i32
    return %arg0, %c0_i32, %c0_i32_0 : i32, i32, i32
  }
  func.func @transform_6(%arg0: i32) -> (i32, i32, i32) {
    %c0_i32 = arith.constant 0 : i32
    %c0_i32_0 = arith.constant 0 : i32
    %c0_i32_1 = arith.constant 0 : i32
    return %arg0, %c0_i32, %c0_i32_0 : i32, i32, i32
  }
  func.func @transform_7(%arg0: i32) -> (i32, i32, i32) {
    %c0_i32 = arith.constant 0 : i32
    %c0_i32_0 = arith.constant 0 : i32
    %c0_i32_1 = arith.constant 0 : i32
    return %arg0, %c0_i32, %c0_i32_0 : i32, i32, i32
  }
  func.func @transform_8(%arg0: i32) -> (i32, i32, i32) {
    %c0_i32 = arith.constant 0 : i32
    %c0_i32_0 = arith.constant 0 : i32
    %c0_i32_1 = arith.constant 0 : i32
    return %arg0, %c0_i32, %c0_i32_0 : i32, i32, i32
  }
  func.func @transform_9(%arg0: i32) -> (i32, i32, i32) {
    %c0_i32 = arith.constant 0 : i32
    %c0_i32_0 = arith.constant 0 : i32
    %c0_i32_1 = arith.constant 0 : i32
    return %arg0, %c0_i32, %c0_i32_0 : i32, i32, i32
  }
  func.func @transform_10(%arg0: i32) -> (i32, i32, i32) {
    %c0_i32 = arith.constant 0 : i32
    %c0_i32_0 = arith.constant 0 : i32
    %c0_i32_1 = arith.constant 0 : i32
    return %arg0, %c0_i32, %c0_i32_0 : i32, i32, i32
  }
  func.func @transform_11(%arg0: i32) -> (i32, i32, i32) {
    %c0_i32 = arith.constant 0 : i32
    %c0_i32_0 = arith.constant 0 : i32
    %c0_i32_1 = arith.constant 0 : i32
    return %arg0, %c0_i32, %c0_i32_0 : i32, i32, i32
  }
  func.func @transform_12(%arg0: i32) -> (i32, i32, i32) {
    %c0_i32 = arith.constant 0 : i32
    %c0_i32_0 = arith.constant 0 : i32
    %c0_i32_1 = arith.constant 0 : i32
    return %arg0, %c0_i32, %c0_i32_0 : i32, i32, i32
  }
  func.func @transform_13(%arg0: i32) -> (i32, i32, i32) {
    %c0_i32 = arith.constant 0 : i32
    %c0_i32_0 = arith.constant 0 : i32
    %c0_i32_1 = arith.constant 0 : i32
    return %arg0, %c0_i32, %c0_i32_0 : i32, i32, i32
  }
  func.func @transform_14(%arg0: i32) -> (i32, i32, i32) {
    %c0_i32 = arith.constant 0 : i32
    %c0_i32_0 = arith.constant 0 : i32
    %c0_i32_1 = arith.constant 0 : i32
    return %arg0, %c0_i32, %c0_i32_0 : i32, i32, i32
  }
  func.func @transform_15(%arg0: i32) -> (i32, i32, i32) {
    %c0_i32 = arith.constant 0 : i32
    %c0_i32_0 = arith.constant 0 : i32
    %c0_i32_1 = arith.constant 0 : i32
    return %arg0, %c0_i32, %c0_i32_0 : i32, i32, i32
  }
  func.func @transform_16(%arg0: i32) -> (i32, i32, i32) {
    %c0_i32 = arith.constant 0 : i32
    %c0_i32_0 = arith.constant 0 : i32
    %c0_i32_1 = arith.constant 0 : i32
    return %arg0, %c0_i32, %c0_i32_0 : i32, i32, i32
  }
  func.func @transform_17(%arg0: i32) -> (i32, i32, i32) {
    %c0_i32 = arith.constant 0 : i32
    %c0_i32_0 = arith.constant 0 : i32
    %c0_i32_1 = arith.constant 0 : i32
    return %arg0, %c0_i32, %c0_i32_0 : i32, i32, i32
  }
  func.func @transform_18(%arg0: i32) -> (i32, i32, i32) {
    %c0_i32 = arith.constant 0 : i32
    %c0_i32_0 = arith.constant 0 : i32
    %c0_i32_1 = arith.constant 0 : i32
    return %arg0, %c0_i32, %c0_i32_0 : i32, i32, i32
  }
  func.func @transform_19(%arg0: i32) -> (i32, i32, i32) {
    %c0_i32 = arith.constant 0 : i32
    %c0_i32_0 = arith.constant 0 : i32
    %c0_i32_1 = arith.constant 0 : i32
    return %arg0, %c0_i32, %c0_i32_0 : i32, i32, i32
  }
  func.func @transform_20(%arg0: i32) -> (i32, i32, i32) {
    %c0_i32 = arith.constant 0 : i32
    %c0_i32_0 = arith.constant 0 : i32
    %c0_i32_1 = arith.constant 0 : i32
    return %arg0, %c0_i32, %c0_i32_0 : i32, i32, i32
  }
  func.func @transform_21(%arg0: i32) -> (i32, i32, i32) {
    %c0_i32 = arith.constant 0 : i32
    %c0_i32_0 = arith.constant 0 : i32
    %c0_i32_1 = arith.constant 0 : i32
    return %arg0, %c0_i32, %c0_i32_0 : i32, i32, i32
  }
  func.func @transform_22(%arg0: i32) -> (i32, i32) {
    %c0_i32 = arith.constant 0 : i32
    %c0_i32_0 = arith.constant 0 : i32
    %c0_i32_1 = arith.constant 0 : i32
    return %c0_i32, %c0_i32_0 : i32, i32
  }
}

</mosaic_0001>

<llo_original>
// kernel: tpu_custom_call.1
$region0: #{tpu_custom_call.1}
  #allocation0 [shape = 'u32[]', space=smem, size = 0x4, offset = 0x4, fixed_abs, tag = 'smem constant byte address 0x4 - core index']
  #allocation1 [shape = 'u32[144,128]{1,0:T(1,128)}', space=vmem, size = 0x12000, scoped, tag = 'internal scratch']
  #allocation2 [shape = 'f32[16,32]{1,0:T(8,128)}', space=vmem, size = 0x2000, scoped, tag = 'scratch operand']
  %s0 = inlined_call_operand.hbm [shape: f32[16,32], index: 0, kind: input, shape index: {}]
  %s1 = inlined_call_operand.hbm [shape: f32[32,32], index: 1, kind: input, shape index: {}]
  %s2 = inlined_call_operand.vmem [shape: f32[2,32,96], index: 2, kind: input, shape index: {}]
  %s3 = inlined_call_operand.vmem [shape: f32[2,1,96], index: 3, kind: input, shape index: {}]
  %s4 = inlined_call_operand.vmem [shape: f32[2,32,32], index: 4, kind: input, shape index: {}]
  %s5 = inlined_call_operand.vmem [shape: f32[2,1,32], index: 5, kind: input, shape index: {}]
  %s6 = inlined_call_operand.vmem [shape: f32[2,32,32], index: 6, kind: input, shape index: {}]
  %s7 = inlined_call_operand.vmem [shape: f32[2,1,32], index: 7, kind: input, shape index: {}]
  %s8 = inlined_call_operand.hbm [shape: f32[2,32,64], index: 8, kind: input, shape index: {}]
  %s9 = inlined_call_operand.vmem [shape: f32[2,1,64], index: 9, kind: input, shape index: {}]
  %s10 = inlined_call_operand.hbm [shape: f32[2,32,32], index: 10, kind: input, shape index: {}]
  %s11 = inlined_call_operand.vmem [shape: f32[2,1,32], index: 11, kind: input, shape index: {}]
  %s12 = inlined_call_operand.hbm [shape: f32[2,32,64], index: 12, kind: input, shape index: {}]
  %s13 = inlined_call_operand.vmem [shape: f32[2,1,64], index: 13, kind: input, shape index: {}]
  %s14 = inlined_call_operand.vmem [shape: f32[2,64,32], index: 14, kind: input, shape index: {}]
  %s15 = inlined_call_operand.vmem [shape: f32[2,1,32], index: 15, kind: input, shape index: {}]
  %s16 = inlined_call_operand.vmem [shape: f32[2,1,32], index: 16, kind: input, shape index: {}]
  %s17 = inlined_call_operand.vmem [shape: f32[2,1,32], index: 17, kind: input, shape index: {}]
  %s18 = inlined_call_operand.vmem [shape: f32[2,1,32], index: 18, kind: input, shape index: {}]
  %s19 = inlined_call_operand.vmem [shape: f32[2,1,32], index: 19, kind: input, shape index: {}]
  %s20 = inlined_call_operand.vmem [shape: f32[2,1,32], index: 20, kind: input, shape index: {}]
  %s21 = inlined_call_operand.vmem [shape: f32[2,1,32], index: 21, kind: input, shape index: {}]
  %s22 = inlined_call_operand.hbm [shape: f32[16,32], index: 22, kind: output, shape index: {}]
  %s23 = sld [smem:[#allocation0]]
  $region149: #{tpu_custom_call.1} parent=0
    _
  %s25 = ssub.s32 1, %s23
  %s26 = scalar_select 0, %s25, %s23
  $region1: #{tpu_custom_call.1} parent=0
    #allocation3 [shape = 'u8[8192]{0}', space=vmem, size = 0x2000, scoped, tag = 'input window, operand 0, single buffered']
    #allocation4 [shape = 's32[2]{0}', space=sflag, size = 0x8, scoped, tag = 'scoped memory for tpu_custom_call.1']
    #allocation5 [shape = 's32[2]{0}', space=sflag, size = 0x8, scoped, tag = 'scoped memory for tpu_custom_call.1']
    #allocation6 [shape = 'u8[16384]{0}', space=vmem, size = 0x4000, scoped, tag = 'input window, operand 1, single buffered']
    #allocation7 [shape = 's32[1]{0}', space=sflag, size = 0x4, scoped, tag = 'scoped memory for tpu_custom_call.1']
    #allocation8 [shape = 'u8[32768]{0}', space=vmem, size = 0x8000, scoped, tag = 'input window, operand 8']
    #allocation9 [shape = 'u8[32768]{0}', space=vmem, size = 0x8000, scoped, tag = 'input window, operand 10']
    #allocation10 [shape = 'u8[32768]{0}', space=vmem, size = 0x8000, scoped, tag = 'input window, operand 12']
    #allocation11 [shape = 'u8[8192]{0}', space=vmem, size = 0x2000, scoped, tag = 'output window, operand 0, single buffered']
    %27 = vsyncpa [#allocation4], 0
    %28 = vsyncpa [#allocation7], 0
    %29 = vsyncpa [#allocation5], 0
    loop: start=0, step=1, limit=4
    $region2: #{tpu_custom_call.1} parent=1 // loop_pre_header
      _
    $region3: #{tpu_custom_call.1} parent=1 // loop_header
      %s31 = sphi 0, %s35
      %p32 = scmp.ge.s32.totalorder %s31, 4
      %s39 = sphi 0, %s39
      %s41 = sphi 0, %s39
      %s42 = sphi 0, %s41
      %s56 = sphi 0, %s42
      %s60 = sphi 0, %s60
      %s62 = sphi 0, %s60
      %s63 = sphi 0, %s62
      %s77 = sphi 0, %s63
      %s83 = sphi 0, %s85
      %s86 = sphi 0, %s83
      %s87 = sphi 0, %s86
      %s103 = sphi 0, %s87
      %s109 = sphi 0, %s111
      %s112 = sphi 0, %s109
      %s113 = sphi 0, %s112
      %s129 = sphi 0, %s113
      %s135 = sphi 0, %s137
      %s138 = sphi 0, %s135
      %s139 = sphi 0, %s138
      %s155 = sphi 0, %s139
      %s161 = sphi 0, %s163
      %s164 = sphi 0, %s161
      %s165 = sphi 0, %s164
      %s181 = sphi 0, %s165
      %s187 = sphi 0, %s189
      %s190 = sphi 0, %s187
      %s191 = sphi 0, %s190
      %s207 = sphi 0, %s191
      %s213 = sphi 0, %s215
      %s216 = sphi 0, %s213
      %s217 = sphi 0, %s216
      %s233 = sphi 0, %s217
      %s239 = sphi 0, %s241
      %s242 = sphi 0, %s239
      %s243 = sphi 0, %s242
      %s259 = sphi 0, %s243
      %s265 = sphi 0, %s267
      %s268 = sphi 0, %s265
      %s269 = sphi 0, %s268
      %s285 = sphi 0, %s269
      %s291 = sphi 0, %s293
      %s294 = sphi 0, %s291
      %s295 = sphi 0, %s294
      %s311 = sphi 0, %s295
      %s317 = sphi 0, %s319
      %s320 = sphi 0, %s317
      %s321 = sphi 0, %s320
      %s337 = sphi 0, %s321
      %s343 = sphi 0, %s345
      %s346 = sphi 0, %s343
      %s347 = sphi 0, %s346
      %s363 = sphi 0, %s347
      %s369 = sphi 0, %s371
      %s372 = sphi 0, %s369
      %s373 = sphi 0, %s372
      %s389 = sphi 0, %s373
      %s395 = sphi 0, %s397
      %s398 = sphi 0, %s395
      %s399 = sphi 0, %s398
      %s415 = sphi 0, %s399
      %s421 = sphi 0, %s423
      %s424 = sphi 0, %s421
      %s425 = sphi 0, %s424
      %s441 = sphi 0, %s425
      %s447 = sphi 0, %s449
      %s450 = sphi 0, %s447
      %s451 = sphi 0, %s450
      %s467 = sphi 0, %s451
      %s473 = sphi 0, %s475
      %s476 = sphi 0, %s473
      %s477 = sphi 0, %s476
      %s493 = sphi 0, %s477
      %s499 = sphi 0, %s501
      %s502 = sphi 0, %s499
      %s503 = sphi 0, %s502
      %s519 = sphi 0, %s503
      %s525 = sphi 0, %s527
      %s528 = sphi 0, %s525
      %s529 = sphi 0, %s528
      %s545 = sphi 0, %s529
      %s551 = sphi 0, %s553
      %s554 = sphi 0, %s551
      %s555 = sphi 0, %s554
      %s571 = sphi 0, %s555
      %s577 = sphi 0, %s579
      %s580 = sphi 0, %s577
      %s581 = sphi 0, %s580
      %s597 = sphi 0, %s581
      %s601 = sphi 0, %s601
      %s603 = sphi 0, %s601
      %s604 = sphi 0, %s603
      %s618 = sphi 0, %s604
    $region4: #{tpu_custom_call.1} parent=1 // loop_header_branch
      %34 = sbr.rel (%p32) target = $region8
    $region5: #{tpu_custom_call.1} parent=1 // loop_body
      %s36 = ssub.s32 %s31, 1
      %s37 = ssub.s32 %s31, 2
      %s38 = sadd.s32 %s31, 1
      %s40 = sadd.s32 %s39, 1
      %p43 = scmp.eq.s32.totalorder %s31, 1
      %p44 = scmp.ne.s32.totalorder %s39, %s41
      %p45 = scmp.eq.s32.totalorder %s31, 0
      %p46 = por %p44, %p45
      %p47 = scmp.ne.s32.totalorder %s39, %s41
      %p48 = scmp.eq.s32.totalorder %s36, 1
      %p49 = por %p47, %p48
      %p50 = scmp.ne.s32.totalorder %s41, %s42
      %p51 = scmp.eq.s32.totalorder %s36, 0
      %p52 = por %p50, %p51
      %p53 = scmp.ne.s32.totalorder %s41, %s42
      %p54 = scmp.eq.s32.totalorder %s37, 1
      %p55 = por %p53, %p54
      %p57 = scmp.ne.s32.totalorder %s42, %s56
      %p58 = scmp.eq.s32.totalorder %s37, 0
      %p59 = por %p57, %p58
      %s61 = sadd.s32 %s60, 1
      %p64 = scmp.eq.s32.totalorder %s31, 1
      %p65 = scmp.ne.s32.totalorder %s60, %s62
      %p66 = scmp.eq.s32.totalorder %s31, 0
      %p67 = por %p65, %p66
      %p68 = scmp.ne.s32.totalorder %s60, %s62
      %p69 = scmp.eq.s32.totalorder %s36, 1
      %p70 = por %p68, %p69
      %p71 = scmp.ne.s32.totalorder %s62, %s63
      %p72 = scmp.eq.s32.totalorder %s36, 0
      %p73 = por %p71, %p72
      %p74 = scmp.ne.s32.totalorder %s62, %s63
      %p75 = scmp.eq.s32.totalorder %s37, 1
      %p76 = por %p74, %p75
      %p78 = scmp.ne.s32.totalorder %s63, %s77
      %p79 = scmp.eq.s32.totalorder %s37, 0
      %p80 = por %p78, %p79
      %s81 = ssub.s32 %s31, %s38
      %p82 = scmp.eq.s32.totalorder %s81, 0
      %s84 = sadd.s32 %s83, 1
      %s85 = scalar_select %p82, %s83, %s84
      %p88 = pneg %p82
      %p89 = scmp.eq.s32.totalorder %s31, 1
      %p90 = por %p88, %p89
      %p91 = scmp.ne.s32.totalorder %s83, %s86
      %p92 = scmp.eq.s32.totalorder %s31, 0
      %p93 = por %p91, %p92
      %p94 = scmp.ne.s32.totalorder %s83, %s86
      %p95 = scmp.eq.s32.totalorder %s36, 1
      %p96 = por %p94, %p95
      %p97 = scmp.ne.s32.totalorder %s86, %s87
      %p98 = scmp.eq.s32.totalorder %s36, 0
      %p99 = por %p97, %p98
      %p100 = scmp.ne.s32.totalorder %s86, %s87
      %p101 = scmp.eq.s32.totalorder %s37, 1
      %p102 = por %p100, %p101
      %p104 = scmp.ne.s32.totalorder %s87, %s103
      %p105 = scmp.eq.s32.totalorder %s37, 0
      %p106 = por %p104, %p105
      %s107 = ssub.s32 %s31, %s38
      %p108 = scmp.eq.s32.totalorder %s107, 0
      %s110 = sadd.s32 %s109, 1
      %s111 = scalar_select %p108, %s109, %s110
      %p114 = pneg %p108
      %p115 = scmp.eq.s32.totalorder %s31, 1
      %p116 = por %p114, %p115
      %p117 = scmp.ne.s32.totalorder %s109, %s112
      %p118 = scmp.eq.s32.totalorder %s31, 0
      %p119 = por %p117, %p118
      %p120 = scmp.ne.s32.totalorder %s109, %s112
      %p121 = scmp.eq.s32.totalorder %s36, 1
      %p122 = por %p120, %p121
      %p123 = scmp.ne.s32.totalorder %s112, %s113
      %p124 = scmp.eq.s32.totalorder %s36, 0
      %p125 = por %p123, %p124
      %p126 = scmp.ne.s32.totalorder %s112, %s113
      %p127 = scmp.eq.s32.totalorder %s37, 1
      %p128 = por %p126, %p127
      %p130 = scmp.ne.s32.totalorder %s113, %s129
      %p131 = scmp.eq.s32.totalorder %s37, 0
      %p132 = por %p130, %p131
      %s133 = ssub.s32 %s31, %s38
      %p134 = scmp.eq.s32.totalorder %s133, 0
      %s136 = sadd.s32 %s135, 1
      %s137 = scalar_select %p134, %s135, %s136
      %p140 = pneg %p134
      %p141 = scmp.eq.s32.totalorder %s31, 1
      %p142 = por %p140, %p141
      %p143 = scmp.ne.s32.totalorder %s135, %s138
      %p144 = scmp.eq.s32.totalorder %s31, 0
      %p145 = por %p143, %p144
      %p146 = scmp.ne.s32.totalorder %s135, %s138
      %p147 = scmp.eq.s32.totalorder %s36, 1
      %p148 = por %p146, %p147
      %p149 = scmp.ne.s32.totalorder %s138, %s139
      %p150 = scmp.eq.s32.totalorder %s36, 0
      %p151 = por %p149, %p150
      %p152 = scmp.ne.s32.totalorder %s138, %s139
      %p153 = scmp.eq.s32.totalorder %s37, 1
      %p154 = por %p152, %p153
      %p156 = scmp.ne.s32.totalorder %s139, %s155
      %p157 = scmp.eq.s32.totalorder %s37, 0
      %p158 = por %p156, %p157
      %s159 = ssub.s32 %s31, %s38
      %p160 = scmp.eq.s32.totalorder %s159, 0
      %s162 = sadd.s32 %s161, 1
      %s163 = scalar_select %p160, %s161, %s162
      %p166 = pneg %p160
      %p167 = scmp.eq.s32.totalorder %s31, 1
      %p168 = por %p166, %p167
      %p169 = scmp.ne.s32.totalorder %s161, %s164
      %p170 = scmp.eq.s32.totalorder %s31, 0
      %p171 = por %p169, %p170
      %p172 = scmp.ne.s32.totalorder %s161, %s164
      %p173 = scmp.eq.s32.totalorder %s36, 1
      %p174 = por %p172, %p173
      %p175 = scmp.ne.s32.totalorder %s164, %s165
      %p176 = scmp.eq.s32.totalorder %s36, 0
      %p177 = por %p175, %p176
      %p178 = scmp.ne.s32.totalorder %s164, %s165
      %p179 = scmp.eq.s32.totalorder %s37, 1
      %p180 = por %p178, %p179
      %p182 = scmp.ne.s32.totalorder %s165, %s181
      %p183 = scmp.eq.s32.totalorder %s37, 0
      %p184 = por %p182, %p183
      %s185 = ssub.s32 %s31, %s38
      %p186 = scmp.eq.s32.totalorder %s185, 0
      %s188 = sadd.s32 %s187, 1
      %s189 = scalar_select %p186, %s187, %s188
      %p192 = pneg %p186
      %p193 = scmp.eq.s32.totalorder %s31, 1
      %p194 = por %p192, %p193
      %p195 = scmp.ne.s32.totalorder %s187, %s190
      %p196 = scmp.eq.s32.totalorder %s31, 0
      %p197 = por %p195, %p196
      %p198 = scmp.ne.s32.totalorder %s187, %s190
      %p199 = scmp.eq.s32.totalorder %s36, 1
      %p200 = por %p198, %p199
      %p201 = scmp.ne.s32.totalorder %s190, %s191
      %p202 = scmp.eq.s32.totalorder %s36, 0
      %p203 = por %p201, %p202
      %p204 = scmp.ne.s32.totalorder %s190, %s191
      %p205 = scmp.eq.s32.totalorder %s37, 1
      %p206 = por %p204, %p205
      %p208 = scmp.ne.s32.totalorder %s191, %s207
      %p209 = scmp.eq.s32.totalorder %s37, 0
      %p210 = por %p208, %p209
      %s211 = ssub.s32 %s31, %s38
      %p212 = scmp.eq.s32.totalorder %s211, 0
      %s214 = sadd.s32 %s213, 1
      %s215 = scalar_select %p212, %s213, %s214
      %p218 = pneg %p212
      %p219 = scmp.eq.s32.totalorder %s31, 1
      %p220 = por %p218, %p219
      %p221 = scmp.ne.s32.totalorder %s213, %s216
      %p222 = scmp.eq.s32.totalorder %s31, 0
      %p223 = por %p221, %p222
      %p224 = scmp.ne.s32.totalorder %s213, %s216
      %p225 = scmp.eq.s32.totalorder %s36, 1
      %p226 = por %p224, %p225
      %p227 = scmp.ne.s32.totalorder %s216, %s217
      %p228 = scmp.eq.s32.totalorder %s36, 0
      %p229 = por %p227, %p228
      %p230 = scmp.ne.s32.totalorder %s216, %s217
      %p231 = scmp.eq.s32.totalorder %s37, 1
      %p232 = por %p230, %p231
      %p234 = scmp.ne.s32.totalorder %s217, %s233
      %p235 = scmp.eq.s32.totalorder %s37, 0
      %p236 = por %p234, %p235
      %s237 = ssub.s32 %s31, %s38
      %p238 = scmp.eq.s32.totalorder %s237, 0
      %s240 = sadd.s32 %s239, 1
      %s241 = scalar_select %p238, %s239, %s240
      %p244 = pneg %p238
      %p245 = scmp.eq.s32.totalorder %s31, 1
      %p246 = por %p244, %p245
      %p247 = scmp.ne.s32.totalorder %s239, %s242
      %p248 = scmp.eq.s32.totalorder %s31, 0
      %p249 = por %p247, %p248
      %p250 = scmp.ne.s32.totalorder %s239, %s242
      %p251 = scmp.eq.s32.totalorder %s36, 1
      %p252 = por %p250, %p251
      %p253 = scmp.ne.s32.totalorder %s242, %s243
      %p254 = scmp.eq.s32.totalorder %s36, 0
      %p255 = por %p253, %p254
      %p256 = scmp.ne.s32.totalorder %s242, %s243
      %p257 = scmp.eq.s32.totalorder %s37, 1
      %p258 = por %p256, %p257
      %p260 = scmp.ne.s32.totalorder %s243, %s259
      %p261 = scmp.eq.s32.totalorder %s37, 0
      %p262 = por %p260, %p261
      %s263 = ssub.s32 %s31, %s38
      %p264 = scmp.eq.s32.totalorder %s263, 0
      %s266 = sadd.s32 %s265, 1
      %s267 = scalar_select %p264, %s265, %s266
      %p270 = pneg %p264
      %p271 = scmp.eq.s32.totalorder %s31, 1
      %p272 = por %p270, %p271
      %p273 = scmp.ne.s32.totalorder %s265, %s268
      %p274 = scmp.eq.s32.totalorder %s31, 0
      %p275 = por %p273, %p274
      %p276 = scmp.ne.s32.totalorder %s265, %s268
      %p277 = scmp.eq.s32.totalorder %s36, 1
      %p278 = por %p276, %p277
      %p279 = scmp.ne.s32.totalorder %s268, %s269
      %p280 = scmp.eq.s32.totalorder %s36, 0
      %p281 = por %p279, %p280
      %p282 = scmp.ne.s32.totalorder %s268, %s269
      %p283 = scmp.eq.s32.totalorder %s37, 1
      %p284 = por %p282, %p283
      %p286 = scmp.ne.s32.totalorder %s269, %s285
      %p287 = scmp.eq.s32.totalorder %s37, 0
      %p288 = por %p286, %p287
      %s289 = ssub.s32 %s31, %s38
      %p290 = scmp.eq.s32.totalorder %s289, 0
      %s292 = sadd.s32 %s291, 1
      %s293 = scalar_select %p290, %s291, %s292
      %p296 = pneg %p290
      %p297 = scmp.eq.s32.totalorder %s31, 1
      %p298 = por %p296, %p297
      %p299 = scmp.ne.s32.totalorder %s291, %s294
      %p300 = scmp.eq.s32.totalorder %s31, 0
      %p301 = por %p299, %p300
      %p302 = scmp.ne.s32.totalorder %s291, %s294
      %p303 = scmp.eq.s32.totalorder %s36, 1
      %p304 = por %p302, %p303
      %p305 = scmp.ne.s32.totalorder %s294, %s295
      %p306 = scmp.eq.s32.totalorder %s36, 0
      %p307 = por %p305, %p306
      %p308 = scmp.ne.s32.totalorder %s294, %s295
      %p309 = scmp.eq.s32.totalorder %s37, 1
      %p310 = por %p308, %p309
      %p312 = scmp.ne.s32.totalorder %s295, %s311
      %p313 = scmp.eq.s32.totalorder %s37, 0
      %p314 = por %p312, %p313
      %s315 = ssub.s32 %s31, %s38
      %p316 = scmp.eq.s32.totalorder %s315, 0
      %s318 = sadd.s32 %s317, 1
      %s319 = scalar_select %p316, %s317, %s318
      %p322 = pneg %p316
      %p323 = scmp.eq.s32.totalorder %s31, 1
      %p324 = por %p322, %p323
      %p325 = scmp.ne.s32.totalorder %s317, %s320
      %p326 = scmp.eq.s32.totalorder %s31, 0
      %p327 = por %p325, %p326
      %p328 = scmp.ne.s32.totalorder %s317, %s320
      %p329 = scmp.eq.s32.totalorder %s36, 1
      %p330 = por %p328, %p329
      %p331 = scmp.ne.s32.totalorder %s320, %s321
      %p332 = scmp.eq.s32.totalorder %s36, 0
      %p333 = por %p331, %p332
      %p334 = scmp.ne.s32.totalorder %s320, %s321
      %p335 = scmp.eq.s32.totalorder %s37, 1
      %p336 = por %p334, %p335
      %p338 = scmp.ne.s32.totalorder %s321, %s337
      %p339 = scmp.eq.s32.totalorder %s37, 0
      %p340 = por %p338, %p339
      %s341 = ssub.s32 %s31, %s38
      %p342 = scmp.eq.s32.totalorder %s341, 0
      %s344 = sadd.s32 %s343, 1
      %s345 = scalar_select %p342, %s343, %s344
      %p348 = pneg %p342
      %p349 = scmp.eq.s32.totalorder %s31, 1
      %p350 = por %p348, %p349
      %p351 = scmp.ne.s32.totalorder %s343, %s346
      %p352 = scmp.eq.s32.totalorder %s31, 0
      %p353 = por %p351, %p352
      %p354 = scmp.ne.s32.totalorder %s343, %s346
      %p355 = scmp.eq.s32.totalorder %s36, 1
      %p356 = por %p354, %p355
      %p357 = scmp.ne.s32.totalorder %s346, %s347
      %p358 = scmp.eq.s32.totalorder %s36, 0
      %p359 = por %p357, %p358
      %p360 = scmp.ne.s32.totalorder %s346, %s347
      %p361 = scmp.eq.s32.totalorder %s37, 1
      %p362 = por %p360, %p361
      %p364 = scmp.ne.s32.totalorder %s347, %s363
      %p365 = scmp.eq.s32.totalorder %s37, 0
      %p366 = por %p364, %p365
      %s367 = ssub.s32 %s31, %s38
      %p368 = scmp.eq.s32.totalorder %s367, 0
      %s370 = sadd.s32 %s369, 1
      %s371 = scalar_select %p368, %s369, %s370
      %p374 = pneg %p368
      %p375 = scmp.eq.s32.totalorder %s31, 1
      %p376 = por %p374, %p375
      %p377 = scmp.ne.s32.totalorder %s369, %s372
      %p378 = scmp.eq.s32.totalorder %s31, 0
      %p379 = por %p377, %p378
      %p380 = scmp.ne.s32.totalorder %s369, %s372
      %p381 = scmp.eq.s32.totalorder %s36, 1
      %p382 = por %p380, %p381
      %p383 = scmp.ne.s32.totalorder %s372, %s373
      %p384 = scmp.eq.s32.totalorder %s36, 0
      %p385 = por %p383, %p384
      %p386 = scmp.ne.s32.totalorder %s372, %s373
      %p387 = scmp.eq.s32.totalorder %s37, 1
      %p388 = por %p386, %p387
      %p390 = scmp.ne.s32.totalorder %s373, %s389
      %p391 = scmp.eq.s32.totalorder %s37, 0
      %p392 = por %p390, %p391
      %s393 = ssub.s32 %s31, %s38
      %p394 = scmp.eq.s32.totalorder %s393, 0
      %s396 = sadd.s32 %s395, 1
      %s397 = scalar_select %p394, %s395, %s396
      %p400 = pneg %p394
      %p401 = scmp.eq.s32.totalorder %s31, 1
      %p402 = por %p400, %p401
      %p403 = scmp.ne.s32.totalorder %s395, %s398
      %p404 = scmp.eq.s32.totalorder %s31, 0
      %p405 = por %p403, %p404
      %p406 = scmp.ne.s32.totalorder %s395, %s398
      %p407 = scmp.eq.s32.totalorder %s36, 1
      %p408 = por %p406, %p407
      %p409 = scmp.ne.s32.totalorder %s398, %s399
      %p410 = scmp.eq.s32.totalorder %s36, 0
      %p411 = por %p409, %p410
      %p412 = scmp.ne.s32.totalorder %s398, %s399
      %p413 = scmp.eq.s32.totalorder %s37, 1
      %p414 = por %p412, %p413
      %p416 = scmp.ne.s32.totalorder %s399, %s415
      %p417 = scmp.eq.s32.totalorder %s37, 0
      %p418 = por %p416, %p417
      %s419 = ssub.s32 %s31, %s38
      %p420 = scmp.eq.s32.totalorder %s419, 0
      %s422 = sadd.s32 %s421, 1
      %s423 = scalar_select %p420, %s421, %s422
      %p426 = pneg %p420
      %p427 = scmp.eq.s32.totalorder %s31, 1
      %p428 = por %p426, %p427
      %p429 = scmp.ne.s32.totalorder %s421, %s424
      %p430 = scmp.eq.s32.totalorder %s31, 0
      %p431 = por %p429, %p430
      %p432 = scmp.ne.s32.totalorder %s421, %s424
      %p433 = scmp.eq.s32.totalorder %s36, 1
      %p434 = por %p432, %p433
      %p435 = scmp.ne.s32.totalorder %s424, %s425
      %p436 = scmp.eq.s32.totalorder %s36, 0
      %p437 = por %p435, %p436
      %p438 = scmp.ne.s32.totalorder %s424, %s425
      %p439 = scmp.eq.s32.totalorder %s37, 1
      %p440 = por %p438, %p439
      %p442 = scmp.ne.s32.totalorder %s425, %s441
      %p443 = scmp.eq.s32.totalorder %s37, 0
      %p444 = por %p442, %p443
      %s445 = ssub.s32 %s31, %s38
      %p446 = scmp.eq.s32.totalorder %s445, 0
      %s448 = sadd.s32 %s447, 1
      %s449 = scalar_select %p446, %s447, %s448
      %p452 = pneg %p446
      %p453 = scmp.eq.s32.totalorder %s31, 1
      %p454 = por %p452, %p453
      %p455 = scmp.ne.s32.totalorder %s447, %s450
      %p456 = scmp.eq.s32.totalorder %s31, 0
      %p457 = por %p455, %p456
      %p458 = scmp.ne.s32.totalorder %s447, %s450
      %p459 = scmp.eq.s32.totalorder %s36, 1
      %p460 = por %p458, %p459
      %p461 = scmp.ne.s32.totalorder %s450, %s451
      %p462 = scmp.eq.s32.totalorder %s36, 0
      %p463 = por %p461, %p462
      %p464 = scmp.ne.s32.totalorder %s450, %s451
      %p465 = scmp.eq.s32.totalorder %s37, 1
      %p466 = por %p464, %p465
      %p468 = scmp.ne.s32.totalorder %s451, %s467
      %p469 = scmp.eq.s32.totalorder %s37, 0
      %p470 = por %p468, %p469
      %s471 = ssub.s32 %s31, %s38
      %p472 = scmp.eq.s32.totalorder %s471, 0
      %s474 = sadd.s32 %s473, 1
      %s475 = scalar_select %p472, %s473, %s474
      %p478 = pneg %p472
      %p479 = scmp.eq.s32.totalorder %s31, 1
      %p480 = por %p478, %p479
      %p481 = scmp.ne.s32.totalorder %s473, %s476
      %p482 = scmp.eq.s32.totalorder %s31, 0
      %p483 = por %p481, %p482
      %p484 = scmp.ne.s32.totalorder %s473, %s476
      %p485 = scmp.eq.s32.totalorder %s36, 1
      %p486 = por %p484, %p485
      %p487 = scmp.ne.s32.totalorder %s476, %s477
      %p488 = scmp.eq.s32.totalorder %s36, 0
      %p489 = por %p487, %p488
      %p490 = scmp.ne.s32.totalorder %s476, %s477
      %p491 = scmp.eq.s32.totalorder %s37, 1
      %p492 = por %p490, %p491
      %p494 = scmp.ne.s32.totalorder %s477, %s493
      %p495 = scmp.eq.s32.totalorder %s37, 0
      %p496 = por %p494, %p495
      %s497 = ssub.s32 %s31, %s38
      %p498 = scmp.eq.s32.totalorder %s497, 0
      %s500 = sadd.s32 %s499, 1
      %s501 = scalar_select %p498, %s499, %s500
      %p504 = pneg %p498
      %p505 = scmp.eq.s32.totalorder %s31, 1
      %p506 = por %p504, %p505
      %p507 = scmp.ne.s32.totalorder %s499, %s502
      %p508 = scmp.eq.s32.totalorder %s31, 0
      %p509 = por %p507, %p508
      %p510 = scmp.ne.s32.totalorder %s499, %s502
      %p511 = scmp.eq.s32.totalorder %s36, 1
      %p512 = por %p510, %p511
      %p513 = scmp.ne.s32.totalorder %s502, %s503
      %p514 = scmp.eq.s32.totalorder %s36, 0
      %p515 = por %p513, %p514
      %p516 = scmp.ne.s32.totalorder %s502, %s503
      %p517 = scmp.eq.s32.totalorder %s37, 1
      %p518 = por %p516, %p517
      %p520 = scmp.ne.s32.totalorder %s503, %s519
      %p521 = scmp.eq.s32.totalorder %s37, 0
      %p522 = por %p520, %p521
      %s523 = ssub.s32 %s31, %s38
      %p524 = scmp.eq.s32.totalorder %s523, 0
      %s526 = sadd.s32 %s525, 1
      %s527 = scalar_select %p524, %s525, %s526
      %p530 = pneg %p524
      %p531 = scmp.eq.s32.totalorder %s31, 1
      %p532 = por %p530, %p531
      %p533 = scmp.ne.s32.totalorder %s525, %s528
      %p534 = scmp.eq.s32.totalorder %s31, 0
      %p535 = por %p533, %p534
      %p536 = scmp.ne.s32.totalorder %s525, %s528
      %p537 = scmp.eq.s32.totalorder %s36, 1
      %p538 = por %p536, %p537
      %p539 = scmp.ne.s32.totalorder %s528, %s529
      %p540 = scmp.eq.s32.totalorder %s36, 0
      %p541 = por %p539, %p540
      %p542 = scmp.ne.s32.totalorder %s528, %s529
      %p543 = scmp.eq.s32.totalorder %s37, 1
      %p544 = por %p542, %p543
      %p546 = scmp.ne.s32.totalorder %s529, %s545
      %p547 = scmp.eq.s32.totalorder %s37, 0
      %p548 = por %p546, %p547
      %s549 = ssub.s32 %s31, %s38
      %p550 = scmp.eq.s32.totalorder %s549, 0
      %s552 = sadd.s32 %s551, 1
      %s553 = scalar_select %p550, %s551, %s552
      %p556 = pneg %p550
      %p557 = scmp.eq.s32.totalorder %s31, 1
      %p558 = por %p556, %p557
      %p559 = scmp.ne.s32.totalorder %s551, %s554
      %p560 = scmp.eq.s32.totalorder %s31, 0
      %p561 = por %p559, %p560
      %p562 = scmp.ne.s32.totalorder %s551, %s554
      %p563 = scmp.eq.s32.totalorder %s36, 1
      %p564 = por %p562, %p563
      %p565 = scmp.ne.s32.totalorder %s554, %s555
      %p566 = scmp.eq.s32.totalorder %s36, 0
      %p567 = por %p565, %p566
      %p568 = scmp.ne.s32.totalorder %s554, %s555
      %p569 = scmp.eq.s32.totalorder %s37, 1
      %p570 = por %p568, %p569
      %p572 = scmp.ne.s32.totalorder %s555, %s571
      %p573 = scmp.eq.s32.totalorder %s37, 0
      %p574 = por %p572, %p573
      %s575 = ssub.s32 %s31, %s38
      %p576 = scmp.eq.s32.totalorder %s575, 0
      %s578 = sadd.s32 %s577, 1
      %s579 = scalar_select %p576, %s577, %s578
      %p582 = pneg %p576
      %p583 = scmp.eq.s32.totalorder %s31, 1
      %p584 = por %p582, %p583
      %p585 = scmp.ne.s32.totalorder %s577, %s580
      %p586 = scmp.eq.s32.totalorder %s31, 0
      %p587 = por %p585, %p586
      %p588 = scmp.ne.s32.totalorder %s577, %s580
      %p589 = scmp.eq.s32.totalorder %s36, 1
      %p590 = por %p588, %p589
      %p591 = scmp.ne.s32.totalorder %s580, %s581
      %p592 = scmp.eq.s32.totalorder %s36, 0
      %p593 = por %p591, %p592
      %p594 = scmp.ne.s32.totalorder %s580, %s581
      %p595 = scmp.eq.s32.totalorder %s37, 1
      %p596 = por %p594, %p595
      %p598 = scmp.ne.s32.totalorder %s581, %s597
      %p599 = scmp.eq.s32.totalorder %s37, 0
      %p600 = por %p598, %p599
      %s602 = sadd.s32 %s601, 1
      %p605 = scmp.eq.s32.totalorder %s31, 1
      %p606 = scmp.ne.s32.totalorder %s601, %s603
      %p607 = scmp.eq.s32.totalorder %s31, 0
      %p608 = por %p606, %p607
      %p609 = scmp.ne.s32.totalorder %s601, %s603
      %p610 = scmp.eq.s32.totalorder %s36, 1
      %p611 = por %p609, %p610
      %p612 = scmp.ne.s32.totalorder %s603, %s604
      %p613 = scmp.eq.s32.totalorder %s36, 0
      %p614 = por %p612, %p613
      %p615 = scmp.ne.s32.totalorder %s603, %s604
      %p616 = scmp.eq.s32.totalorder %s37, 1
      %p617 = por %p615, %p616
      %p619 = scmp.ne.s32.totalorder %s604, %s618
      %p620 = scmp.eq.s32.totalorder %s37, 0
      %p621 = por %p619, %p620
      %p622 = scmp.le.s32.totalorder 1, %s31
      %p623 = scmp.lt.s32.totalorder %s31, 3
      %p624 = pnand %p622, %p623
      %p625 = pneg %p624
      // Predicated region
      $region9: #{tpu_custom_call.1} parent=5 // pred_check
        _
      $region10: #{tpu_custom_call.1} parent=5 // pred_check_branch
        %627 = sbr.rel (%p624) target = $region12
      $region11: #{tpu_custom_call.1} parent=5 // pred_region
        %s628 = ssub.s32 %s31, 1
        // Predicated region
        $region13: #{tpu_custom_call.1} parent=11 // pred_check
          %p629 = pneg %p52
        $region14: #{tpu_custom_call.1} parent=11 // pred_check_branch
          %631 = sbr.rel (%p629) target = $region16
        $region15: #{tpu_custom_call.1} parent=11 // pred_region
          %s633 = ssub.s32 256, 256
          %634 = vsyncadd [#allocation4], %s633
          %s635 = sshll.u32 [#allocation3], 4
          %s636 = int_to_ptr.vmem [resolvable:$true] %s635
          %641 = dma.hbm_to_vmem [thread:$0]  %s0, 256, %s636, [#allocation4], 128, 128, 8
        $region16: #{tpu_custom_call.1} parent=11 // pred_fallthru
          _
        // Predicated region
        $region17: #{tpu_custom_call.1} parent=11 // pred_check
          %p642 = pneg %p73
        $region18: #{tpu_custom_call.1} parent=11 // pred_check_branch
          %644 = sbr.rel (%p642) target = $region20
        $region19: #{tpu_custom_call.1} parent=11 // pred_region
          %s646 = ssub.s32 512, 512
          %647 = vsyncadd [#allocation7], %s646
          %s648 = sshll.u32 [#allocation6], 4
          %s649 = int_to_ptr.vmem [resolvable:$true] %s648
          %654 = dma.hbm_to_vmem [thread:$0]  %s1, 512, %s649, [#allocation7], 128, 128, 8
        $region20: #{tpu_custom_call.1} parent=11 // pred_fallthru
          _
      $region12: #{tpu_custom_call.1} parent=5 // pred_fallthru
        _
      %p655 = scmp.lt.s32.totalorder %s31, 2
      // Predicated region
      $region21: #{tpu_custom_call.1} parent=5 // pred_check
        %p656 = pneg %p655
      $region22: #{tpu_custom_call.1} parent=5 // pred_check_branch
        %658 = sbr.rel (%p656) target = $region24
      $region23: #{tpu_custom_call.1} parent=5 // pred_region
        // Predicated region
        $region25: #{tpu_custom_call.1} parent=23 // pred_check
          %p659 = pneg %p93
        $region26: #{tpu_custom_call.1} parent=23 // pred_check_branch
          %661 = sbr.rel (%p659) target = $region28
        $region27: #{tpu_custom_call.1} parent=23 // pred_region
          %p662 = scmp.lt.s32.totalorder %s31, 1
          %s663 = scalar_select %p662, %s31, 1
          %s664 = smul.addr %s663, 4
          %s665 = smul.addr %s664, 8
          %s666 = scalar_lea.vmem %s2, %s665
        $region28: #{tpu_custom_call.1} parent=23 // pred_fallthru
          _
        // Predicated region
        $region29: #{tpu_custom_call.1} parent=23 // pred_check
          %p667 = pneg %p119
        $region30: #{tpu_custom_call.1} parent=23 // pred_check_branch
          %669 = sbr.rel (%p667) target = $region32
        $region31: #{tpu_custom_call.1} parent=23 // pred_region
          %p670 = scmp.lt.s32.totalorder %s31, 1
          %s671 = scalar_select %p670, %s31, 1
          %s672 = scalar_lea.vmem %s3, %s671
        $region32: #{tpu_custom_call.1} parent=23 // pred_fallthru
          _
        // Predicated region
        $region33: #{tpu_custom_call.1} parent=23 // pred_check
          %p673 = pneg %p145
        $region34: #{tpu_custom_call.1} parent=23 // pred_check_branch
          %675 = sbr.rel (%p673) target = $region36
        $region35: #{tpu_custom_call.1} parent=23 // pred_region
          %p676 = scmp.lt.s32.totalorder %s31, 1
          %s677 = scalar_select %p676, %s31, 1
          %s678 = smul.addr %s677, 4
          %s679 = smul.addr %s678, 8
          %s680 = scalar_lea.vmem %s4, %s679
        $region36: #{tpu_custom_call.1} parent=23 // pred_fallthru
          _
        // Predicated region
        $region37: #{tpu_custom_call.1} parent=23 // pred_check
          %p681 = pneg %p171
        $region38: #{tpu_custom_call.1} parent=23 // pred_check_branch
          %683 = sbr.rel (%p681) target = $region40
        $region39: #{tpu_custom_call.1} parent=23 // pred_region
          %p684 = scmp.lt.s32.totalorder %s31, 1
          %s685 = scalar_select %p684, %s31, 1
          %s686 = scalar_lea.vmem %s5, %s685
        $region40: #{tpu_custom_call.1} parent=23 // pred_fallthru
          _
        // Predicated region
        $region41: #{tpu_custom_call.1} parent=23 // pred_check
          %p687 = pneg %p197
        $region42: #{tpu_custom_call.1} parent=23 // pred_check_branch
          %689 = sbr.rel (%p687) target = $region44
        $region43: #{tpu_custom_call.1} parent=23 // pred_region
          %p690 = scmp.lt.s32.totalorder %s31, 1
          %s691 = scalar_select %p690, %s31, 1
          %s692 = smul.addr %s691, 4
          %s693 = smul.addr %s692, 8
          %s694 = scalar_lea.vmem %s6, %s693
        $region44: #{tpu_custom_call.1} parent=23 // pred_fallthru
          _
        // Predicated region
        $region45: #{tpu_custom_call.1} parent=23 // pred_check
          %p695 = pneg %p223
        $region46: #{tpu_custom_call.1} parent=23 // pred_check_branch
          %697 = sbr.rel (%p695) target = $region48
        $region47: #{tpu_custom_call.1} parent=23 // pred_region
          %p698 = scmp.lt.s32.totalorder %s31, 1
          %s699 = scalar_select %p698, %s31, 1
          %s700 = scalar_lea.vmem %s7, %s699
        $region48: #{tpu_custom_call.1} parent=23 // pred_fallthru
          _
        // Predicated region
        $region49: #{tpu_custom_call.1} parent=23 // pred_check
          %p701 = pneg %p249
        $region50: #{tpu_custom_call.1} parent=23 // pred_check_branch
          %703 = sbr.rel (%p701) target = $region52
        $region51: #{tpu_custom_call.1} parent=23 // pred_region
          %s704 = sand.u32 %s31, 1
          %s705 = scalar_lea.sflag [#allocation4], %s704
          %s706 = sand.u32 %s239, 1
          %s707 = smul.addr %s706, 32
          %s708 = scalar_lea.vmem [#allocation8], %s707
          %s710 = ssub.s32 512, 512
          %711 = vsyncadd %s705, %s710
          %s712 = smul.addr %s31, 4
          %s713 = smul.addr %s712, 128
          %s714 = scalar_lea.hbm %s8, %s713
          %s715 = sshll.u32 %s708, 4
          %s716 = int_to_ptr.vmem [resolvable:$true] %s715
          %721 = dma.hbm_to_vmem [thread:$0]  %s714, 512, %s716, %s705, 128, 128, 8
        $region52: #{tpu_custom_call.1} parent=23 // pred_fallthru
          _
        // Predicated region
        $region53: #{tpu_custom_call.1} parent=23 // pred_check
          %p722 = pneg %p275
        $region54: #{tpu_custom_call.1} parent=23 // pred_check_branch
          %724 = sbr.rel (%p722) target = $region56
        $region55: #{tpu_custom_call.1} parent=23 // pred_region
          %p725 = scmp.lt.s32.totalorder %s31, 1
          %s726 = scalar_select %p725, %s31, 1
          %s727 = scalar_lea.vmem %s9, %s726
        $region56: #{tpu_custom_call.1} parent=23 // pred_fallthru
          _
        // Predicated region
        $region57: #{tpu_custom_call.1} parent=23 // pred_check
          %p728 = pneg %p301
        $region58: #{tpu_custom_call.1} parent=23 // pred_check_branch
          %730 = sbr.rel (%p728) target = $region60
        $region59: #{tpu_custom_call.1} parent=23 // pred_region
          %s731 = sand.u32 %s31, 1
          %s732 = scalar_lea.sflag [#allocation4], %s731
          %s733 = sand.u32 %s291, 1
          %s734 = smul.addr %s733, 32
          %s735 = scalar_lea.vmem [#allocation9], %s734
          %s737 = ssub.s32 512, 512
          %738 = vsyncadd %s732, %s737
          %s739 = smul.addr %s31, 4
          %s740 = smul.addr %s739, 128
          %s741 = scalar_lea.hbm %s10, %s740
          %s742 = sshll.u32 %s735, 4
          %s743 = int_to_ptr.vmem [resolvable:$true] %s742
          %748 = dma.hbm_to_vmem [thread:$0]  %s741, 512, %s743, %s732, 128, 128, 8
        $region60: #{tpu_custom_call.1} parent=23 // pred_fallthru
          _
        // Predicated region
        $region61: #{tpu_custom_call.1} parent=23 // pred_check
          %p749 = pneg %p327
        $region62: #{tpu_custom_call.1} parent=23 // pred_check_branch
          %751 = sbr.rel (%p749) target = $region64
        $region63: #{tpu_custom_call.1} parent=23 // pred_region
          %p752 = scmp.lt.s32.totalorder %s31, 1
          %s753 = scalar_select %p752, %s31, 1
          %s754 = scalar_lea.vmem %s11, %s753
        $region64: #{tpu_custom_call.1} parent=23 // pred_fallthru
          _
        // Predicated region
        $region65: #{tpu_custom_call.1} parent=23 // pred_check
          %p755 = pneg %p353
        $region66: #{tpu_custom_call.1} parent=23 // pred_check_branch
          %757 = sbr.rel (%p755) target = $region68
        $region67: #{tpu_custom_call.1} parent=23 // pred_region
          %s758 = sand.u32 %s31, 1
          %s759 = scalar_lea.sflag [#allocation4], %s758
          %s760 = sand.u32 %s343, 1
          %s761 = smul.addr %s760, 32
          %s762 = scalar_lea.vmem [#allocation10], %s761
          %s764 = ssub.s32 512, 512
          %765 = vsyncadd %s759, %s764
          %s766 = smul.addr %s31, 4
          %s767 = smul.addr %s766, 128
          %s768 = scalar_lea.hbm %s12, %s767
          %s769 = sshll.u32 %s762, 4
          %s770 = int_to_ptr.vmem [resolvable:$true] %s769
          %775 = dma.hbm_to_vmem [thread:$0]  %s768, 512, %s770, %s759, 128, 128, 8
        $region68: #{tpu_custom_call.1} parent=23 // pred_fallthru
          _
        // Predicated region
        $region69: #{tpu_custom_call.1} parent=23 // pred_check
          %p776 = pneg %p379
        $region70: #{tpu_custom_call.1} parent=23 // pred_check_branch
          %778 = sbr.rel (%p776) target = $region72
        $region71: #{tpu_custom_call.1} parent=23 // pred_region
          %p779 = scmp.lt.s32.totalorder %s31, 1
          %s780 = scalar_select %p779, %s31, 1
          %s781 = scalar_lea.vmem %s13, %s780
        $region72: #{tpu_custom_call.1} parent=23 // pred_fallthru
          _
        // Predicated region
        $region73: #{tpu_custom_call.1} parent=23 // pred_check
          %p782 = pneg %p405
        $region74: #{tpu_custom_call.1} parent=23 // pred_check_branch
          %784 = sbr.rel (%p782) target = $region76
        $region75: #{tpu_custom_call.1} parent=23 // pred_region
          %p785 = scmp.lt.s32.totalorder %s31, 1
          %s786 = scalar_select %p785, %s31, 1
          %s787 = smul.addr %s786, 8
          %s788 = smul.addr %s787, 8
          %s789 = scalar_lea.vmem %s14, %s788
        $region76: #{tpu_custom_call.1} parent=23 // pred_fallthru
          _
        // Predicated region
        $region77: #{tpu_custom_call.1} parent=23 // pred_check
          %p790 = pneg %p431
        $region78: #{tpu_custom_call.1} parent=23 // pred_check_branch
          %792 = sbr.rel (%p790) target = $region80
        $region79: #{tpu_custom_call.1} parent=23 // pred_region
          %p793 = scmp.lt.s32.totalorder %s31, 1
          %s794 = scalar_select %p793, %s31, 1
          %s795 = scalar_lea.vmem %s15, %s794
        $region80: #{tpu_custom_call.1} parent=23 // pred_fallthru
          _
        // Predicated region
        $region81: #{tpu_custom_call.1} parent=23 // pred_check
          %p796 = pneg %p457
        $region82: #{tpu_custom_call.1} parent=23 // pred_check_branch
          %798 = sbr.rel (%p796) target = $region84
        $region83: #{tpu_custom_call.1} parent=23 // pred_region
          %p799 = scmp.lt.s32.totalorder %s31, 1
          %s800 = scalar_select %p799, %s31, 1
          %s801 = scalar_lea.vmem %s16, %s800
        $region84: #{tpu_custom_call.1} parent=23 // pred_fallthru
          _
        // Predicated region
        $region85: #{tpu_custom_call.1} parent=23 // pred_check
          %p802 = pneg %p483
        $region86: #{tpu_custom_call.1} parent=23 // pred_check_branch
          %804 = sbr.rel (%p802) target = $region88
        $region87: #{tpu_custom_call.1} parent=23 // pred_region
          %p805 = scmp.lt.s32.totalorder %s31, 1
          %s806 = scalar_select %p805, %s31, 1
          %s807 = scalar_lea.vmem %s17, %s806
        $region88: #{tpu_custom_call.1} parent=23 // pred_fallthru
          _
        // Predicated region
        $region89: #{tpu_custom_call.1} parent=23 // pred_check
          %p808 = pneg %p509
        $region90: #{tpu_custom_call.1} parent=23 // pred_check_branch
          %810 = sbr.rel (%p808) target = $region92
        $region91: #{tpu_custom_call.1} parent=23 // pred_region
          %p811 = scmp.lt.s32.totalorder %s31, 1
          %s812 = scalar_select %p811, %s31, 1
          %s813 = scalar_lea.vmem %s18, %s812
        $region92: #{tpu_custom_call.1} parent=23 // pred_fallthru
          _
        // Predicated region
        $region93: #{tpu_custom_call.1} parent=23 // pred_check
          %p814 = pneg %p535
        $region94: #{tpu_custom_call.1} parent=23 // pred_check_branch
          %816 = sbr.rel (%p814) target = $region96
        $region95: #{tpu_custom_call.1} parent=23 // pred_region
          %p817 = scmp.lt.s32.totalorder %s31, 1
          %s818 = scalar_select %p817, %s31, 1
          %s819 = scalar_lea.vmem %s19, %s818
        $region96: #{tpu_custom_call.1} parent=23 // pred_fallthru
          _
        // Predicated region
        $region97: #{tpu_custom_call.1} parent=23 // pred_check
          %p820 = pneg %p561
        $region98: #{tpu_custom_call.1} parent=23 // pred_check_branch
          %822 = sbr.rel (%p820) target = $region100
        $region99: #{tpu_custom_call.1} parent=23 // pred_region
          %p823 = scmp.lt.s32.totalorder %s31, 1
          %s824 = scalar_select %p823, %s31, 1
          %s825 = scalar_lea.vmem %s20, %s824
        $region100: #{tpu_custom_call.1} parent=23 // pred_fallthru
          _
        // Predicated region
        $region101: #{tpu_custom_call.1} parent=23 // pred_check
          %p826 = pneg %p587
        $region102: #{tpu_custom_call.1} parent=23 // pred_check_branch
          %828 = sbr.rel (%p826) target = $region104
        $region103: #{tpu_custom_call.1} parent=23 // pred_region
          %p829 = scmp.lt.s32.totalorder %s31, 1
          %s830 = scalar_select %p829, %s31, 1
          %s831 = scalar_lea.vmem %s21, %s830
        $region104: #{tpu_custom_call.1} parent=23 // pred_fallthru
          _
      $region24: #{tpu_custom_call.1} parent=5 // pred_fallthru
        _
      %p832 = scmp.le.s32.totalorder 1, %s31
      %p833 = scmp.lt.s32.totalorder %s31, 3
      %p834 = pnand %p832, %p833
      %p835 = pneg %p834
      // Predicated region
      $region105: #{tpu_custom_call.1} parent=5 // pred_check
        _
      $region106: #{tpu_custom_call.1} parent=5 // pred_check_branch
        %837 = sbr.rel (%p834) target = $region108
      $region107: #{tpu_custom_call.1} parent=5 // pred_region
        %s838 = ssub.s32 %s31, 1
        // Predicated region
        $region109: #{tpu_custom_call.1} parent=107 // pred_check
          %p839 = pneg %p52
        $region110: #{tpu_custom_call.1} parent=107 // pred_check_branch
          %841 = sbr.rel (%p839) target = $region112
        $region111: #{tpu_custom_call.1} parent=107 // pred_region
          %842 = dma.done [#allocation4], 256
        $region112: #{tpu_custom_call.1} parent=107 // pred_fallthru
          _
        // Predicated region
        $region113: #{tpu_custom_call.1} parent=107 // pred_check
          %p843 = pneg %p73
        $region114: #{tpu_custom_call.1} parent=107 // pred_check_branch
          %845 = sbr.rel (%p843) target = $region116
        $region115: #{tpu_custom_call.1} parent=107 // pred_region
          %846 = dma.done [#allocation7], 512
        $region116: #{tpu_custom_call.1} parent=107 // pred_fallthru
          _
        %s847 = sand.u32 %s36, 1
        %s848 = scalar_lea.sflag [#allocation4], %s847
        %s849 = sand.u32 %s242, 1
        %s850 = smul.addr %s849, 32
        %s851 = scalar_lea.vmem [#allocation8], %s850
        // Predicated region
        $region117: #{tpu_custom_call.1} parent=107 // pred_check
          %p852 = pneg %p255
        $region118: #{tpu_custom_call.1} parent=107 // pred_check_branch
          %854 = sbr.rel (%p852) target = $region120
        $region119: #{tpu_custom_call.1} parent=107 // pred_region
          %855 = dma.done %s848, 512
        $region120: #{tpu_custom_call.1} parent=107 // pred_fallthru
          _
        %s856 = sand.u32 %s36, 1
        %s857 = scalar_lea.sflag [#allocation4], %s856
        %s858 = sand.u32 %s294, 1
        %s859 = smul.addr %s858, 32
        %s860 = scalar_lea.vmem [#allocation9], %s859
        // Predicated region
        $region121: #{tpu_custom_call.1} parent=107 // pred_check
          %p861 = pneg %p307
        $region122: #{tpu_custom_call.1} parent=107 // pred_check_branch
          %863 = sbr.rel (%p861) target = $region124
        $region123: #{tpu_custom_call.1} parent=107 // pred_region
          %864 = dma.done %s857, 512
        $region124: #{tpu_custom_call.1} parent=107 // pred_fallthru
          _
        %s865 = sand.u32 %s36, 1
        %s866 = scalar_lea.sflag [#allocation4], %s865
        %s867 = sand.u32 %s346, 1
        %s868 = smul.addr %s867, 32
        %s869 = scalar_lea.vmem [#allocation10], %s868
        // Predicated region
        $region125: #{tpu_custom_call.1} parent=107 // pred_check
          %p870 = pneg %p359
        $region126: #{tpu_custom_call.1} parent=107 // pred_check_branch
          %872 = sbr.rel (%p870) target = $region128
        $region127: #{tpu_custom_call.1} parent=107 // pred_region
          %873 = dma.done %s866, 512
        $region128: #{tpu_custom_call.1} parent=107 // pred_fallthru
          _
        %p874 = pneg %p52
        %p875 = pneg %p49
        %p876 = pneg %p73
        %p877 = pneg %p70
        %p878 = scmp.lt.s32.totalorder %s36, 1
        %s879 = scalar_select %p878, %s36, 1
        %s880 = smul.addr %s879, 4
        %s881 = smul.addr %s880, 8
        %s882 = scalar_lea.vmem %s2, %s881
        %p883 = pneg %p99
        %p884 = pneg %p96
        %p885 = scmp.lt.s32.totalorder %s36, 1
        %s886 = scalar_select %p885, %s36, 1
        %s887 = scalar_lea.vmem %s3, %s886
        %p888 = pneg %p125
        %p889 = pneg %p122
        %p890 = scmp.lt.s32.totalorder %s36, 1
        %s891 = scalar_select %p890, %s36, 1
        %s892 = smul.addr %s891, 4
        %s893 = smul.addr %s892, 8
        %s894 = scalar_lea.vmem %s4, %s893
        %p895 = pneg %p151
        %p896 = pneg %p148
        %p897 = scmp.lt.s32.totalorder %s36, 1
        %s898 = scalar_select %p897, %s36, 1
        %s899 = scalar_lea.vmem %s5, %s898
        %p900 = pneg %p177
        %p901 = pneg %p174
        %p902 = scmp.lt.s32.totalorder %s36, 1
        %s903 = scalar_select %p902, %s36, 1
        %s904 = smul.addr %s903, 4
        %s905 = smul.addr %s904, 8
        %s906 = scalar_lea.vmem %s6, %s905
        %p907 = pneg %p203
        %p908 = pneg %p200
        %p909 = scmp.lt.s32.totalorder %s36, 1
        %s910 = scalar_select %p909, %s36, 1
        %s911 = scalar_lea.vmem %s7, %s910
        %p912 = pneg %p229
        %p913 = pneg %p226
        %s914 = sand.u32 %s36, 1
        %s915 = scalar_lea.sflag [#allocation4], %s914
        %s916 = sand.u32 %s242, 1
        %s917 = smul.addr %s916, 32
        %s918 = scalar_lea.vmem [#allocation8], %s917
        %p919 = pneg %p255
        %p920 = pneg %p252
        %p921 = scmp.lt.s32.totalorder %s36, 1
        %s922 = scalar_select %p921, %s36, 1
        %s923 = scalar_lea.vmem %s9, %s922
        %p924 = pneg %p281
        %p925 = pneg %p278
        %s926 = sand.u32 %s36, 1
        %s927 = scalar_lea.sflag [#allocation4], %s926
        %s928 = sand.u32 %s294, 1
        %s929 = smul.addr %s928, 32
        %s930 = scalar_lea.vmem [#allocation9], %s929
        %p931 = pneg %p307
        %p932 = pneg %p304
        %p933 = scmp.lt.s32.totalorder %s36, 1
        %s934 = scalar_select %p933, %s36, 1
        %s935 = scalar_lea.vmem %s11, %s934
        %p936 = pneg %p333
        %p937 = pneg %p330
        %s938 = sand.u32 %s36, 1
        %s939 = scalar_lea.sflag [#allocation4], %s938
        %s940 = sand.u32 %s346, 1
        %s941 = smul.addr %s940, 32
        %s942 = scalar_lea.vmem [#allocation10], %s941
        %p943 = pneg %p359
        %p944 = pneg %p356
        %p945 = scmp.lt.s32.totalorder %s36, 1
        %s946 = scalar_select %p945, %s36, 1
        %s947 = scalar_lea.vmem %s13, %s946
        %p948 = pneg %p385
        %p949 = pneg %p382
        %p950 = scmp.lt.s32.totalorder %s36, 1
        %s951 = scalar_select %p950, %s36, 1
        %s952 = smul.addr %s951, 8
        %s953 = smul.addr %s952, 8
        %s954 = scalar_lea.vmem %s14, %s953
        %p955 = pneg %p411
        %p956 = pneg %p408
        %p957 = scmp.lt.s32.totalorder %s36, 1
        %s958 = scalar_select %p957, %s36, 1
        %s959 = scalar_lea.vmem %s15, %s958
        %p960 = pneg %p437
        %p961 = pneg %p434
        %p962 = scmp.lt.s32.totalorder %s36, 1
        %s963 = scalar_select %p962, %s36, 1
        %s964 = scalar_lea.vmem %s16, %s963
        %p965 = pneg %p463
        %p966 = pneg %p460
        %p967 = scmp.lt.s32.totalorder %s36, 1
        %s968 = scalar_select %p967, %s36, 1
        %s969 = scalar_lea.vmem %s17, %s968
        %p970 = pneg %p489
        %p971 = pneg %p486
        %p972 = scmp.lt.s32.totalorder %s36, 1
        %s973 = scalar_select %p972, %s36, 1
        %s974 = scalar_lea.vmem %s18, %s973
        %p975 = pneg %p515
        %p976 = pneg %p512
        %p977 = scmp.lt.s32.totalorder %s36, 1
        %s978 = scalar_select %p977, %s36, 1
        %s979 = scalar_lea.vmem %s19, %s978
        %p980 = pneg %p541
        %p981 = pneg %p538
        %p982 = scmp.lt.s32.totalorder %s36, 1
        %s983 = scalar_select %p982, %s36, 1
        %s984 = scalar_lea.vmem %s20, %s983
        %p985 = pneg %p567
        %p986 = pneg %p564
        %p987 = scmp.lt.s32.totalorder %s36, 1
        %s988 = scalar_select %p987, %s36, 1
        %s989 = scalar_lea.vmem %s21, %s988
        %p990 = pneg %p593
        %p991 = pneg %p590
        %p992 = pneg %p614
        %p993 = pneg %p611
        %p994 = scmp.lt.s32.totalorder %s36, 1
        %s995 = scalar_select %p994, %s36, 1
        %s996 = smul.addr %s995, 4
        %s997 = smul.addr %s996, 8
        %s998 = scalar_lea.vmem %s2, %s997
        %p999 = scmp.lt.s32.totalorder %s36, 1
        %s1000 = scalar_select %p999, %s36, 1
        %s1001 = scalar_lea.vmem %s3, %s1000
        %p1002 = scmp.lt.s32.totalorder %s36, 1
        %s1003 = scalar_select %p1002, %s36, 1
        %s1004 = smul.addr %s1003, 4
        %s1005 = smul.addr %s1004, 8
        %s1006 = scalar_lea.vmem %s4, %s1005
        %p1007 = scmp.lt.s32.totalorder %s36, 1
        %s1008 = scalar_select %p1007, %s36, 1
        %s1009 = scalar_lea.vmem %s5, %s1008
        %p1010 = scmp.lt.s32.totalorder %s36, 1
        %s1011 = scalar_select %p1010, %s36, 1
        %s1012 = smul.addr %s1011, 4
        %s1013 = smul.addr %s1012, 8
        %s1014 = scalar_lea.vmem %s6, %s1013
        %p1015 = scmp.lt.s32.totalorder %s36, 1
        %s1016 = scalar_select %p1015, %s36, 1
        %s1017 = scalar_lea.vmem %s7, %s1016
        %p1018 = scmp.lt.s32.totalorder %s36, 1
        %s1019 = scalar_select %p1018, %s36, 1
        %s1020 = scalar_lea.vmem %s9, %s1019
        %p1021 = scmp.lt.s32.totalorder %s36, 1
        %s1022 = scalar_select %p1021, %s36, 1
        %s1023 = scalar_lea.vmem %s11, %s1022
        %p1024 = scmp.lt.s32.totalorder %s36, 1
        %s1025 = scalar_select %p1024, %s36, 1
        %s1026 = scalar_lea.vmem %s13, %s1025
        %p1027 = scmp.lt.s32.totalorder %s36, 1
        %s1028 = scalar_select %p1027, %s36, 1
        %s1029 = smul.addr %s1028, 8
        %s1030 = smul.addr %s1029, 8
        %s1031 = scalar_lea.vmem %s14, %s1030
        %p1032 = scmp.lt.s32.totalorder %s36, 1
        %s1033 = scalar_select %p1032, %s36, 1
        %s1034 = scalar_lea.vmem %s15, %s1033
        %p1035 = scmp.lt.s32.totalorder %s36, 1
        %s1036 = scalar_select %p1035, %s36, 1
        %s1037 = scalar_lea.vmem %s16, %s1036
        %p1038 = scmp.lt.s32.totalorder %s36, 1
        %s1039 = scalar_select %p1038, %s36, 1
        %s1040 = scalar_lea.vmem %s17, %s1039
        %p1041 = scmp.lt.s32.totalorder %s36, 1
        %s1042 = scalar_select %p1041, %s36, 1
        %s1043 = scalar_lea.vmem %s18, %s1042
        %p1044 = scmp.lt.s32.totalorder %s36, 1
        %s1045 = scalar_select %p1044, %s36, 1
        %s1046 = scalar_lea.vmem %s19, %s1045
        %p1047 = scmp.lt.s32.totalorder %s36, 1
        %s1048 = scalar_select %p1047, %s36, 1
        %s1049 = scalar_lea.vmem %s20, %s1048
        %p1050 = scmp.lt.s32.totalorder %s36, 1
        %s1051 = scalar_select %p1050, %s36, 1
        %s1052 = scalar_lea.vmem %s21, %s1051
        %p1053 = scmp.eq.s32.totalorder %s36, 0
        // Predicated region
        $region129: #{tpu_custom_call.1} parent=107 // pred_check
          %p1054 = pneg %p1053
        $region130: #{tpu_custom_call.1} parent=107 // pred_check_branch
          %1056 = sbr.rel (%p1054) target = $region132
        $region131: #{tpu_custom_call.1} parent=107 // pred_region
          %v1057 = vld [vmem:[#allocation3] sm:$0xff]
          %v1058 = vld [vmem:[#allocation3 + $0x8] sm:$0xff]
          %vm1059 = vcmask 261120
          %1060 = vst.msk [vmem:[#allocation2] sm:$0xff] %vm1059, %v1057
          %1061 = vst.msk [vmem:[#allocation2 + $0x8] sm:$0xff] %vm1059, %v1058
        $region132: #{tpu_custom_call.1} parent=107 // pred_fallthru
          _
        %v1062 = vld [vmem:[#allocation2] sm:$0xff]
        %v1063 = vld [vmem:[#allocation2 + $0x8] sm:$0xff]
        %v1064 = vld [vmem:[#allocation6] sm:$0xff]
        %v1065 = vld [vmem:[#allocation6 + $0x8] sm:$0xff]
        %v1066 = vld [vmem:[#allocation6 + $0x10] sm:$0xff]
        %v1067 = vld [vmem:[#allocation6 + $0x18] sm:$0xff]
        %v1068 = vld [vmem:[%s998] sm:$0xff]
        %v1069 = vld [vmem:[%s998 + $0x8] sm:$0xff]
        %v1070 = vld [vmem:[%s998 + $0x10] sm:$0xff]
        %v1071 = vld [vmem:[%s998 + $0x18] sm:$0xff]
        %v1072 = vld [vmem:[%s1001] sm:$0x1]
        %v1074 = vlaneseq
        %v1075 = vshrl.u32 %v1074, 7
        %v1076 = vsub.s32 0, %v1075
        %v1077 = vrot.slane %v1072, %v1076
        %vm1079 = vcmask 261120
        %v1081 = vsel %vm1079, %v1062, 0
        %v1084 = vsel %vm1079, %v1063, 0
        %1086 = vmatprep.subr.mxu0 0.0
        %1087 = vmatpush1.msra.mxu0 %v1068
        %1088 = vmatprep.subr.mxu0 0.0
        %1089 = vmatpush1.msra.mxu0 %v1069
        %1090 = vmatprep.subr.mxu0 0.0
        %1091 = vmatpush1.msra.mxu0 %v1070
        %1092 = vmatprep.subr.mxu0 0.0
        %1093 = vmatpush1.msra.mxu0 %v1071
        %1094 = vmatprep.subr.mxu0 0.0
        %1095 = vmatpush1.msra.mxu0 0.0
        %1096 = vmatprep.subr.mxu0 0.0
        %1097 = vmatpush1.msra.mxu0 0.0
        %1098 = vmatprep.subr.mxu0 0.0
        %1099 = vmatpush1.msra.mxu0 0.0
        %1100 = vmatprep.subr.mxu0 0.0
        %1101 = vmatpush1.msra.mxu0 0.0
        %1102 = vmatprep.subr.mxu0 0.0
        %1103 = vmatpush1.msra.mxu0 0.0
        %1104 = vmatprep.subr.mxu0 0.0
        %1105 = vmatpush1.msra.mxu0 0.0
        %1106 = vmatprep.subr.mxu0 0.0
        %1107 = vmatpush1.msra.mxu0 0.0
        %1108 = vmatprep.subr.mxu0 0.0
        %1109 = vmatpush1.msra.mxu0 0.0
        %1110 = vmatprep.subr.mxu0 0.0
        %1111 = vmatpush1.msra.mxu0 0.0
        %1112 = vmatprep.subr.mxu0 0.0
        %1113 = vmatpush1.msra.mxu0 0.0
        %1114 = vmatprep.subr.mxu0 0.0
        %1115 = vmatpush1.msra.mxu0 0.0
        %1116 = vmatprep.subr.mxu0 0.0
        %1117 = vmatpush1.msra.mxu0 0.0
        %1118 = vmatprep.subr.mxu0 0.0
        %1119 = vmatpush1.msra.mxu0 0.0
        %1120 = vmatprep.subr.mxu0 0.0
        %1121 = vmatpush1.msra.mxu0 0.0
        %1122 = vmatprep.subr.mxu0 0.0
        %1123 = vmatpush1.msra.mxu0 0.0
        %1124 = vmatprep.subr.mxu0 0.0
        %1125 = vmatpush1.msra.mxu0 0.0
        %1126 = vmatprep.subr.mxu0 0.0
        %1127 = vmatpush1.msra.mxu0 0.0
        %1128 = vmatprep.subr.mxu0 0.0
        %1129 = vmatpush1.msra.mxu0 0.0
        %1130 = vmatprep.subr.mxu0 0.0
        %1131 = vmatpush1.msra.mxu0 0.0
        %1132 = vmatprep.subr.mxu0 0.0
        %1133 = vmatpush1.msra.mxu0 0.0
        %1134 = vmatprep.subr.mxu0 0.0
        %1135 = vmatpush1.msra.mxu0 0.0
        %1136 = vmatprep.subr.mxu0 0.0
        %1137 = vmatpush1.msra.mxu0 0.0
        %1138 = vmatprep.subr.mxu0 0.0
        %1139 = vmatpush1.msra.mxu0 0.0
        %1140 = vmatprep.subr.mxu0 0.0
        %1141 = vmatpush1.msra.mxu0 0.0
        %1142 = vmatprep.subr.mxu0 0.0
        %1143 = vmatpush1.msra.mxu0 0.0
        %1144 = vmatprep.subr.mxu0 0.0
        %1145 = vmatpush1.msra.mxu0 0.0
        %1146 = vmatprep.subr.mxu0 0.0
        %1147 = vmatpush1.msra.mxu0 0.0
        %1148 = vmatprep.subr.mxu0 0.0
        %1149 = vmatpush1.msra.mxu0 0.0
        %1150 = vmatprep.mubr.f32.mxu0 0.0
        %1151 = vmatmul.mubr.f32.gmra.mrb[0].mxu0 %v1081
        %v1152 = vpop.f32.mrb[0].mxu0
        %v1153 = vadd.f32 %v1077, %v1152
        %v1154 = vpop.f32.mrb[0].mxu0
        %1155 = vmatprep.mubr.f32.mxu0 0.0
        %1156 = vmatmul.mubr.f32.gmra.mrb[0].mxu0 %v1084
        %v1157 = vpop.f32.mrb[0].mxu0
        %v1158 = vadd.f32 %v1077, %v1157
        %v1159 = vpop.f32.mrb[0].mxu0
        %1160 = vdwg.mxu0
        %v1161 = vld [vmem:[%s1006] sm:$0xff]
        %v1162 = vld [vmem:[%s1006 + $0x8] sm:$0xff]
        %v1163 = vld [vmem:[%s1006 + $0x10] sm:$0xff]
        %v1164 = vld [vmem:[%s1006 + $0x18] sm:$0xff]
        %v1165 = vld [vmem:[%s1009] sm:$0x1]
        %1167 = vrot.lane.b32.xlu0 %v1153, 96
        %v1168 = vpop.permute.xlu0 %1167
        %vm1169 = vcmask 64512
        %v1170 = vsel %vm1169, %v1153, 0
        %v1172 = vsel %vm1169, %v1168, 0
        %1174 = vmatprep.subr.mxu0 0.0
        %1175 = vmatpush1.xpose.msra.mxu0 %v1172
        %1176 = vmatprep.subr.mxu0 0.0
        %1177 = vmatpush1.xpose.msra.mxu0 0.0
        %1178 = vmatprep.subr.mxu0 0.0
        %1179 = vmatpush1.xpose.msra.mxu0 0.0
        %1180 = vmatprep.subr.mxu0 0.0
        %1181 = vmatpush1.xpose.msra.mxu0 0.0
        %1182 = vmatprep.subr.mxu0 0.0
        %1183 = vmatpush1.xpose.msra.mxu0 0.0
        %1184 = vmatprep.subr.mxu0 0.0
        %1185 = vmatpush1.xpose.msra.mxu0 0.0
        %1186 = vmatprep.subr.mxu0 0.0
        %1187 = vmatpush1.xpose.msra.mxu0 0.0
        %1188 = vmatprep.subr.mxu0 0.0
        %1189 = vmatpush1.xpose.msra.mxu0 0.0
        %1190 = vmatprep.subr.mxu0 0.0
        %1191 = vmatpush1.xpose.msra.mxu0 0.0
        %1192 = vmatprep.subr.mxu0 0.0
        %1193 = vmatpush1.xpose.msra.mxu0 0.0
        %1194 = vmatprep.subr.mxu0 0.0
        %1195 = vmatpush1.xpose.msra.mxu0 0.0
        %1196 = vmatprep.subr.mxu0 0.0
        %1197 = vmatpush1.xpose.msra.mxu0 0.0
        %1198 = vmatprep.subr.mxu0 0.0
        %1199 = vmatpush1.xpose.msra.mxu0 0.0
        %1200 = vmatprep.subr.mxu0 0.0
        %1201 = vmatpush1.xpose.msra.mxu0 0.0
        %1202 = vmatprep.subr.mxu0 0.0
        %1203 = vmatpush1.xpose.msra.mxu0 0.0
        %1204 = vmatprep.subr.mxu0 0.0
        %1205 = vmatpush1.xpose.msra.mxu0 0.0
        %1206 = vmatprep.subr.mxu0 0.0
        %1207 = vmatpush1.xpose.msra.mxu0 0.0
        %1208 = vmatprep.subr.mxu0 0.0
        %1209 = vmatpush1.xpose.msra.mxu0 0.0
        %1210 = vmatprep.subr.mxu0 0.0
        %1211 = vmatpush1.xpose.msra.mxu0 0.0
        %1212 = vmatprep.subr.mxu0 0.0
        %1213 = vmatpush1.xpose.msra.mxu0 0.0
        %1214 = vmatprep.subr.mxu0 0.0
        %1215 = vmatpush1.xpose.msra.mxu0 0.0
        %1216 = vmatprep.subr.mxu0 0.0
        %1217 = vmatpush1.xpose.msra.mxu0 0.0
        %1218 = vmatprep.subr.mxu0 0.0
        %1219 = vmatpush1.xpose.msra.mxu0 0.0
        %1220 = vmatprep.subr.mxu0 0.0
        %1221 = vmatpush1.xpose.msra.mxu0 0.0
        %1222 = vmatprep.subr.mxu0 0.0
        %1223 = vmatpush1.xpose.msra.mxu0 0.0
        %1224 = vmatprep.subr.mxu0 0.0
        %1225 = vmatpush1.xpose.msra.mxu0 0.0
        %1226 = vmatprep.subr.mxu0 0.0
        %1227 = vmatpush1.xpose.msra.mxu0 0.0
        %1228 = vmatprep.subr.mxu0 0.0
        %1229 = vmatpush1.xpose.msra.mxu0 0.0
        %1230 = vmatprep.subr.mxu0 0.0
        %1231 = vmatpush1.xpose.msra.mxu0 0.0
        %1232 = vmatprep.subr.mxu0 0.0
        %1233 = vmatpush1.xpose.msra.mxu0 0.0
        %1234 = vmatprep.subr.mxu0 0.0
        %1235 = vmatpush1.xpose.msra.mxu0 0.0
        %1236 = vmatprep.subr.mxu0 0.0
        %1237 = vmatpush1.xpose.msra.mxu0 0.0
        %1238 = vmatprep.mubr.f32.mxu0 0.0
        %1239 = vmatmul.mubr.f32.gmra.mrb[0].mxu0 %v1170
        %v1240 = vpop.f32.mrb[0].mxu0
        %v1241 = vadd.f32 0.0, %v1240
        %v1242 = vpop.f32.mrb[0].mxu0
        %1243 = vdwg.mxu0
        %1244 = vrot.lane.b32.xlu0 %v1153, 120
        %v1245 = vpop.permute.xlu0 %1244
        %1246 = vrot.lane.b32.xlu0 %v1153, 88
        %v1247 = vpop.permute.xlu0 %1246
        %v1248 = vsel %vm1169, %v1245, 0
        %v1250 = vsel %vm1169, %v1247, 0
        %1252 = vmatprep.subr.mxu0 0.0
        %1253 = vmatpush1.xpose.msra.mxu0 %v1250
        %1254 = vmatprep.subr.mxu0 0.0
        %1255 = vmatpush1.xpose.msra.mxu0 0.0
        %1256 = vmatprep.subr.mxu0 0.0
        %1257 = vmatpush1.xpose.msra.mxu0 0.0
        %1258 = vmatprep.subr.mxu0 0.0
        %1259 = vmatpush1.xpose.msra.mxu0 0.0
        %1260 = vmatprep.subr.mxu0 0.0
        %1261 = vmatpush1.xpose.msra.mxu0 0.0
        %1262 = vmatprep.subr.mxu0 0.0
        %1263 = vmatpush1.xpose.msra.mxu0 0.0
        %1264 = vmatprep.subr.mxu0 0.0
        %1265 = vmatpush1.xpose.msra.mxu0 0.0
        %1266 = vmatprep.subr.mxu0 0.0
        %1267 = vmatpush1.xpose.msra.mxu0 0.0
        %1268 = vmatprep.subr.mxu0 0.0
        %1269 = vmatpush1.xpose.msra.mxu0 0.0
        %1270 = vmatprep.subr.mxu0 0.0
        %1271 = vmatpush1.xpose.msra.mxu0 0.0
        %1272 = vmatprep.subr.mxu0 0.0
        %1273 = vmatpush1.xpose.msra.mxu0 0.0
        %1274 = vmatprep.subr.mxu0 0.0
        %1275 = vmatpush1.xpose.msra.mxu0 0.0
        %1276 = vmatprep.subr.mxu0 0.0
        %1277 = vmatpush1.xpose.msra.mxu0 0.0
        %1278 = vmatprep.subr.mxu0 0.0
        %1279 = vmatpush1.xpose.msra.mxu0 0.0
        %1280 = vmatprep.subr.mxu0 0.0
        %1281 = vmatpush1.xpose.msra.mxu0 0.0
        %1282 = vmatprep.subr.mxu0 0.0
        %1283 = vmatpush1.xpose.msra.mxu0 0.0
        %1284 = vmatprep.subr.mxu0 0.0
        %1285 = vmatpush1.xpose.msra.mxu0 0.0
        %1286 = vmatprep.subr.mxu0 0.0
        %1287 = vmatpush1.xpose.msra.mxu0 0.0
        %1288 = vmatprep.subr.mxu0 0.0
        %1289 = vmatpush1.xpose.msra.mxu0 0.0
        %1290 = vmatprep.subr.mxu0 0.0
        %1291 = vmatpush1.xpose.msra.mxu0 0.0
        %1292 = vmatprep.subr.mxu0 0.0
        %1293 = vmatpush1.xpose.msra.mxu0 0.0
        %1294 = vmatprep.subr.mxu0 0.0
        %1295 = vmatpush1.xpose.msra.mxu0 0.0
        %1296 = vmatprep.subr.mxu0 0.0
        %1297 = vmatpush1.xpose.msra.mxu0 0.0
        %1298 = vmatprep.subr.mxu0 0.0
        %1299 = vmatpush1.xpose.msra.mxu0 0.0
        %1300 = vmatprep.subr.mxu0 0.0
        %1301 = vmatpush1.xpose.msra.mxu0 0.0
        %1302 = vmatprep.subr.mxu0 0.0
        %1303 = vmatpush1.xpose.msra.mxu0 0.0
        %1304 = vmatprep.subr.mxu0 0.0
        %1305 = vmatpush1.xpose.msra.mxu0 0.0
        %1306 = vmatprep.subr.mxu0 0.0
        %1307 = vmatpush1.xpose.msra.mxu0 0.0
        %1308 = vmatprep.subr.mxu0 0.0
        %1309 = vmatpush1.xpose.msra.mxu0 0.0
        %1310 = vmatprep.subr.mxu0 0.0
        %1311 = vmatpush1.xpose.msra.mxu0 0.0
        %1312 = vmatprep.subr.mxu0 0.0
        %1313 = vmatpush1.xpose.msra.mxu0 0.0
        %1314 = vmatprep.subr.mxu0 0.0
        %1315 = vmatpush1.xpose.msra.mxu0 0.0
        %1316 = vmatprep.mubr.f32.mxu0 0.0
        %1317 = vmatmul.mubr.f32.gmra.mrb[0].mxu0 %v1248
        %v1318 = vpop.f32.mrb[0].mxu0
        %v1319 = vadd.f32 0.0, %v1318
        %v1320 = vpop.f32.mrb[0].mxu0
        %1321 = vdwg.mxu0
        %1322 = vrot.lane.b32.xlu0 %v1153, 112
        %v1323 = vpop.permute.xlu0 %1322
        %1324 = vrot.lane.b32.xlu0 %v1153, 80
        %v1325 = vpop.permute.xlu0 %1324
        %v1326 = vsel %vm1169, %v1323, 0
        %v1328 = vsel %vm1169, %v1325, 0
        %1330 = vmatprep.subr.mxu0 0.0
        %1331 = vmatpush1.xpose.msra.mxu0 %v1328
        %1332 = vmatprep.subr.mxu0 0.0
        %1333 = vmatpush1.xpose.msra.mxu0 0.0
        %1334 = vmatprep.subr.mxu0 0.0
        %1335 = vmatpush1.xpose.msra.mxu0 0.0
        %1336 = vmatprep.subr.mxu0 0.0
        %1337 = vmatpush1.xpose.msra.mxu0 0.0
        %1338 = vmatprep.subr.mxu0 0.0
        %1339 = vmatpush1.xpose.msra.mxu0 0.0
        %1340 = vmatprep.subr.mxu0 0.0
        %1341 = vmatpush1.xpose.msra.mxu0 0.0
        %1342 = vmatprep.subr.mxu0 0.0
        %1343 = vmatpush1.xpose.msra.mxu0 0.0
        %1344 = vmatprep.subr.mxu0 0.0
        %1345 = vmatpush1.xpose.msra.mxu0 0.0
        %1346 = vmatprep.subr.mxu0 0.0
        %1347 = vmatpush1.xpose.msra.mxu0 0.0
        %1348 = vmatprep.subr.mxu0 0.0
        %1349 = vmatpush1.xpose.msra.mxu0 0.0
        %1350 = vmatprep.subr.mxu0 0.0
        %1351 = vmatpush1.xpose.msra.mxu0 0.0
        %1352 = vmatprep.subr.mxu0 0.0
        %1353 = vmatpush1.xpose.msra.mxu0 0.0
        %1354 = vmatprep.subr.mxu0 0.0
        %1355 = vmatpush1.xpose.msra.mxu0 0.0
        %1356 = vmatprep.subr.mxu0 0.0
        %1357 = vmatpush1.xpose.msra.mxu0 0.0
        %1358 = vmatprep.subr.mxu0 0.0
        %1359 = vmatpush1.xpose.msra.mxu0 0.0
        %1360 = vmatprep.subr.mxu0 0.0
        %1361 = vmatpush1.xpose.msra.mxu0 0.0
        %1362 = vmatprep.subr.mxu0 0.0
        %1363 = vmatpush1.xpose.msra.mxu0 0.0
        %1364 = vmatprep.subr.mxu0 0.0
        %1365 = vmatpush1.xpose.msra.mxu0 0.0
        %1366 = vmatprep.subr.mxu0 0.0
        %1367 = vmatpush1.xpose.msra.mxu0 0.0
        %1368 = vmatprep.subr.mxu0 0.0
        %1369 = vmatpush1.xpose.msra.mxu0 0.0
        %1370 = vmatprep.subr.mxu0 0.0
        %1371 = vmatpush1.xpose.msra.mxu0 0.0
        %1372 = vmatprep.subr.mxu0 0.0
        %1373 = vmatpush1.xpose.msra.mxu0 0.0
        %1374 = vmatprep.subr.mxu0 0.0
        %1375 = vmatpush1.xpose.msra.mxu0 0.0
        %1376 = vmatprep.subr.mxu0 0.0
        %1377 = vmatpush1.xpose.msra.mxu0 0.0
        %1378 = vmatprep.subr.mxu0 0.0
        %1379 = vmatpush1.xpose.msra.mxu0 0.0
        %1380 = vmatprep.subr.mxu0 0.0
        %1381 = vmatpush1.xpose.msra.mxu0 0.0
        %1382 = vmatprep.subr.mxu0 0.0
        %1383 = vmatpush1.xpose.msra.mxu0 0.0
        %1384 = vmatprep.subr.mxu0 0.0
        %1385 = vmatpush1.xpose.msra.mxu0 0.0
        %1386 = vmatprep.subr.mxu0 0.0
        %1387 = vmatpush1.xpose.msra.mxu0 0.0
        %1388 = vmatprep.subr.mxu0 0.0
        %1389 = vmatpush1.xpose.msra.mxu0 0.0
        %1390 = vmatprep.subr.mxu0 0.0
        %1391 = vmatpush1.xpose.msra.mxu0 0.0
        %1392 = vmatprep.subr.mxu0 0.0
        %1393 = vmatpush1.xpose.msra.mxu0 0.0
        %1394 = vmatprep.mubr.f32.mxu0 0.0
        %1395 = vmatmul.mubr.f32.gmra.mrb[0].mxu0 %v1326
        %v1396 = vpop.f32.mrb[0].mxu0
        %v1397 = vadd.f32 0.0, %v1396
        %v1398 = vpop.f32.mrb[0].mxu0
        %1399 = vdwg.mxu0
        %1400 = vrot.lane.b32.xlu0 %v1153, 104
        %v1401 = vpop.permute.xlu0 %1400
        %1402 = vrot.lane.b32.xlu0 %v1153, 72
        %v1403 = vpop.permute.xlu0 %1402
        %v1404 = vsel %vm1169, %v1401, 0
        %v1406 = vsel %vm1169, %v1403, 0
        %1408 = vmatprep.subr.mxu0 0.0
        %1409 = vmatpush1.xpose.msra.mxu0 %v1406
        %1410 = vmatprep.subr.mxu0 0.0
        %1411 = vmatpush1.xpose.msra.mxu0 0.0
        %1412 = vmatprep.subr.mxu0 0.0
        %1413 = vmatpush1.xpose.msra.mxu0 0.0
        %1414 = vmatprep.subr.mxu0 0.0
        %1415 = vmatpush1.xpose.msra.mxu0 0.0
        %1416 = vmatprep.subr.mxu0 0.0
        %1417 = vmatpush1.xpose.msra.mxu0 0.0
        %1418 = vmatprep.subr.mxu0 0.0
        %1419 = vmatpush1.xpose.msra.mxu0 0.0
        %1420 = vmatprep.subr.mxu0 0.0
        %1421 = vmatpush1.xpose.msra.mxu0 0.0
        %1422 = vmatprep.subr.mxu0 0.0
        %1423 = vmatpush1.xpose.msra.mxu0 0.0
        %1424 = vmatprep.subr.mxu0 0.0
        %1425 = vmatpush1.xpose.msra.mxu0 0.0
        %1426 = vmatprep.subr.mxu0 0.0
        %1427 = vmatpush1.xpose.msra.mxu0 0.0
        %1428 = vmatprep.subr.mxu0 0.0
        %1429 = vmatpush1.xpose.msra.mxu0 0.0
        %1430 = vmatprep.subr.mxu0 0.0
        %1431 = vmatpush1.xpose.msra.mxu0 0.0
        %1432 = vmatprep.subr.mxu0 0.0
        %1433 = vmatpush1.xpose.msra.mxu0 0.0
        %1434 = vmatprep.subr.mxu0 0.0
        %1435 = vmatpush1.xpose.msra.mxu0 0.0
        %1436 = vmatprep.subr.mxu0 0.0
        %1437 = vmatpush1.xpose.msra.mxu0 0.0
        %1438 = vmatprep.subr.mxu0 0.0
        %1439 = vmatpush1.xpose.msra.mxu0 0.0
        %1440 = vmatprep.subr.mxu0 0.0
        %1441 = vmatpush1.xpose.msra.mxu0 0.0
        %1442 = vmatprep.subr.mxu0 0.0
        %1443 = vmatpush1.xpose.msra.mxu0 0.0
        %1444 = vmatprep.subr.mxu0 0.0
        %1445 = vmatpush1.xpose.msra.mxu0 0.0
        %1446 = vmatprep.subr.mxu0 0.0
        %1447 = vmatpush1.xpose.msra.mxu0 0.0
        %1448 = vmatprep.subr.mxu0 0.0
        %1449 = vmatpush1.xpose.msra.mxu0 0.0
        %1450 = vmatprep.subr.mxu0 0.0
        %1451 = vmatpush1.xpose.msra.mxu0 0.0
        %1452 = vmatprep.subr.mxu0 0.0
        %1453 = vmatpush1.xpose.msra.mxu0 0.0
        %1454 = vmatprep.subr.mxu0 0.0
        %1455 = vmatpush1.xpose.msra.mxu0 0.0
        %1456 = vmatprep.subr.mxu0 0.0
        %1457 = vmatpush1.xpose.msra.mxu0 0.0
        %1458 = vmatprep.subr.mxu0 0.0
        %1459 = vmatpush1.xpose.msra.mxu0 0.0
        %1460 = vmatprep.subr.mxu0 0.0
        %1461 = vmatpush1.xpose.msra.mxu0 0.0
        %1462 = vmatprep.subr.mxu0 0.0
        %1463 = vmatpush1.xpose.msra.mxu0 0.0
        %1464 = vmatprep.subr.mxu0 0.0
        %1465 = vmatpush1.xpose.msra.mxu0 0.0
        %1466 = vmatprep.subr.mxu0 0.0
        %1467 = vmatpush1.xpose.msra.mxu0 0.0
        %1468 = vmatprep.subr.mxu0 0.0
        %1469 = vmatpush1.xpose.msra.mxu0 0.0
        %1470 = vmatprep.subr.mxu0 0.0
        %1471 = vmatpush1.xpose.msra.mxu0 0.0
        %1472 = vmatprep.mubr.f32.mxu0 0.0
        %1473 = vmatmul.mubr.f32.gmra.mrb[0].mxu0 %v1404
        %v1474 = vpop.f32.mrb[0].mxu0
        %v1475 = vadd.f32 0.0, %v1474
        %v1476 = vpop.f32.mrb[0].mxu0
        %1477 = vdwg.mxu0
        %1479 = vrot.lane.b32.xlu0 %v1158, 96
        %v1480 = vpop.permute.xlu0 %1479
        %v1481 = vsel %vm1169, %v1158, 0
        %v1483 = vsel %vm1169, %v1480, 0
        %1485 = vmatprep.subr.mxu0 0.0
        %1486 = vmatpush1.xpose.msra.mxu0 %v1483
        %1487 = vmatprep.subr.mxu0 0.0
        %1488 = vmatpush1.xpose.msra.mxu0 0.0
        %1489 = vmatprep.subr.mxu0 0.0
        %1490 = vmatpush1.xpose.msra.mxu0 0.0
        %1491 = vmatprep.subr.mxu0 0.0
        %1492 = vmatpush1.xpose.msra.mxu0 0.0
        %1493 = vmatprep.subr.mxu0 0.0
        %1494 = vmatpush1.xpose.msra.mxu0 0.0
        %1495 = vmatprep.subr.mxu0 0.0
        %1496 = vmatpush1.xpose.msra.mxu0 0.0
        %1497 = vmatprep.subr.mxu0 0.0
        %1498 = vmatpush1.xpose.msra.mxu0 0.0
        %1499 = vmatprep.subr.mxu0 0.0
        %1500 = vmatpush1.xpose.msra.mxu0 0.0
        %1501 = vmatprep.subr.mxu0 0.0
        %1502 = vmatpush1.xpose.msra.mxu0 0.0
        %1503 = vmatprep.subr.mxu0 0.0
        %1504 = vmatpush1.xpose.msra.mxu0 0.0
        %1505 = vmatprep.subr.mxu0 0.0
        %1506 = vmatpush1.xpose.msra.mxu0 0.0
        %1507 = vmatprep.subr.mxu0 0.0
        %1508 = vmatpush1.xpose.msra.mxu0 0.0
        %1509 = vmatprep.subr.mxu0 0.0
        %1510 = vmatpush1.xpose.msra.mxu0 0.0
        %1511 = vmatprep.subr.mxu0 0.0
        %1512 = vmatpush1.xpose.msra.mxu0 0.0
        %1513 = vmatprep.subr.mxu0 0.0
        %1514 = vmatpush1.xpose.msra.mxu0 0.0
        %1515 = vmatprep.subr.mxu0 0.0
        %1516 = vmatpush1.xpose.msra.mxu0 0.0
        %1517 = vmatprep.subr.mxu0 0.0
        %1518 = vmatpush1.xpose.msra.mxu0 0.0
        %1519 = vmatprep.subr.mxu0 0.0
        %1520 = vmatpush1.xpose.msra.mxu0 0.0
        %1521 = vmatprep.subr.mxu0 0.0
        %1522 = vmatpush1.xpose.msra.mxu0 0.0
        %1523 = vmatprep.subr.mxu0 0.0
        %1524 = vmatpush1.xpose.msra.mxu0 0.0
        %1525 = vmatprep.subr.mxu0 0.0
        %1526 = vmatpush1.xpose.msra.mxu0 0.0
        %1527 = vmatprep.subr.mxu0 0.0
        %1528 = vmatpush1.xpose.msra.mxu0 0.0
        %1529 = vmatprep.subr.mxu0 0.0
        %1530 = vmatpush1.xpose.msra.mxu0 0.0
        %1531 = vmatprep.subr.mxu0 0.0
        %1532 = vmatpush1.xpose.msra.mxu0 0.0
        %1533 = vmatprep.subr.mxu0 0.0
        %1534 = vmatpush1.xpose.msra.mxu0 0.0
        %1535 = vmatprep.subr.mxu0 0.0
        %1536 = vmatpush1.xpose.msra.mxu0 0.0
        %1537 = vmatprep.subr.mxu0 0.0
        %1538 = vmatpush1.xpose.msra.mxu0 0.0
        %1539 = vmatprep.subr.mxu0 0.0
        %1540 = vmatpush1.xpose.msra.mxu0 0.0
        %1541 = vmatprep.subr.mxu0 0.0
        %1542 = vmatpush1.xpose.msra.mxu0 0.0
        %1543 = vmatprep.subr.mxu0 0.0
        %1544 = vmatpush1.xpose.msra.mxu0 0.0
        %1545 = vmatprep.subr.mxu0 0.0
        %1546 = vmatpush1.xpose.msra.mxu0 0.0
        %1547 = vmatprep.subr.mxu0 0.0
        %1548 = vmatpush1.xpose.msra.mxu0 0.0
        %1549 = vmatprep.mubr.f32.mxu0 0.0
        %1550 = vmatmul.mubr.f32.gmra.mrb[0].mxu0 %v1481
        %v1551 = vpop.f32.mrb[0].mxu0
        %v1552 = vadd.f32 0.0, %v1551
        %v1553 = vpop.f32.mrb[0].mxu0
        %1554 = vdwg.mxu0
        %1555 = vrot.lane.b32.xlu0 %v1158, 120
        %v1556 = vpop.permute.xlu0 %1555
        %1557 = vrot.lane.b32.xlu0 %v1158, 88
        %v1558 = vpop.permute.xlu0 %1557
        %v1559 = vsel %vm1169, %v1556, 0
        %v1561 = vsel %vm1169, %v1558, 0
        %1563 = vmatprep.subr.mxu0 0.0
        %1564 = vmatpush1.xpose.msra.mxu0 %v1561
        %1565 = vmatprep.subr.mxu0 0.0
        %1566 = vmatpush1.xpose.msra.mxu0 0.0
        %1567 = vmatprep.subr.mxu0 0.0
        %1568 = vmatpush1.xpose.msra.mxu0 0.0
        %1569 = vmatprep.subr.mxu0 0.0
        %1570 = vmatpush1.xpose.msra.mxu0 0.0
        %1571 = vmatprep.subr.mxu0 0.0
        %1572 = vmatpush1.xpose.msra.mxu0 0.0
        %1573 = vmatprep.subr.mxu0 0.0
        %1574 = vmatpush1.xpose.msra.mxu0 0.0
        %1575 = vmatprep.subr.mxu0 0.0
        %1576 = vmatpush1.xpose.msra.mxu0 0.0
        %1577 = vmatprep.subr.mxu0 0.0
        %1578 = vmatpush1.xpose.msra.mxu0 0.0
        %1579 = vmatprep.subr.mxu0 0.0
        %1580 = vmatpush1.xpose.msra.mxu0 0.0
        %1581 = vmatprep.subr.mxu0 0.0
        %1582 = vmatpush1.xpose.msra.mxu0 0.0
        %1583 = vmatprep.subr.mxu0 0.0
        %1584 = vmatpush1.xpose.msra.mxu0 0.0
        %1585 = vmatprep.subr.mxu0 0.0
        %1586 = vmatpush1.xpose.msra.mxu0 0.0
        %1587 = vmatprep.subr.mxu0 0.0
        %1588 = vmatpush1.xpose.msra.mxu0 0.0
        %1589 = vmatprep.subr.mxu0 0.0
        %1590 = vmatpush1.xpose.msra.mxu0 0.0
        %1591 = vmatprep.subr.mxu0 0.0
        %1592 = vmatpush1.xpose.msra.mxu0 0.0
        %1593 = vmatprep.subr.mxu0 0.0
        %1594 = vmatpush1.xpose.msra.mxu0 0.0
        %1595 = vmatprep.subr.mxu0 0.0
        %1596 = vmatpush1.xpose.msra.mxu0 0.0
        %1597 = vmatprep.subr.mxu0 0.0
        %1598 = vmatpush1.xpose.msra.mxu0 0.0
        %1599 = vmatprep.subr.mxu0 0.0
        %1600 = vmatpush1.xpose.msra.mxu0 0.0
        %1601 = vmatprep.subr.mxu0 0.0
        %1602 = vmatpush1.xpose.msra.mxu0 0.0
        %1603 = vmatprep.subr.mxu0 0.0
        %1604 = vmatpush1.xpose.msra.mxu0 0.0
        %1605 = vmatprep.subr.mxu0 0.0
        %1606 = vmatpush1.xpose.msra.mxu0 0.0
        %1607 = vmatprep.subr.mxu0 0.0
        %1608 = vmatpush1.xpose.msra.mxu0 0.0
        %1609 = vmatprep.subr.mxu0 0.0
        %1610 = vmatpush1.xpose.msra.mxu0 0.0
        %1611 = vmatprep.subr.mxu0 0.0
        %1612 = vmatpush1.xpose.msra.mxu0 0.0
        %1613 = vmatprep.subr.mxu0 0.0
        %1614 = vmatpush1.xpose.msra.mxu0 0.0
        %1615 = vmatprep.subr.mxu0 0.0
        %1616 = vmatpush1.xpose.msra.mxu0 0.0
        %1617 = vmatprep.subr.mxu0 0.0
        %1618 = vmatpush1.xpose.msra.mxu0 0.0
        %1619 = vmatprep.subr.mxu0 0.0
        %1620 = vmatpush1.xpose.msra.mxu0 0.0
        %1621 = vmatprep.subr.mxu0 0.0
        %1622 = vmatpush1.xpose.msra.mxu0 0.0
        %1623 = vmatprep.subr.mxu0 0.0
        %1624 = vmatpush1.xpose.msra.mxu0 0.0
        %1625 = vmatprep.subr.mxu0 0.0
        %1626 = vmatpush1.xpose.msra.mxu0 0.0
        %1627 = vmatprep.mubr.f32.mxu0 0.0
        %1628 = vmatmul.mubr.f32.gmra.mrb[0].mxu0 %v1559
        %v1629 = vpop.f32.mrb[0].mxu0
        %v1630 = vadd.f32 0.0, %v1629
        %v1631 = vpop.f32.mrb[0].mxu0
        %1632 = vdwg.mxu0
        %1633 = vrot.lane.b32.xlu0 %v1158, 112
        %v1634 = vpop.permute.xlu0 %1633
        %1635 = vrot.lane.b32.xlu0 %v1158, 80
        %v1636 = vpop.permute.xlu0 %1635
        %v1637 = vsel %vm1169, %v1634, 0
        %v1639 = vsel %vm1169, %v1636, 0
        %1641 = vmatprep.subr.mxu0 0.0
        %1642 = vmatpush1.xpose.msra.mxu0 %v1639
        %1643 = vmatprep.subr.mxu0 0.0
        %1644 = vmatpush1.xpose.msra.mxu0 0.0
        %1645 = vmatprep.subr.mxu0 0.0
        %1646 = vmatpush1.xpose.msra.mxu0 0.0
        %1647 = vmatprep.subr.mxu0 0.0
        %1648 = vmatpush1.xpose.msra.mxu0 0.0
        %1649 = vmatprep.subr.mxu0 0.0
        %1650 = vmatpush1.xpose.msra.mxu0 0.0
        %1651 = vmatprep.subr.mxu0 0.0
        %1652 = vmatpush1.xpose.msra.mxu0 0.0
        %1653 = vmatprep.subr.mxu0 0.0
        %1654 = vmatpush1.xpose.msra.mxu0 0.0
        %1655 = vmatprep.subr.mxu0 0.0
        %1656 = vmatpush1.xpose.msra.mxu0 0.0
        %1657 = vmatprep.subr.mxu0 0.0
        %1658 = vmatpush1.xpose.msra.mxu0 0.0
        %1659 = vmatprep.subr.mxu0 0.0
        %1660 = vmatpush1.xpose.msra.mxu0 0.0
        %1661 = vmatprep.subr.mxu0 0.0
        %1662 = vmatpush1.xpose.msra.mxu0 0.0
        %1663 = vmatprep.subr.mxu0 0.0
        %1664 = vmatpush1.xpose.msra.mxu0 0.0
        %1665 = vmatprep.subr.mxu0 0.0
        %1666 = vmatpush1.xpose.msra.mxu0 0.0
        %1667 = vmatprep.subr.mxu0 0.0
        %1668 = vmatpush1.xpose.msra.mxu0 0.0
        %1669 = vmatprep.subr.mxu0 0.0
        %1670 = vmatpush1.xpose.msra.mxu0 0.0
        %1671 = vmatprep.subr.mxu0 0.0
        %1672 = vmatpush1.xpose.msra.mxu0 0.0
        %1673 = vmatprep.subr.mxu0 0.0
        %1674 = vmatpush1.xpose.msra.mxu0 0.0
        %1675 = vmatprep.subr.mxu0 0.0
        %1676 = vmatpush1.xpose.msra.mxu0 0.0
        %1677 = vmatprep.subr.mxu0 0.0
        %1678 = vmatpush1.xpose.msra.mxu0 0.0
        %1679 = vmatprep.subr.mxu0 0.0
        %1680 = vmatpush1.xpose.msra.mxu0 0.0
        %1681 = vmatprep.subr.mxu0 0.0
        %1682 = vmatpush1.xpose.msra.mxu0 0.0
        %1683 = vmatprep.subr.mxu0 0.0
        %1684 = vmatpush1.xpose.msra.mxu0 0.0
        %1685 = vmatprep.subr.mxu0 0.0
        %1686 = vmatpush1.xpose.msra.mxu0 0.0
        %1687 = vmatprep.subr.mxu0 0.0
        %1688 = vmatpush1.xpose.msra.mxu0 0.0
        %1689 = vmatprep.subr.mxu0 0.0
        %1690 = vmatpush1.xpose.msra.mxu0 0.0
        %1691 = vmatprep.subr.mxu0 0.0
        %1692 = vmatpush1.xpose.msra.mxu0 0.0
        %1693 = vmatprep.subr.mxu0 0.0
        %1694 = vmatpush1.xpose.msra.mxu0 0.0
        %1695 = vmatprep.subr.mxu0 0.0
        %1696 = vmatpush1.xpose.msra.mxu0 0.0
        %1697 = vmatprep.subr.mxu0 0.0
        %1698 = vmatpush1.xpose.msra.mxu0 0.0
        %1699 = vmatprep.subr.mxu0 0.0
        %1700 = vmatpush1.xpose.msra.mxu0 0.0
        %1701 = vmatprep.subr.mxu0 0.0
        %1702 = vmatpush1.xpose.msra.mxu0 0.0
        %1703 = vmatprep.subr.mxu0 0.0
        %1704 = vmatpush1.xpose.msra.mxu0 0.0
        %1705 = vmatprep.mubr.f32.mxu0 0.0
        %1706 = vmatmul.mubr.f32.gmra.mrb[0].mxu0 %v1637
        %v1707 = vpop.f32.mrb[0].mxu0
        %v1708 = vadd.f32 0.0, %v1707
        %v1709 = vpop.f32.mrb[0].mxu0
        %1710 = vdwg.mxu0
        %1711 = vrot.lane.b32.xlu0 %v1158, 104
        %v1712 = vpop.permute.xlu0 %1711
        %1713 = vrot.lane.b32.xlu0 %v1158, 72
        %v1714 = vpop.permute.xlu0 %1713
        %v1715 = vsel %vm1169, %v1712, 0
        %v1717 = vsel %vm1169, %v1714, 0
        %1719 = vmatprep.subr.mxu0 0.0
        %1720 = vmatpush1.xpose.msra.mxu0 %v1717
        %1721 = vmatprep.subr.mxu0 0.0
        %1722 = vmatpush1.xpose.msra.mxu0 0.0
        %1723 = vmatprep.subr.mxu0 0.0
        %1724 = vmatpush1.xpose.msra.mxu0 0.0
        %1725 = vmatprep.subr.mxu0 0.0
        %1726 = vmatpush1.xpose.msra.mxu0 0.0
        %1727 = vmatprep.subr.mxu0 0.0
        %1728 = vmatpush1.xpose.msra.mxu0 0.0
        %1729 = vmatprep.subr.mxu0 0.0
        %1730 = vmatpush1.xpose.msra.mxu0 0.0
        %1731 = vmatprep.subr.mxu0 0.0
        %1732 = vmatpush1.xpose.msra.mxu0 0.0
        %1733 = vmatprep.subr.mxu0 0.0
        %1734 = vmatpush1.xpose.msra.mxu0 0.0
        %1735 = vmatprep.subr.mxu0 0.0
        %1736 = vmatpush1.xpose.msra.mxu0 0.0
        %1737 = vmatprep.subr.mxu0 0.0
        %1738 = vmatpush1.xpose.msra.mxu0 0.0
        %1739 = vmatprep.subr.mxu0 0.0
        %1740 = vmatpush1.xpose.msra.mxu0 0.0
        %1741 = vmatprep.subr.mxu0 0.0
        %1742 = vmatpush1.xpose.msra.mxu0 0.0
        %1743 = vmatprep.subr.mxu0 0.0
        %1744 = vmatpush1.xpose.msra.mxu0 0.0
        %1745 = vmatprep.subr.mxu0 0.0
        %1746 = vmatpush1.xpose.msra.mxu0 0.0
        %1747 = vmatprep.subr.mxu0 0.0
        %1748 = vmatpush1.xpose.msra.mxu0 0.0
        %1749 = vmatprep.subr.mxu0 0.0
        %1750 = vmatpush1.xpose.msra.mxu0 0.0
        %1751 = vmatprep.subr.mxu0 0.0
        %1752 = vmatpush1.xpose.msra.mxu0 0.0
        %1753 = vmatprep.subr.mxu0 0.0
        %1754 = vmatpush1.xpose.msra.mxu0 0.0
        %1755 = vmatprep.subr.mxu0 0.0
        %1756 = vmatpush1.xpose.msra.mxu0 0.0
        %1757 = vmatprep.subr.mxu0 0.0
        %1758 = vmatpush1.xpose.msra.mxu0 0.0
        %1759 = vmatprep.subr.mxu0 0.0
        %1760 = vmatpush1.xpose.msra.mxu0 0.0
        %1761 = vmatprep.subr.mxu0 0.0
        %1762 = vmatpush1.xpose.msra.mxu0 0.0
        %1763 = vmatprep.subr.mxu0 0.0
        %1764 = vmatpush1.xpose.msra.mxu0 0.0
        %1765 = vmatprep.subr.mxu0 0.0
        %1766 = vmatpush1.xpose.msra.mxu0 0.0
        %1767 = vmatprep.subr.mxu0 0.0
        %1768 = vmatpush1.xpose.msra.mxu0 0.0
        %1769 = vmatprep.subr.mxu0 0.0
        %1770 = vmatpush1.xpose.msra.mxu0 0.0
        %1771 = vmatprep.subr.mxu0 0.0
        %1772 = vmatpush1.xpose.msra.mxu0 0.0
        %1773 = vmatprep.subr.mxu0 0.0
        %1774 = vmatpush1.xpose.msra.mxu0 0.0
        %1775 = vmatprep.subr.mxu0 0.0
        %1776 = vmatpush1.xpose.msra.mxu0 0.0
        %1777 = vmatprep.subr.mxu0 0.0
        %1778 = vmatpush1.xpose.msra.mxu0 0.0
        %1779 = vmatprep.subr.mxu0 0.0
        %1780 = vmatpush1.xpose.msra.mxu0 0.0
        %1781 = vmatprep.subr.mxu0 0.0
        %1782 = vmatpush1.xpose.msra.mxu0 0.0
        %1783 = vmatprep.mubr.f32.mxu0 0.0
        %1784 = vmatmul.mubr.f32.gmra.mrb[0].mxu0 %v1715
        %v1785 = vpop.f32.mrb[0].mxu0
        %v1786 = vadd.f32 0.0, %v1785
        %v1787 = vpop.f32.mrb[0].mxu0
        %1788 = vdwg.mxu0
        %v1789 = vmul.f32 %v1241, 0.35355338
        %v1790 = vmul.f32 %v1319, 0.35355338
        %v1791 = vmul.f32 %v1397, 0.35355338
        %v1792 = vmul.f32 %v1475, 0.35355338
        %v1793 = vmul.f32 %v1552, 0.35355338
        %v1794 = vmul.f32 %v1630, 0.35355338
        %v1795 = vmul.f32 %v1708, 0.35355338
        %v1796 = vmul.f32 %v1786, 0.35355338
        %v1797 = vsel %vm1169, %v1789, -inf
        %1798 = vmax.xlane.f32.xlu0 %v1797
        %v1799 = vpop.xlane.xlu0 %1798
        %v1800 = vsel %vm1169, %v1790, -inf
        %1801 = vmax.xlane.f32.xlu0 %v1800
        %v1802 = vpop.xlane.xlu0 %1801
        %v1803 = vsel %vm1169, %v1791, -inf
        %1804 = vmax.xlane.f32.xlu0 %v1803
        %v1805 = vpop.xlane.xlu0 %1804
        %v1806 = vsel %vm1169, %v1792, -inf
        %1807 = vmax.xlane.f32.xlu0 %v1806
        %v1808 = vpop.xlane.xlu0 %1807
        %v1809 = vsel %vm1169, %v1793, -inf
        %1810 = vmax.xlane.f32.xlu0 %v1809
        %v1811 = vpop.xlane.xlu0 %1810
        %v1812 = vsel %vm1169, %v1794, -inf
        %1813 = vmax.xlane.f32.xlu0 %v1812
        %v1814 = vpop.xlane.xlu0 %1813
        %v1815 = vsel %vm1169, %v1795, -inf
        %1816 = vmax.xlane.f32.xlu0 %v1815
        %v1817 = vpop.xlane.xlu0 %1816
        %v1818 = vsel %vm1169, %v1796, -inf
        %1819 = vmax.xlane.f32.xlu0 %v1818
        %v1820 = vpop.xlane.xlu0 %1819
        %v1821 = vsub.f32 %v1789, %v1799
        %v1822 = vsub.f32 %v1790, %v1802
        %v1823 = vsub.f32 %v1791, %v1805
        %v1824 = vsub.f32 %v1792, %v1808
        %v1825 = vsub.f32 %v1793, %v1811
        %v1826 = vsub.f32 %v1794, %v1814
        %v1827 = vsub.f32 %v1795, %v1817
        %v1828 = vsub.f32 %v1796, %v1820
        %v1829 = vmul.f32 %v1821, 1.442695
        %v1830 = vpow.pop %v1829
        %v1831 = vmul.f32 %v1822, 1.442695
        %v1832 = vpow.pop %v1831
        %v1833 = vmul.f32 %v1823, 1.442695
        %v1834 = vpow.pop %v1833
        %v1835 = vmul.f32 %v1824, 1.442695
        %v1836 = vpow.pop %v1835
        %v1837 = vmul.f32 %v1825, 1.442695
        %v1838 = vpow.pop %v1837
        %v1839 = vmul.f32 %v1826, 1.442695
        %v1840 = vpow.pop %v1839
        %v1841 = vmul.f32 %v1827, 1.442695
        %v1842 = vpow.pop %v1841
        %v1843 = vmul.f32 %v1828, 1.442695
        %v1844 = vpow.pop %v1843
        %v1845 = vsel %vm1169, %v1830, 0.0
        %1846 = vadd.xlane.f32.xlu0 %v1845
        %v1847 = vpop.xlane.xlu0 %1846
        %v1848 = vsel %vm1169, %v1832, 0.0
        %1849 = vadd.xlane.f32.xlu0 %v1848
        %v1850 = vpop.xlane.xlu0 %1849
        %v1851 = vsel %vm1169, %v1834, 0.0
        %1852 = vadd.xlane.f32.xlu0 %v1851
        %v1853 = vpop.xlane.xlu0 %1852
        %v1854 = vsel %vm1169, %v1836, 0.0
        %1855 = vadd.xlane.f32.xlu0 %v1854
        %v1856 = vpop.xlane.xlu0 %1855
        %v1857 = vsel %vm1169, %v1838, 0.0
        %1858 = vadd.xlane.f32.xlu0 %v1857
        %v1859 = vpop.xlane.xlu0 %1858
        %v1860 = vsel %vm1169, %v1840, 0.0
        %1861 = vadd.xlane.f32.xlu0 %v1860
        %v1862 = vpop.xlane.xlu0 %1861
        %v1863 = vsel %vm1169, %v1842, 0.0
        %1864 = vadd.xlane.f32.xlu0 %v1863
        %v1865 = vpop.xlane.xlu0 %1864
        %v1866 = vsel %vm1169, %v1844, 0.0
        %1867 = vadd.xlane.f32.xlu0 %v1866
        %v1868 = vpop.xlane.xlu0 %1867
        %v1869 = vrcp.pop %v1847
        %v1870 = vrcp.pop %v1850
        %v1871 = vrcp.pop %v1853
        %v1872 = vrcp.pop %v1856
        %v1873 = vrcp.pop %v1859
        %v1874 = vrcp.pop %v1862
        %v1875 = vrcp.pop %v1865
        %v1876 = vrcp.pop %v1868
        %v1877 = vmul.f32 %v1830, %v1869
        %v1878 = vmul.f32 %v1832, %v1870
        %v1879 = vmul.f32 %v1834, %v1871
        %v1880 = vmul.f32 %v1836, %v1872
        %v1881 = vmul.f32 %v1838, %v1873
        %v1882 = vmul.f32 %v1840, %v1874
        %v1883 = vmul.f32 %v1842, %v1875
        %v1884 = vmul.f32 %v1844, %v1876
        %1885 = vrot.lane.b32.xlu0 %v1153, 64
        %v1886 = vpop.permute.xlu0 %1885
        %v1889 = vsel %vm1169, %v1877, 0
        %1891 = vmatprep.subr.mxu0 0.0
        %1892 = vmatpush1.msra.mxu0 %v1886
        %1893 = vmatprep.subr.mxu0 0.0
        %1894 = vmatpush1.msra.mxu0 0.0
        %1895 = vmatprep.subr.mxu0 0.0
        %1896 = vmatpush1.msra.mxu0 0.0
        %1897 = vmatprep.subr.mxu0 0.0
        %1898 = vmatpush1.msra.mxu0 0.0
        %1899 = vmatprep.subr.mxu0 0.0
        %1900 = vmatpush1.msra.mxu0 0.0
        %1901 = vmatprep.subr.mxu0 0.0
        %1902 = vmatpush1.msra.mxu0 0.0
        %1903 = vmatprep.subr.mxu0 0.0
        %1904 = vmatpush1.msra.mxu0 0.0
        %1905 = vmatprep.subr.mxu0 0.0
        %1906 = vmatpush1.msra.mxu0 0.0
        %1907 = vmatprep.subr.mxu0 0.0
        %1908 = vmatpush1.msra.mxu0 0.0
        %1909 = vmatprep.subr.mxu0 0.0
        %1910 = vmatpush1.msra.mxu0 0.0
        %1911 = vmatprep.subr.mxu0 0.0
        %1912 = vmatpush1.msra.mxu0 0.0
        %1913 = vmatprep.subr.mxu0 0.0
        %1914 = vmatpush1.msra.mxu0 0.0
        %1915 = vmatprep.subr.mxu0 0.0
        %1916 = vmatpush1.msra.mxu0 0.0
        %1917 = vmatprep.subr.mxu0 0.0
        %1918 = vmatpush1.msra.mxu0 0.0
        %1919 = vmatprep.subr.mxu0 0.0
        %1920 = vmatpush1.msra.mxu0 0.0
        %1921 = vmatprep.subr.mxu0 0.0
        %1922 = vmatpush1.msra.mxu0 0.0
        %1923 = vmatprep.subr.mxu0 0.0
        %1924 = vmatpush1.msra.mxu0 0.0
        %1925 = vmatprep.subr.mxu0 0.0
        %1926 = vmatpush1.msra.mxu0 0.0
        %1927 = vmatprep.subr.mxu0 0.0
        %1928 = vmatpush1.msra.mxu0 0.0
        %1929 = vmatprep.subr.mxu0 0.0
        %1930 = vmatpush1.msra.mxu0 0.0
        %1931 = vmatprep.subr.mxu0 0.0
        %1932 = vmatpush1.msra.mxu0 0.0
        %1933 = vmatprep.subr.mxu0 0.0
        %1934 = vmatpush1.msra.mxu0 0.0
        %1935 = vmatprep.subr.mxu0 0.0
        %1936 = vmatpush1.msra.mxu0 0.0
        %1937 = vmatprep.subr.mxu0 0.0
        %1938 = vmatpush1.msra.mxu0 0.0
        %1939 = vmatprep.subr.mxu0 0.0
        %1940 = vmatpush1.msra.mxu0 0.0
        %1941 = vmatprep.subr.mxu0 0.0
        %1942 = vmatpush1.msra.mxu0 0.0
        %1943 = vmatprep.subr.mxu0 0.0
        %1944 = vmatpush1.msra.mxu0 0.0
        %1945 = vmatprep.subr.mxu0 0.0
        %1946 = vmatpush1.msra.mxu0 0.0
        %1947 = vmatprep.subr.mxu0 0.0
        %1948 = vmatpush1.msra.mxu0 0.0
        %1949 = vmatprep.subr.mxu0 0.0
        %1950 = vmatpush1.msra.mxu0 0.0
        %1951 = vmatprep.subr.mxu0 0.0
        %1952 = vmatpush1.msra.mxu0 0.0
        %1953 = vmatprep.subr.mxu0 0.0
        %1954 = vmatpush1.msra.mxu0 0.0
        %1955 = vmatprep.mubr.f32.mxu0 0.0
        %1956 = vmatmul.mubr.f32.gmra.mrb[0].mxu0 %v1889
        %v1957 = vpop.f32.mrb[0].mxu0
        %v1958 = vadd.f32 0.0, %v1957
        %v1959 = vpop.f32.mrb[0].mxu0
        %1960 = vdwg.mxu0
        %1961 = vrot.lane.b32.xlu0 %v1153, 56
        %v1962 = vpop.permute.xlu0 %1961
        %v1965 = vsel %vm1169, %v1878, 0
        %1967 = vmatprep.subr.mxu0 0.0
        %1968 = vmatpush1.msra.mxu0 %v1962
        %1969 = vmatprep.subr.mxu0 0.0
        %1970 = vmatpush1.msra.mxu0 0.0
        %1971 = vmatprep.subr.mxu0 0.0
        %1972 = vmatpush1.msra.mxu0 0.0
        %1973 = vmatprep.subr.mxu0 0.0
        %1974 = vmatpush1.msra.mxu0 0.0
        %1975 = vmatprep.subr.mxu0 0.0
        %1976 = vmatpush1.msra.mxu0 0.0
        %1977 = vmatprep.subr.mxu0 0.0
        %1978 = vmatpush1.msra.mxu0 0.0
        %1979 = vmatprep.subr.mxu0 0.0
        %1980 = vmatpush1.msra.mxu0 0.0
        %1981 = vmatprep.subr.mxu0 0.0
        %1982 = vmatpush1.msra.mxu0 0.0
        %1983 = vmatprep.subr.mxu0 0.0
        %1984 = vmatpush1.msra.mxu0 0.0
        %1985 = vmatprep.subr.mxu0 0.0
        %1986 = vmatpush1.msra.mxu0 0.0
        %1987 = vmatprep.subr.mxu0 0.0
        %1988 = vmatpush1.msra.mxu0 0.0
        %1989 = vmatprep.subr.mxu0 0.0
        %1990 = vmatpush1.msra.mxu0 0.0
        %1991 = vmatprep.subr.mxu0 0.0
        %1992 = vmatpush1.msra.mxu0 0.0
        %1993 = vmatprep.subr.mxu0 0.0
        %1994 = vmatpush1.msra.mxu0 0.0
        %1995 = vmatprep.subr.mxu0 0.0
        %1996 = vmatpush1.msra.mxu0 0.0
        %1997 = vmatprep.subr.mxu0 0.0
        %1998 = vmatpush1.msra.mxu0 0.0
        %1999 = vmatprep.subr.mxu0 0.0
        %2000 = vmatpush1.msra.mxu0 0.0
        %2001 = vmatprep.subr.mxu0 0.0
        %2002 = vmatpush1.msra.mxu0 0.0
        %2003 = vmatprep.subr.mxu0 0.0
        %2004 = vmatpush1.msra.mxu0 0.0
        %2005 = vmatprep.subr.mxu0 0.0
        %2006 = vmatpush1.msra.mxu0 0.0
        %2007 = vmatprep.subr.mxu0 0.0
        %2008 = vmatpush1.msra.mxu0 0.0
        %2009 = vmatprep.subr.mxu0 0.0
        %2010 = vmatpush1.msra.mxu0 0.0
        %2011 = vmatprep.subr.mxu0 0.0
        %2012 = vmatpush1.msra.mxu0 0.0
        %2013 = vmatprep.subr.mxu0 0.0
        %2014 = vmatpush1.msra.mxu0 0.0
        %2015 = vmatprep.subr.mxu0 0.0
        %2016 = vmatpush1.msra.mxu0 0.0
        %2017 = vmatprep.subr.mxu0 0.0
        %2018 = vmatpush1.msra.mxu0 0.0
        %2019 = vmatprep.subr.mxu0 0.0
        %2020 = vmatpush1.msra.mxu0 0.0
        %2021 = vmatprep.subr.mxu0 0.0
        %2022 = vmatpush1.msra.mxu0 0.0
        %2023 = vmatprep.subr.mxu0 0.0
        %2024 = vmatpush1.msra.mxu0 0.0
        %2025 = vmatprep.subr.mxu0 0.0
        %2026 = vmatpush1.msra.mxu0 0.0
        %2027 = vmatprep.subr.mxu0 0.0
        %2028 = vmatpush1.msra.mxu0 0.0
        %2029 = vmatprep.subr.mxu0 0.0
        %2030 = vmatpush1.msra.mxu0 0.0
        %2031 = vmatprep.mubr.f32.mxu0 0.0
        %2032 = vmatmul.mubr.f32.gmra.mrb[0].mxu0 %v1965
        %v2033 = vpop.f32.mrb[0].mxu0
        %v2034 = vadd.f32 0.0, %v2033
        %v2035 = vpop.f32.mrb[0].mxu0
        %2036 = vdwg.mxu0
        %2037 = vrot.lane.b32.xlu0 %v1153, 48
        %v2038 = vpop.permute.xlu0 %2037
        %v2041 = vsel %vm1169, %v1879, 0
        %2043 = vmatprep.subr.mxu0 0.0
        %2044 = vmatpush1.msra.mxu0 %v2038
        %2045 = vmatprep.subr.mxu0 0.0
        %2046 = vmatpush1.msra.mxu0 0.0
        %2047 = vmatprep.subr.mxu0 0.0
        %2048 = vmatpush1.msra.mxu0 0.0
        %2049 = vmatprep.subr.mxu0 0.0
        %2050 = vmatpush1.msra.mxu0 0.0
        %2051 = vmatprep.subr.mxu0 0.0
        %2052 = vmatpush1.msra.mxu0 0.0
        %2053 = vmatprep.subr.mxu0 0.0
        %2054 = vmatpush1.msra.mxu0 0.0
        %2055 = vmatprep.subr.mxu0 0.0
        %2056 = vmatpush1.msra.mxu0 0.0
        %2057 = vmatprep.subr.mxu0 0.0
        %2058 = vmatpush1.msra.mxu0 0.0
        %2059 = vmatprep.subr.mxu0 0.0
        %2060 = vmatpush1.msra.mxu0 0.0
        %2061 = vmatprep.subr.mxu0 0.0
        %2062 = vmatpush1.msra.mxu0 0.0
        %2063 = vmatprep.subr.mxu0 0.0
        %2064 = vmatpush1.msra.mxu0 0.0
        %2065 = vmatprep.subr.mxu0 0.0
        %2066 = vmatpush1.msra.mxu0 0.0
        %2067 = vmatprep.subr.mxu0 0.0
        %2068 = vmatpush1.msra.mxu0 0.0
        %2069 = vmatprep.subr.mxu0 0.0
        %2070 = vmatpush1.msra.mxu0 0.0
        %2071 = vmatprep.subr.mxu0 0.0
        %2072 = vmatpush1.msra.mxu0 0.0
        %2073 = vmatprep.subr.mxu0 0.0
        %2074 = vmatpush1.msra.mxu0 0.0
        %2075 = vmatprep.subr.mxu0 0.0
        %2076 = vmatpush1.msra.mxu0 0.0
        %2077 = vmatprep.subr.mxu0 0.0
        %2078 = vmatpush1.msra.mxu0 0.0
        %2079 = vmatprep.subr.mxu0 0.0
        %2080 = vmatpush1.msra.mxu0 0.0
        %2081 = vmatprep.subr.mxu0 0.0
        %2082 = vmatpush1.msra.mxu0 0.0
        %2083 = vmatprep.subr.mxu0 0.0
        %2084 = vmatpush1.msra.mxu0 0.0
        %2085 = vmatprep.subr.mxu0 0.0
        %2086 = vmatpush1.msra.mxu0 0.0
        %2087 = vmatprep.subr.mxu0 0.0
        %2088 = vmatpush1.msra.mxu0 0.0
        %2089 = vmatprep.subr.mxu0 0.0
        %2090 = vmatpush1.msra.mxu0 0.0
        %2091 = vmatprep.subr.mxu0 0.0
        %2092 = vmatpush1.msra.mxu0 0.0
        %2093 = vmatprep.subr.mxu0 0.0
        %2094 = vmatpush1.msra.mxu0 0.0
        %2095 = vmatprep.subr.mxu0 0.0
        %2096 = vmatpush1.msra.mxu0 0.0
        %2097 = vmatprep.subr.mxu0 0.0
        %2098 = vmatpush1.msra.mxu0 0.0
        %2099 = vmatprep.subr.mxu0 0.0
        %2100 = vmatpush1.msra.mxu0 0.0
        %2101 = vmatprep.subr.mxu0 0.0
        %2102 = vmatpush1.msra.mxu0 0.0
        %2103 = vmatprep.subr.mxu0 0.0
        %2104 = vmatpush1.msra.mxu0 0.0
        %2105 = vmatprep.subr.mxu0 0.0
        %2106 = vmatpush1.msra.mxu0 0.0
        %2107 = vmatprep.mubr.f32.mxu0 0.0
        %2108 = vmatmul.mubr.f32.gmra.mrb[0].mxu0 %v2041
        %v2109 = vpop.f32.mrb[0].mxu0
        %v2110 = vadd.f32 0.0, %v2109
        %v2111 = vpop.f32.mrb[0].mxu0
        %2112 = vdwg.mxu0
        %2113 = vrot.lane.b32.xlu0 %v1153, 40
        %v2114 = vpop.permute.xlu0 %2113
        %v2117 = vsel %vm1169, %v1880, 0
        %2119 = vmatprep.subr.mxu0 0.0
        %2120 = vmatpush1.msra.mxu0 %v2114
        %2121 = vmatprep.subr.mxu0 0.0
        %2122 = vmatpush1.msra.mxu0 0.0
        %2123 = vmatprep.subr.mxu0 0.0
        %2124 = vmatpush1.msra.mxu0 0.0
        %2125 = vmatprep.subr.mxu0 0.0
        %2126 = vmatpush1.msra.mxu0 0.0
        %2127 = vmatprep.subr.mxu0 0.0
        %2128 = vmatpush1.msra.mxu0 0.0
        %2129 = vmatprep.subr.mxu0 0.0
        %2130 = vmatpush1.msra.mxu0 0.0
        %2131 = vmatprep.subr.mxu0 0.0
        %2132 = vmatpush1.msra.mxu0 0.0
        %2133 = vmatprep.subr.mxu0 0.0
        %2134 = vmatpush1.msra.mxu0 0.0
        %2135 = vmatprep.subr.mxu0 0.0
        %2136 = vmatpush1.msra.mxu0 0.0
        %2137 = vmatprep.subr.mxu0 0.0
        %2138 = vmatpush1.msra.mxu0 0.0
        %2139 = vmatprep.subr.mxu0 0.0
        %2140 = vmatpush1.msra.mxu0 0.0
        %2141 = vmatprep.subr.mxu0 0.0
        %2142 = vmatpush1.msra.mxu0 0.0
        %2143 = vmatprep.subr.mxu0 0.0
        %2144 = vmatpush1.msra.mxu0 0.0
        %2145 = vmatprep.subr.mxu0 0.0
        %2146 = vmatpush1.msra.mxu0 0.0
        %2147 = vmatprep.subr.mxu0 0.0
        %2148 = vmatpush1.msra.mxu0 0.0
        %2149 = vmatprep.subr.mxu0 0.0
        %2150 = vmatpush1.msra.mxu0 0.0
        %2151 = vmatprep.subr.mxu0 0.0
        %2152 = vmatpush1.msra.mxu0 0.0
        %2153 = vmatprep.subr.mxu0 0.0
        %2154 = vmatpush1.msra.mxu0 0.0
        %2155 = vmatprep.subr.mxu0 0.0
        %2156 = vmatpush1.msra.mxu0 0.0
        %2157 = vmatprep.subr.mxu0 0.0
        %2158 = vmatpush1.msra.mxu0 0.0
        %2159 = vmatprep.subr.mxu0 0.0
        %2160 = vmatpush1.msra.mxu0 0.0
        %2161 = vmatprep.subr.mxu0 0.0
        %2162 = vmatpush1.msra.mxu0 0.0
        %2163 = vmatprep.subr.mxu0 0.0
        %2164 = vmatpush1.msra.mxu0 0.0
        %2165 = vmatprep.subr.mxu0 0.0
        %2166 = vmatpush1.msra.mxu0 0.0
        %2167 = vmatprep.subr.mxu0 0.0
        %2168 = vmatpush1.msra.mxu0 0.0
        %2169 = vmatprep.subr.mxu0 0.0
        %2170 = vmatpush1.msra.mxu0 0.0
        %2171 = vmatprep.subr.mxu0 0.0
        %2172 = vmatpush1.msra.mxu0 0.0
        %2173 = vmatprep.subr.mxu0 0.0
        %2174 = vmatpush1.msra.mxu0 0.0
        %2175 = vmatprep.subr.mxu0 0.0
        %2176 = vmatpush1.msra.mxu0 0.0
        %2177 = vmatprep.subr.mxu0 0.0
        %2178 = vmatpush1.msra.mxu0 0.0
        %2179 = vmatprep.subr.mxu0 0.0
        %2180 = vmatpush1.msra.mxu0 0.0
        %2181 = vmatprep.subr.mxu0 0.0
        %2182 = vmatpush1.msra.mxu0 0.0
        %2183 = vmatprep.mubr.f32.mxu0 0.0
        %2184 = vmatmul.mubr.f32.gmra.mrb[0].mxu0 %v2117
        %v2185 = vpop.f32.mrb[0].mxu0
        %v2186 = vadd.f32 0.0, %v2185
        %v2187 = vpop.f32.mrb[0].mxu0
        %2188 = vdwg.mxu0
        %2190 = vrot.lane.b32.xlu0 %v2034, 8
        %v2191 = vpop.permute.xlu0 %2190
        %2194 = vrot.lane.b32.xlu0 %v2110, 16
        %v2195 = vpop.permute.xlu0 %2194
        %2198 = vrot.lane.b32.xlu0 %v2186, 24
        %v2199 = vpop.permute.xlu0 %2198
        %v2201 = vsel %vm1169, %v1958, %v2191
        %vm2202 = vcmask 130048
        %v2203 = vsel %vm2202, %v2201, %v2195
        %vm2204 = vcmask 195584
        %v2205 = vsel %vm2204, %v2203, %v2199
        %2206 = vrot.lane.b32.xlu0 %v1158, 64
        %v2207 = vpop.permute.xlu0 %2206
        %v2210 = vsel %vm1169, %v1881, 0
        %2212 = vmatprep.subr.mxu0 0.0
        %2213 = vmatpush1.msra.mxu0 %v2207
        %2214 = vmatprep.subr.mxu0 0.0
        %2215 = vmatpush1.msra.mxu0 0.0
        %2216 = vmatprep.subr.mxu0 0.0
        %2217 = vmatpush1.msra.mxu0 0.0
        %2218 = vmatprep.subr.mxu0 0.0
        %2219 = vmatpush1.msra.mxu0 0.0
        %2220 = vmatprep.subr.mxu0 0.0
        %2221 = vmatpush1.msra.mxu0 0.0
        %2222 = vmatprep.subr.mxu0 0.0
        %2223 = vmatpush1.msra.mxu0 0.0
        %2224 = vmatprep.subr.mxu0 0.0
        %2225 = vmatpush1.msra.mxu0 0.0
        %2226 = vmatprep.subr.mxu0 0.0
        %2227 = vmatpush1.msra.mxu0 0.0
        %2228 = vmatprep.subr.mxu0 0.0
        %2229 = vmatpush1.msra.mxu0 0.0
        %2230 = vmatprep.subr.mxu0 0.0
        %2231 = vmatpush1.msra.mxu0 0.0
        %2232 = vmatprep.subr.mxu0 0.0
        %2233 = vmatpush1.msra.mxu0 0.0
        %2234 = vmatprep.subr.mxu0 0.0
        %2235 = vmatpush1.msra.mxu0 0.0
        %2236 = vmatprep.subr.mxu0 0.0
        %2237 = vmatpush1.msra.mxu0 0.0
        %2238 = vmatprep.subr.mxu0 0.0
        %2239 = vmatpush1.msra.mxu0 0.0
        %2240 = vmatprep.subr.mxu0 0.0
        %2241 = vmatpush1.msra.mxu0 0.0
        %2242 = vmatprep.subr.mxu0 0.0
        %2243 = vmatpush1.msra.mxu0 0.0
        %2244 = vmatprep.subr.mxu0 0.0
        %2245 = vmatpush1.msra.mxu0 0.0
        %2246 = vmatprep.subr.mxu0 0.0
        %2247 = vmatpush1.msra.mxu0 0.0
        %2248 = vmatprep.subr.mxu0 0.0
        %2249 = vmatpush1.msra.mxu0 0.0
        %2250 = vmatprep.subr.mxu0 0.0
        %2251 = vmatpush1.msra.mxu0 0.0
        %2252 = vmatprep.subr.mxu0 0.0
        %2253 = vmatpush1.msra.mxu0 0.0
        %2254 = vmatprep.subr.mxu0 0.0
        %2255 = vmatpush1.msra.mxu0 0.0
        %2256 = vmatprep.subr.mxu0 0.0
        %2257 = vmatpush1.msra.mxu0 0.0
        %2258 = vmatprep.subr.mxu0 0.0
        %2259 = vmatpush1.msra.mxu0 0.0
        %2260 = vmatprep.subr.mxu0 0.0
        %2261 = vmatpush1.msra.mxu0 0.0
        %2262 = vmatprep.subr.mxu0 0.0
        %2263 = vmatpush1.msra.mxu0 0.0
        %2264 = vmatprep.subr.mxu0 0.0
        %2265 = vmatpush1.msra.mxu0 0.0
        %2266 = vmatprep.subr.mxu0 0.0
        %2267 = vmatpush1.msra.mxu0 0.0
        %2268 = vmatprep.subr.mxu0 0.0
        %2269 = vmatpush1.msra.mxu0 0.0
        %2270 = vmatprep.subr.mxu0 0.0
        %2271 = vmatpush1.msra.mxu0 0.0
        %2272 = vmatprep.subr.mxu0 0.0
        %2273 = vmatpush1.msra.mxu0 0.0
        %2274 = vmatprep.subr.mxu0 0.0
        %2275 = vmatpush1.msra.mxu0 0.0
        %2276 = vmatprep.mubr.f32.mxu0 0.0
        %2277 = vmatmul.mubr.f32.gmra.mrb[0].mxu0 %v2210
        %v2278 = vpop.f32.mrb[0].mxu0
        %v2279 = vadd.f32 0.0, %v2278
        %v2280 = vpop.f32.mrb[0].mxu0
        %2281 = vdwg.mxu0
        %2282 = vrot.lane.b32.xlu0 %v1158, 56
        %v2283 = vpop.permute.xlu0 %2282
        %v2286 = vsel %vm1169, %v1882, 0
        %2288 = vmatprep.subr.mxu0 0.0
        %2289 = vmatpush1.msra.mxu0 %v2283
        %2290 = vmatprep.subr.mxu0 0.0
        %2291 = vmatpush1.msra.mxu0 0.0
        %2292 = vmatprep.subr.mxu0 0.0
        %2293 = vmatpush1.msra.mxu0 0.0
        %2294 = vmatprep.subr.mxu0 0.0
        %2295 = vmatpush1.msra.mxu0 0.0
        %2296 = vmatprep.subr.mxu0 0.0
        %2297 = vmatpush1.msra.mxu0 0.0
        %2298 = vmatprep.subr.mxu0 0.0
        %2299 = vmatpush1.msra.mxu0 0.0
        %2300 = vmatprep.subr.mxu0 0.0
        %2301 = vmatpush1.msra.mxu0 0.0
        %2302 = vmatprep.subr.mxu0 0.0
        %2303 = vmatpush1.msra.mxu0 0.0
        %2304 = vmatprep.subr.mxu0 0.0
        %2305 = vmatpush1.msra.mxu0 0.0
        %2306 = vmatprep.subr.mxu0 0.0
        %2307 = vmatpush1.msra.mxu0 0.0
        %2308 = vmatprep.subr.mxu0 0.0
        %2309 = vmatpush1.msra.mxu0 0.0
        %2310 = vmatprep.subr.mxu0 0.0
        %2311 = vmatpush1.msra.mxu0 0.0
        %2312 = vmatprep.subr.mxu0 0.0
        %2313 = vmatpush1.msra.mxu0 0.0
        %2314 = vmatprep.subr.mxu0 0.0
        %2315 = vmatpush1.msra.mxu0 0.0
        %2316 = vmatprep.subr.mxu0 0.0
        %2317 = vmatpush1.msra.mxu0 0.0
        %2318 = vmatprep.subr.mxu0 0.0
        %2319 = vmatpush1.msra.mxu0 0.0
        %2320 = vmatprep.subr.mxu0 0.0
        %2321 = vmatpush1.msra.mxu0 0.0
        %2322 = vmatprep.subr.mxu0 0.0
        %2323 = vmatpush1.msra.mxu0 0.0
        %2324 = vmatprep.subr.mxu0 0.0
        %2325 = vmatpush1.msra.mxu0 0.0
        %2326 = vmatprep.subr.mxu0 0.0
        %2327 = vmatpush1.msra.mxu0 0.0
        %2328 = vmatprep.subr.mxu0 0.0
        %2329 = vmatpush1.msra.mxu0 0.0
        %2330 = vmatprep.subr.mxu0 0.0
        %2331 = vmatpush1.msra.mxu0 0.0
        %2332 = vmatprep.subr.mxu0 0.0
        %2333 = vmatpush1.msra.mxu0 0.0
        %2334 = vmatprep.subr.mxu0 0.0
        %2335 = vmatpush1.msra.mxu0 0.0
        %2336 = vmatprep.subr.mxu0 0.0
        %2337 = vmatpush1.msra.mxu0 0.0
        %2338 = vmatprep.subr.mxu0 0.0
        %2339 = vmatpush1.msra.mxu0 0.0
        %2340 = vmatprep.subr.mxu0 0.0
        %2341 = vmatpush1.msra.mxu0 0.0
        %2342 = vmatprep.subr.mxu0 0.0
        %2343 = vmatpush1.msra.mxu0 0.0
        %2344 = vmatprep.subr.mxu0 0.0
        %2345 = vmatpush1.msra.mxu0 0.0
        %2346 = vmatprep.subr.mxu0 0.0
        %2347 = vmatpush1.msra.mxu0 0.0
        %2348 = vmatprep.subr.mxu0 0.0
        %2349 = vmatpush1.msra.mxu0 0.0
        %2350 = vmatprep.subr.mxu0 0.0
        %2351 = vmatpush1.msra.mxu0 0.0
        %2352 = vmatprep.mubr.f32.mxu0 0.0
        %2353 = vmatmul.mubr.f32.gmra.mrb[0].mxu0 %v2286
        %v2354 = vpop.f32.mrb[0].mxu0
        %v2355 = vadd.f32 0.0, %v2354
        %v2356 = vpop.f32.mrb[0].mxu0
        %2357 = vdwg.mxu0
        %2358 = vrot.lane.b32.xlu0 %v1158, 48
        %v2359 = vpop.permute.xlu0 %2358
        %v2362 = vsel %vm1169, %v1883, 0
        %2364 = vmatprep.subr.mxu0 0.0
        %2365 = vmatpush1.msra.mxu0 %v2359
        %2366 = vmatprep.subr.mxu0 0.0
        %2367 = vmatpush1.msra.mxu0 0.0
        %2368 = vmatprep.subr.mxu0 0.0
        %2369 = vmatpush1.msra.mxu0 0.0
        %2370 = vmatprep.subr.mxu0 0.0
        %2371 = vmatpush1.msra.mxu0 0.0
        %2372 = vmatprep.subr.mxu0 0.0
        %2373 = vmatpush1.msra.mxu0 0.0
        %2374 = vmatprep.subr.mxu0 0.0
        %2375 = vmatpush1.msra.mxu0 0.0
        %2376 = vmatprep.subr.mxu0 0.0
        %2377 = vmatpush1.msra.mxu0 0.0
        %2378 = vmatprep.subr.mxu0 0.0
        %2379 = vmatpush1.msra.mxu0 0.0
        %2380 = vmatprep.subr.mxu0 0.0
        %2381 = vmatpush1.msra.mxu0 0.0
        %2382 = vmatprep.subr.mxu0 0.0
        %2383 = vmatpush1.msra.mxu0 0.0
        %2384 = vmatprep.subr.mxu0 0.0
        %2385 = vmatpush1.msra.mxu0 0.0
        %2386 = vmatprep.subr.mxu0 0.0
        %2387 = vmatpush1.msra.mxu0 0.0
        %2388 = vmatprep.subr.mxu0 0.0
        %2389 = vmatpush1.msra.mxu0 0.0
        %2390 = vmatprep.subr.mxu0 0.0
        %2391 = vmatpush1.msra.mxu0 0.0
        %2392 = vmatprep.subr.mxu0 0.0
        %2393 = vmatpush1.msra.mxu0 0.0
        %2394 = vmatprep.subr.mxu0 0.0
        %2395 = vmatpush1.msra.mxu0 0.0
        %2396 = vmatprep.subr.mxu0 0.0
        %2397 = vmatpush1.msra.mxu0 0.0
        %2398 = vmatprep.subr.mxu0 0.0
        %2399 = vmatpush1.msra.mxu0 0.0
        %2400 = vmatprep.subr.mxu0 0.0
        %2401 = vmatpush1.msra.mxu0 0.0
        %2402 = vmatprep.subr.mxu0 0.0
        %2403 = vmatpush1.msra.mxu0 0.0
        %2404 = vmatprep.subr.mxu0 0.0
        %2405 = vmatpush1.msra.mxu0 0.0
        %2406 = vmatprep.subr.mxu0 0.0
        %2407 = vmatpush1.msra.mxu0 0.0
        %2408 = vmatprep.subr.mxu0 0.0
        %2409 = vmatpush1.msra.mxu0 0.0
        %2410 = vmatprep.subr.mxu0 0.0
        %2411 = vmatpush1.msra.mxu0 0.0
        %2412 = vmatprep.subr.mxu0 0.0
        %2413 = vmatpush1.msra.mxu0 0.0
        %2414 = vmatprep.subr.mxu0 0.0
        %2415 = vmatpush1.msra.mxu0 0.0
        %2416 = vmatprep.subr.mxu0 0.0
        %2417 = vmatpush1.msra.mxu0 0.0
        %2418 = vmatprep.subr.mxu0 0.0
        %2419 = vmatpush1.msra.mxu0 0.0
        %2420 = vmatprep.subr.mxu0 0.0
        %2421 = vmatpush1.msra.mxu0 0.0
        %2422 = vmatprep.subr.mxu0 0.0
        %2423 = vmatpush1.msra.mxu0 0.0
        %2424 = vmatprep.subr.mxu0 0.0
        %2425 = vmatpush1.msra.mxu0 0.0
        %2426 = vmatprep.subr.mxu0 0.0
        %2427 = vmatpush1.msra.mxu0 0.0
        %2428 = vmatprep.mubr.f32.mxu0 0.0
        %2429 = vmatmul.mubr.f32.gmra.mrb[0].mxu0 %v2362
        %v2430 = vpop.f32.mrb[0].mxu0
        %v2431 = vadd.f32 0.0, %v2430
        %v2432 = vpop.f32.mrb[0].mxu0
        %2433 = vdwg.mxu0
        %2434 = vrot.lane.b32.xlu0 %v1158, 40
        %v2435 = vpop.permute.xlu0 %2434
        %v2438 = vsel %vm1169, %v1884, 0
        %2440 = vmatprep.subr.mxu0 0.0
        %2441 = vmatpush1.msra.mxu0 %v2435
        %2442 = vmatprep.subr.mxu0 0.0
        %2443 = vmatpush1.msra.mxu0 0.0
        %2444 = vmatprep.subr.mxu0 0.0
        %2445 = vmatpush1.msra.mxu0 0.0
        %2446 = vmatprep.subr.mxu0 0.0
        %2447 = vmatpush1.msra.mxu0 0.0
        %2448 = vmatprep.subr.mxu0 0.0
        %2449 = vmatpush1.msra.mxu0 0.0
        %2450 = vmatprep.subr.mxu0 0.0
        %2451 = vmatpush1.msra.mxu0 0.0
        %2452 = vmatprep.subr.mxu0 0.0
        %2453 = vmatpush1.msra.mxu0 0.0
        %2454 = vmatprep.subr.mxu0 0.0
        %2455 = vmatpush1.msra.mxu0 0.0
        %2456 = vmatprep.subr.mxu0 0.0
        %2457 = vmatpush1.msra.mxu0 0.0
        %2458 = vmatprep.subr.mxu0 0.0
        %2459 = vmatpush1.msra.mxu0 0.0
        %2460 = vmatprep.subr.mxu0 0.0
        %2461 = vmatpush1.msra.mxu0 0.0
        %2462 = vmatprep.subr.mxu0 0.0
        %2463 = vmatpush1.msra.mxu0 0.0
        %2464 = vmatprep.subr.mxu0 0.0
        %2465 = vmatpush1.msra.mxu0 0.0
        %2466 = vmatprep.subr.mxu0 0.0
        %2467 = vmatpush1.msra.mxu0 0.0
        %2468 = vmatprep.subr.mxu0 0.0
        %2469 = vmatpush1.msra.mxu0 0.0
        %2470 = vmatprep.subr.mxu0 0.0
        %2471 = vmatpush1.msra.mxu0 0.0
        %2472 = vmatprep.subr.mxu0 0.0
        %2473 = vmatpush1.msra.mxu0 0.0
        %2474 = vmatprep.subr.mxu0 0.0
        %2475 = vmatpush1.msra.mxu0 0.0
        %2476 = vmatprep.subr.mxu0 0.0
        %2477 = vmatpush1.msra.mxu0 0.0
        %2478 = vmatprep.subr.mxu0 0.0
        %2479 = vmatpush1.msra.mxu0 0.0
        %2480 = vmatprep.subr.mxu0 0.0
        %2481 = vmatpush1.msra.mxu0 0.0
        %2482 = vmatprep.subr.mxu0 0.0
        %2483 = vmatpush1.msra.mxu0 0.0
        %2484 = vmatprep.subr.mxu0 0.0
        %2485 = vmatpush1.msra.mxu0 0.0
        %2486 = vmatprep.subr.mxu0 0.0
        %2487 = vmatpush1.msra.mxu0 0.0
        %2488 = vmatprep.subr.mxu0 0.0
        %2489 = vmatpush1.msra.mxu0 0.0
        %2490 = vmatprep.subr.mxu0 0.0
        %2491 = vmatpush1.msra.mxu0 0.0
        %2492 = vmatprep.subr.mxu0 0.0
        %2493 = vmatpush1.msra.mxu0 0.0
        %2494 = vmatprep.subr.mxu0 0.0
        %2495 = vmatpush1.msra.mxu0 0.0
        %2496 = vmatprep.subr.mxu0 0.0
        %2497 = vmatpush1.msra.mxu0 0.0
        %2498 = vmatprep.subr.mxu0 0.0
        %2499 = vmatpush1.msra.mxu0 0.0
        %2500 = vmatprep.subr.mxu0 0.0
        %2501 = vmatpush1.msra.mxu0 0.0
        %2502 = vmatprep.subr.mxu0 0.0
        %2503 = vmatpush1.msra.mxu0 0.0
        %2504 = vmatprep.mubr.f32.mxu0 0.0
        %2505 = vmatmul.mubr.f32.gmra.mrb[0].mxu0 %v2438
        %v2506 = vpop.f32.mrb[0].mxu0
        %v2507 = vadd.f32 0.0, %v2506
        %v2508 = vpop.f32.mrb[0].mxu0
        %2509 = vdwg.mxu0
        %2511 = vrot.lane.b32.xlu0 %v2355, 8
        %v2512 = vpop.permute.xlu0 %2511
        %2515 = vrot.lane.b32.xlu0 %v2431, 16
        %v2516 = vpop.permute.xlu0 %2515
        %2519 = vrot.lane.b32.xlu0 %v2507, 24
        %v2520 = vpop.permute.xlu0 %2519
        %v2522 = vsel %vm1169, %v2279, %v2512
        %v2523 = vsel %vm2202, %v2522, %v2516
        %v2524 = vsel %vm2204, %v2523, %v2520
        %v2526 = vlaneseq
        %v2527 = vshrl.u32 %v2526, 7
        %v2528 = vsub.s32 0, %v2527
        %v2529 = vrot.slane %v1165, %v2528
        %v2532 = vsel %vm1079, %v2205, 0
        %v2535 = vsel %vm1079, %v2524, 0
        %2537 = vmatprep.subr.mxu0 0.0
        %2538 = vmatpush1.msra.mxu0 %v1161
        %2539 = vmatprep.subr.mxu0 0.0
        %2540 = vmatpush1.msra.mxu0 %v1162
        %2541 = vmatprep.subr.mxu0 0.0
        %2542 = vmatpush1.msra.mxu0 %v1163
        %2543 = vmatprep.subr.mxu0 0.0
        %2544 = vmatpush1.msra.mxu0 %v1164
        %2545 = vmatprep.subr.mxu0 0.0
        %2546 = vmatpush1.msra.mxu0 0.0
        %2547 = vmatprep.subr.mxu0 0.0
        %2548 = vmatpush1.msra.mxu0 0.0
        %2549 = vmatprep.subr.mxu0 0.0
        %2550 = vmatpush1.msra.mxu0 0.0
        %2551 = vmatprep.subr.mxu0 0.0
        %2552 = vmatpush1.msra.mxu0 0.0
        %2553 = vmatprep.subr.mxu0 0.0
        %2554 = vmatpush1.msra.mxu0 0.0
        %2555 = vmatprep.subr.mxu0 0.0
        %2556 = vmatpush1.msra.mxu0 0.0
        %2557 = vmatprep.subr.mxu0 0.0
        %2558 = vmatpush1.msra.mxu0 0.0
        %2559 = vmatprep.subr.mxu0 0.0
        %2560 = vmatpush1.msra.mxu0 0.0
        %2561 = vmatprep.subr.mxu0 0.0
        %2562 = vmatpush1.msra.mxu0 0.0
        %2563 = vmatprep.subr.mxu0 0.0
        %2564 = vmatpush1.msra.mxu0 0.0
        %2565 = vmatprep.subr.mxu0 0.0
        %2566 = vmatpush1.msra.mxu0 0.0
        %2567 = vmatprep.subr.mxu0 0.0
        %2568 = vmatpush1.msra.mxu0 0.0
        %2569 = vmatprep.subr.mxu0 0.0
        %2570 = vmatpush1.msra.mxu0 0.0
        %2571 = vmatprep.subr.mxu0 0.0
        %2572 = vmatpush1.msra.mxu0 0.0
        %2573 = vmatprep.subr.mxu0 0.0
        %2574 = vmatpush1.msra.mxu0 0.0
        %2575 = vmatprep.subr.mxu0 0.0
        %2576 = vmatpush1.msra.mxu0 0.0
        %2577 = vmatprep.subr.mxu0 0.0
        %2578 = vmatpush1.msra.mxu0 0.0
        %2579 = vmatprep.subr.mxu0 0.0
        %2580 = vmatpush1.msra.mxu0 0.0
        %2581 = vmatprep.subr.mxu0 0.0
        %2582 = vmatpush1.msra.mxu0 0.0
        %2583 = vmatprep.subr.mxu0 0.0
        %2584 = vmatpush1.msra.mxu0 0.0
        %2585 = vmatprep.subr.mxu0 0.0
        %2586 = vmatpush1.msra.mxu0 0.0
        %2587 = vmatprep.subr.mxu0 0.0
        %2588 = vmatpush1.msra.mxu0 0.0
        %2589 = vmatprep.subr.mxu0 0.0
        %2590 = vmatpush1.msra.mxu0 0.0
        %2591 = vmatprep.subr.mxu0 0.0
        %2592 = vmatpush1.msra.mxu0 0.0
        %2593 = vmatprep.subr.mxu0 0.0
        %2594 = vmatpush1.msra.mxu0 0.0
        %2595 = vmatprep.subr.mxu0 0.0
        %2596 = vmatpush1.msra.mxu0 0.0
        %2597 = vmatprep.subr.mxu0 0.0
        %2598 = vmatpush1.msra.mxu0 0.0
        %2599 = vmatprep.subr.mxu0 0.0
        %2600 = vmatpush1.msra.mxu0 0.0
        %2601 = vmatprep.mubr.f32.mxu0 0.0
        %2602 = vmatmul.mubr.f32.gmra.mrb[0].mxu0 %v2532
        %v2603 = vpop.f32.mrb[0].mxu0
        %v2604 = vadd.f32 %v2529, %v2603
        %v2605 = vpop.f32.mrb[0].mxu0
        %2606 = vmatprep.mubr.f32.mxu0 0.0
        %2607 = vmatmul.mubr.f32.gmra.mrb[0].mxu0 %v2535
        %v2608 = vpop.f32.mrb[0].mxu0
        %v2609 = vadd.f32 %v2529, %v2608
        %v2610 = vpop.f32.mrb[0].mxu0
        %2611 = vdwg.mxu0
        %v2612 = vadd.f32 %v1062, %v2604
        %v2613 = vadd.f32 %v1063, %v2609
        %v2614 = vld [vmem:[%s1037] sm:$0x1]
        %v2615 = vld [vmem:[%s1040] sm:$0x1]
        %v2616 = vsel %vm1079, %v2612, 0.0
        %2617 = vadd.xlane.f32.xlu0 %v2616
        %v2618 = vpop.xlane.xlu0 %2617
        %v2619 = vsel %vm1079, %v2613, 0.0
        %2620 = vadd.xlane.f32.xlu0 %v2619
        %v2621 = vpop.xlane.xlu0 %2620
        %v2622 = vrcp.pop 32.0
        %v2623 = vmul.f32 %v2618, %v2622
        %v2624 = vmul.f32 %v2621, %v2622
        %v2625 = vsub.f32 %v2612, %v2623
        %v2626 = vsub.f32 %v2613, %v2624
        %v2627 = vmul.f32 %v2625, %v2625
        %v2628 = vmul.f32 %v2626, %v2626
        %v2629 = vsel %vm1079, %v2627, 0.0
        %2630 = vadd.xlane.f32.xlu0 %v2629
        %v2631 = vpop.xlane.xlu0 %2630
        %v2632 = vsel %vm1079, %v2628, 0.0
        %2633 = vadd.xlane.f32.xlu0 %v2632
        %v2634 = vpop.xlane.xlu0 %2633
        %v2635 = vmul.f32 %v2631, %v2622
        %v2636 = vmul.f32 %v2634, %v2622
        %v2637 = vadd.f32 %v2635, 1e-05
        %v2638 = vadd.f32 %v2636, 1e-05
        %v2639 = vrsqrt.pop %v2637
        %v2640 = vrsqrt.pop %v2638
        %v2641 = vmul.f32 %v2625, %v2639
        %v2642 = vmul.f32 %v2626, %v2640
        %v2644 = vlaneseq
        %v2645 = vshrl.u32 %v2644, 7
        %v2646 = vsub.s32 0, %v2645
        %v2647 = vrot.slane %v2614, %v2646
        %v2649 = vmul.f32 %v2641, %v2647
        %v2650 = vmul.f32 %v2642, %v2647
        %v2652 = vlaneseq
        %v2653 = vshrl.u32 %v2652, 7
        %v2654 = vsub.s32 0, %v2653
        %v2655 = vrot.slane %v2615, %v2654
        %v2657 = vadd.f32 %v2649, %v2655
        %v2658 = vadd.f32 %v2650, %v2655
        %v2659 = vld [vmem:[%s1014] sm:$0xff]
        %v2660 = vld [vmem:[%s1014 + $0x8] sm:$0xff]
        %v2661 = vld [vmem:[%s1014 + $0x10] sm:$0xff]
        %v2662 = vld [vmem:[%s1014 + $0x18] sm:$0xff]
        %v2663 = vld [vmem:[%s1017] sm:$0x1]
        %v2665 = vlaneseq
        %v2666 = vshrl.u32 %v2665, 7
        %v2667 = vsub.s32 0, %v2666
        %v2668 = vrot.slane %v2663, %v2667
        %v2671 = vsel %vm1079, %v2657, 0
        %v2674 = vsel %vm1079, %v2658, 0
        %2676 = vmatprep.subr.mxu0 0.0
        %2677 = vmatpush1.msra.mxu0 %v2659
        %2678 = vmatprep.subr.mxu0 0.0
        %2679 = vmatpush1.msra.mxu0 %v2660
        %2680 = vmatprep.subr.mxu0 0.0
        %2681 = vmatpush1.msra.mxu0 %v2661
        %2682 = vmatprep.subr.mxu0 0.0
        %2683 = vmatpush1.msra.mxu0 %v2662
        %2684 = vmatprep.subr.mxu0 0.0
        %2685 = vmatpush1.msra.mxu0 0.0
        %2686 = vmatprep.subr.mxu0 0.0
        %2687 = vmatpush1.msra.mxu0 0.0
        %2688 = vmatprep.subr.mxu0 0.0
        %2689 = vmatpush1.msra.mxu0 0.0
        %2690 = vmatprep.subr.mxu0 0.0
        %2691 = vmatpush1.msra.mxu0 0.0
        %2692 = vmatprep.subr.mxu0 0.0
        %2693 = vmatpush1.msra.mxu0 0.0
        %2694 = vmatprep.subr.mxu0 0.0
        %2695 = vmatpush1.msra.mxu0 0.0
        %2696 = vmatprep.subr.mxu0 0.0
        %2697 = vmatpush1.msra.mxu0 0.0
        %2698 = vmatprep.subr.mxu0 0.0
        %2699 = vmatpush1.msra.mxu0 0.0
        %2700 = vmatprep.subr.mxu0 0.0
        %2701 = vmatpush1.msra.mxu0 0.0
        %2702 = vmatprep.subr.mxu0 0.0
        %2703 = vmatpush1.msra.mxu0 0.0
        %2704 = vmatprep.subr.mxu0 0.0
        %2705 = vmatpush1.msra.mxu0 0.0
        %2706 = vmatprep.subr.mxu0 0.0
        %2707 = vmatpush1.msra.mxu0 0.0
        %2708 = vmatprep.subr.mxu0 0.0
        %2709 = vmatpush1.msra.mxu0 0.0
        %2710 = vmatprep.subr.mxu0 0.0
        %2711 = vmatpush1.msra.mxu0 0.0
        %2712 = vmatprep.subr.mxu0 0.0
        %2713 = vmatpush1.msra.mxu0 0.0
        %2714 = vmatprep.subr.mxu0 0.0
        %2715 = vmatpush1.msra.mxu0 0.0
        %2716 = vmatprep.subr.mxu0 0.0
        %2717 = vmatpush1.msra.mxu0 0.0
        %2718 = vmatprep.subr.mxu0 0.0
        %2719 = vmatpush1.msra.mxu0 0.0
        %2720 = vmatprep.subr.mxu0 0.0
        %2721 = vmatpush1.msra.mxu0 0.0
        %2722 = vmatprep.subr.mxu0 0.0
        %2723 = vmatpush1.msra.mxu0 0.0
        %2724 = vmatprep.subr.mxu0 0.0
        %2725 = vmatpush1.msra.mxu0 0.0
        %2726 = vmatprep.subr.mxu0 0.0
        %2727 = vmatpush1.msra.mxu0 0.0
        %2728 = vmatprep.subr.mxu0 0.0
        %2729 = vmatpush1.msra.mxu0 0.0
        %2730 = vmatprep.subr.mxu0 0.0
        %2731 = vmatpush1.msra.mxu0 0.0
        %2732 = vmatprep.subr.mxu0 0.0
        %2733 = vmatpush1.msra.mxu0 0.0
        %2734 = vmatprep.subr.mxu0 0.0
        %2735 = vmatpush1.msra.mxu0 0.0
        %2736 = vmatprep.subr.mxu0 0.0
        %2737 = vmatpush1.msra.mxu0 0.0
        %2738 = vmatprep.subr.mxu0 0.0
        %2739 = vmatpush1.msra.mxu0 0.0
        %2740 = vmatprep.mubr.f32.mxu0 0.0
        %2741 = vmatmul.mubr.f32.gmra.mrb[0].mxu0 %v2671
        %v2742 = vpop.f32.mrb[0].mxu0
        %v2743 = vadd.f32 %v2668, %v2742
        %v2744 = vpop.f32.mrb[0].mxu0
        %2745 = vmatprep.mubr.f32.mxu0 0.0
        %2746 = vmatmul.mubr.f32.gmra.mrb[0].mxu0 %v2674
        %v2747 = vpop.f32.mrb[0].mxu0
        %v2748 = vadd.f32 %v2668, %v2747
        %v2749 = vpop.f32.mrb[0].mxu0
        %2750 = vdwg.mxu0
        %v2751 = vld [vmem:[%s851] sm:$0xff]
        %v2752 = vld [vmem:[%s851 + $0x8] sm:$0xff]
        %v2753 = vld [vmem:[%s851 + $0x10] sm:$0xff]
        %v2754 = vld [vmem:[%s851 + $0x18] sm:$0xff]
        %v2755 = vld [vmem:[%s1020] sm:$0x1]
        %v2757 = vlaneseq
        %v2758 = vshrl.u32 %v2757, 7
        %v2759 = vsub.s32 0, %v2758
        %v2760 = vrot.slane %v2755, %v2759
        %v2763 = vsel %vm1079, %v1064, 0
        %v2766 = vsel %vm1079, %v1065, 0
        %v2769 = vsel %vm1079, %v1066, 0
        %v2772 = vsel %vm1079, %v1067, 0
        %2774 = vmatprep.subr.mxu0 0.0
        %2775 = vmatpush1.msra.mxu0 %v2751
        %2776 = vmatprep.subr.mxu0 0.0
        %2777 = vmatpush1.msra.mxu0 %v2752
        %2778 = vmatprep.subr.mxu0 0.0
        %2779 = vmatpush1.msra.mxu0 %v2753
        %2780 = vmatprep.subr.mxu0 0.0
        %2781 = vmatpush1.msra.mxu0 %v2754
        %2782 = vmatprep.subr.mxu0 0.0
        %2783 = vmatpush1.msra.mxu0 0.0
        %2784 = vmatprep.subr.mxu0 0.0
        %2785 = vmatpush1.msra.mxu0 0.0
        %2786 = vmatprep.subr.mxu0 0.0
        %2787 = vmatpush1.msra.mxu0 0.0
        %2788 = vmatprep.subr.mxu0 0.0
        %2789 = vmatpush1.msra.mxu0 0.0
        %2790 = vmatprep.subr.mxu0 0.0
        %2791 = vmatpush1.msra.mxu0 0.0
        %2792 = vmatprep.subr.mxu0 0.0
        %2793 = vmatpush1.msra.mxu0 0.0
        %2794 = vmatprep.subr.mxu0 0.0
        %2795 = vmatpush1.msra.mxu0 0.0
        %2796 = vmatprep.subr.mxu0 0.0
        %2797 = vmatpush1.msra.mxu0 0.0
        %2798 = vmatprep.subr.mxu0 0.0
        %2799 = vmatpush1.msra.mxu0 0.0
        %2800 = vmatprep.subr.mxu0 0.0
        %2801 = vmatpush1.msra.mxu0 0.0
        %2802 = vmatprep.subr.mxu0 0.0
        %2803 = vmatpush1.msra.mxu0 0.0
        %2804 = vmatprep.subr.mxu0 0.0
        %2805 = vmatpush1.msra.mxu0 0.0
        %2806 = vmatprep.subr.mxu0 0.0
        %2807 = vmatpush1.msra.mxu0 0.0
        %2808 = vmatprep.subr.mxu0 0.0
        %2809 = vmatpush1.msra.mxu0 0.0
        %2810 = vmatprep.subr.mxu0 0.0
        %2811 = vmatpush1.msra.mxu0 0.0
        %2812 = vmatprep.subr.mxu0 0.0
        %2813 = vmatpush1.msra.mxu0 0.0
        %2814 = vmatprep.subr.mxu0 0.0
        %2815 = vmatpush1.msra.mxu0 0.0
        %2816 = vmatprep.subr.mxu0 0.0
        %2817 = vmatpush1.msra.mxu0 0.0
        %2818 = vmatprep.subr.mxu0 0.0
        %2819 = vmatpush1.msra.mxu0 0.0
        %2820 = vmatprep.subr.mxu0 0.0
        %2821 = vmatpush1.msra.mxu0 0.0
        %2822 = vmatprep.subr.mxu0 0.0
        %2823 = vmatpush1.msra.mxu0 0.0
        %2824 = vmatprep.subr.mxu0 0.0
        %2825 = vmatpush1.msra.mxu0 0.0
        %2826 = vmatprep.subr.mxu0 0.0
        %2827 = vmatpush1.msra.mxu0 0.0
        %2828 = vmatprep.subr.mxu0 0.0
        %2829 = vmatpush1.msra.mxu0 0.0
        %2830 = vmatprep.subr.mxu0 0.0
        %2831 = vmatpush1.msra.mxu0 0.0
        %2832 = vmatprep.subr.mxu0 0.0
        %2833 = vmatpush1.msra.mxu0 0.0
        %2834 = vmatprep.subr.mxu0 0.0
        %2835 = vmatpush1.msra.mxu0 0.0
        %2836 = vmatprep.subr.mxu0 0.0
        %2837 = vmatpush1.msra.mxu0 0.0
        %2838 = vmatprep.mubr.f32.mxu0 0.0
        %2839 = vmatmul.mubr.f32.gmra.mrb[0].mxu0 %v2763
        %v2840 = vpop.f32.mrb[0].mxu0
        %v2841 = vadd.f32 %v2760, %v2840
        %v2842 = vpop.f32.mrb[0].mxu0
        %2843 = vmatprep.mubr.f32.mxu0 0.0
        %2844 = vmatmul.mubr.f32.gmra.mrb[0].mxu0 %v2766
        %v2845 = vpop.f32.mrb[0].mxu0
        %v2846 = vadd.f32 %v2760, %v2845
        %v2847 = vpop.f32.mrb[0].mxu0
        %2848 = vmatprep.mubr.f32.mxu0 0.0
        %2849 = vmatmul.mubr.f32.gmra.mrb[0].mxu0 %v2769
        %v2850 = vpop.f32.mrb[0].mxu0
        %v2851 = vadd.f32 %v2760, %v2850
        %v2852 = vpop.f32.mrb[0].mxu0
        %2853 = vmatprep.mubr.f32.mxu0 0.0
        %2854 = vmatmul.mubr.f32.gmra.mrb[0].mxu0 %v2772
        %v2855 = vpop.f32.mrb[0].mxu0
        %v2856 = vadd.f32 %v2760, %v2855
        %v2857 = vpop.f32.mrb[0].mxu0
        %2858 = vdwg.mxu0
        %v2859 = vld [vmem:[%s860] sm:$0xff]
        %v2860 = vld [vmem:[%s860 + $0x8] sm:$0xff]
        %v2861 = vld [vmem:[%s860 + $0x10] sm:$0xff]
        %v2862 = vld [vmem:[%s860 + $0x18] sm:$0xff]
        %v2863 = vld [vmem:[%s1023] sm:$0x1]
        %v2865 = vsel %vm1169, %v2743, 0
        %v2868 = vsel %vm1169, %v2841, 0
        %v2871 = vsel %vm1169, %v2846, 0
        %2873 = vmatprep.subr.mxu0 0.0
        %2874 = vmatpush1.xpose.msra.mxu0 %v2868
        %2875 = vmatprep.subr.mxu0 0.0
        %2876 = vmatpush1.xpose.msra.mxu0 %v2871
        %2877 = vmatprep.subr.mxu0 0.0
        %2878 = vmatpush1.xpose.msra.mxu0 0.0
        %2879 = vmatprep.subr.mxu0 0.0
        %2880 = vmatpush1.xpose.msra.mxu0 0.0
        %2881 = vmatprep.subr.mxu0 0.0
        %2882 = vmatpush1.xpose.msra.mxu0 0.0
        %2883 = vmatprep.subr.mxu0 0.0
        %2884 = vmatpush1.xpose.msra.mxu0 0.0
        %2885 = vmatprep.subr.mxu0 0.0
        %2886 = vmatpush1.xpose.msra.mxu0 0.0
        %2887 = vmatprep.subr.mxu0 0.0
        %2888 = vmatpush1.xpose.msra.mxu0 0.0
        %2889 = vmatprep.subr.mxu0 0.0
        %2890 = vmatpush1.xpose.msra.mxu0 0.0
        %2891 = vmatprep.subr.mxu0 0.0
        %2892 = vmatpush1.xpose.msra.mxu0 0.0
        %2893 = vmatprep.subr.mxu0 0.0
        %2894 = vmatpush1.xpose.msra.mxu0 0.0
        %2895 = vmatprep.subr.mxu0 0.0
        %2896 = vmatpush1.xpose.msra.mxu0 0.0
        %2897 = vmatprep.subr.mxu0 0.0
        %2898 = vmatpush1.xpose.msra.mxu0 0.0
        %2899 = vmatprep.subr.mxu0 0.0
        %2900 = vmatpush1.xpose.msra.mxu0 0.0
        %2901 = vmatprep.subr.mxu0 0.0
        %2902 = vmatpush1.xpose.msra.mxu0 0.0
        %2903 = vmatprep.subr.mxu0 0.0
        %2904 = vmatpush1.xpose.msra.mxu0 0.0
        %2905 = vmatprep.subr.mxu0 0.0
        %2906 = vmatpush1.xpose.msra.mxu0 0.0
        %2907 = vmatprep.subr.mxu0 0.0
        %2908 = vmatpush1.xpose.msra.mxu0 0.0
        %2909 = vmatprep.subr.mxu0 0.0
        %2910 = vmatpush1.xpose.msra.mxu0 0.0
        %2911 = vmatprep.subr.mxu0 0.0
        %2912 = vmatpush1.xpose.msra.mxu0 0.0
        %2913 = vmatprep.subr.mxu0 0.0
        %2914 = vmatpush1.xpose.msra.mxu0 0.0
        %2915 = vmatprep.subr.mxu0 0.0
        %2916 = vmatpush1.xpose.msra.mxu0 0.0
        %2917 = vmatprep.subr.mxu0 0.0
        %2918 = vmatpush1.xpose.msra.mxu0 0.0
        %2919 = vmatprep.subr.mxu0 0.0
        %2920 = vmatpush1.xpose.msra.mxu0 0.0
        %2921 = vmatprep.subr.mxu0 0.0
        %2922 = vmatpush1.xpose.msra.mxu0 0.0
        %2923 = vmatprep.subr.mxu0 0.0
        %2924 = vmatpush1.xpose.msra.mxu0 0.0
        %2925 = vmatprep.subr.mxu0 0.0
        %2926 = vmatpush1.xpose.msra.mxu0 0.0
        %2927 = vmatprep.subr.mxu0 0.0
        %2928 = vmatpush1.xpose.msra.mxu0 0.0
        %2929 = vmatprep.subr.mxu0 0.0
        %2930 = vmatpush1.xpose.msra.mxu0 0.0
        %2931 = vmatprep.subr.mxu0 0.0
        %2932 = vmatpush1.xpose.msra.mxu0 0.0
        %2933 = vmatprep.subr.mxu0 0.0
        %2934 = vmatpush1.xpose.msra.mxu0 0.0
        %2935 = vmatprep.subr.mxu0 0.0
        %2936 = vmatpush1.xpose.msra.mxu0 0.0
        %2937 = vmatprep.mubr.f32.mxu0 0.0
        %2938 = vmatmul.mubr.f32.gmra.mrb[0].mxu0 %v2865
        %v2939 = vpop.f32.mrb[0].mxu0
        %v2940 = vadd.f32 0.0, %v2939
        %v2941 = vpop.f32.mrb[0].mxu0
        %2942 = vdwg.mxu0
        %2943 = vrot.lane.b32.xlu0 %v2743, 120
        %v2944 = vpop.permute.xlu0 %2943
        %2945 = vrot.lane.b32.xlu0 %v2841, 120
        %v2946 = vpop.permute.xlu0 %2945
        %2947 = vrot.lane.b32.xlu0 %v2846, 120
        %v2948 = vpop.permute.xlu0 %2947
        %v2949 = vsel %vm1169, %v2944, 0
        %v2951 = vsel %vm1169, %v2946, 0
        %v2953 = vsel %vm1169, %v2948, 0
        %2955 = vmatprep.subr.mxu0 0.0
        %2956 = vmatpush1.xpose.msra.mxu0 %v2951
        %2957 = vmatprep.subr.mxu0 0.0
        %2958 = vmatpush1.xpose.msra.mxu0 %v2953
        %2959 = vmatprep.subr.mxu0 0.0
        %2960 = vmatpush1.xpose.msra.mxu0 0.0
        %2961 = vmatprep.subr.mxu0 0.0
        %2962 = vmatpush1.xpose.msra.mxu0 0.0
        %2963 = vmatprep.subr.mxu0 0.0
        %2964 = vmatpush1.xpose.msra.mxu0 0.0
        %2965 = vmatprep.subr.mxu0 0.0
        %2966 = vmatpush1.xpose.msra.mxu0 0.0
        %2967 = vmatprep.subr.mxu0 0.0
        %2968 = vmatpush1.xpose.msra.mxu0 0.0
        %2969 = vmatprep.subr.mxu0 0.0
        %2970 = vmatpush1.xpose.msra.mxu0 0.0
        %2971 = vmatprep.subr.mxu0 0.0
        %2972 = vmatpush1.xpose.msra.mxu0 0.0
        %2973 = vmatprep.subr.mxu0 0.0
        %2974 = vmatpush1.xpose.msra.mxu0 0.0
        %2975 = vmatprep.subr.mxu0 0.0
        %2976 = vmatpush1.xpose.msra.mxu0 0.0
        %2977 = vmatprep.subr.mxu0 0.0
        %2978 = vmatpush1.xpose.msra.mxu0 0.0
        %2979 = vmatprep.subr.mxu0 0.0
        %2980 = vmatpush1.xpose.msra.mxu0 0.0
        %2981 = vmatprep.subr.mxu0 0.0
        %2982 = vmatpush1.xpose.msra.mxu0 0.0
        %2983 = vmatprep.subr.mxu0 0.0
        %2984 = vmatpush1.xpose.msra.mxu0 0.0
        %2985 = vmatprep.subr.mxu0 0.0
        %2986 = vmatpush1.xpose.msra.mxu0 0.0
        %2987 = vmatprep.subr.mxu0 0.0
        %2988 = vmatpush1.xpose.msra.mxu0 0.0
        %2989 = vmatprep.subr.mxu0 0.0
        %2990 = vmatpush1.xpose.msra.mxu0 0.0
        %2991 = vmatprep.subr.mxu0 0.0
        %2992 = vmatpush1.xpose.msra.mxu0 0.0
        %2993 = vmatprep.subr.mxu0 0.0
        %2994 = vmatpush1.xpose.msra.mxu0 0.0
        %2995 = vmatprep.subr.mxu0 0.0
        %2996 = vmatpush1.xpose.msra.mxu0 0.0
        %2997 = vmatprep.subr.mxu0 0.0
        %2998 = vmatpush1.xpose.msra.mxu0 0.0
        %2999 = vmatprep.subr.mxu0 0.0
        %3000 = vmatpush1.xpose.msra.mxu0 0.0
        %3001 = vmatprep.subr.mxu0 0.0
        %3002 = vmatpush1.xpose.msra.mxu0 0.0
        %3003 = vmatprep.subr.mxu0 0.0
        %3004 = vmatpush1.xpose.msra.mxu0 0.0
        %3005 = vmatprep.subr.mxu0 0.0
        %3006 = vmatpush1.xpose.msra.mxu0 0.0
        %3007 = vmatprep.subr.mxu0 0.0
        %3008 = vmatpush1.xpose.msra.mxu0 0.0
        %3009 = vmatprep.subr.mxu0 0.0
        %3010 = vmatpush1.xpose.msra.mxu0 0.0
        %3011 = vmatprep.subr.mxu0 0.0
        %3012 = vmatpush1.xpose.msra.mxu0 0.0
        %3013 = vmatprep.subr.mxu0 0.0
        %3014 = vmatpush1.xpose.msra.mxu0 0.0
        %3015 = vmatprep.subr.mxu0 0.0
        %3016 = vmatpush1.xpose.msra.mxu0 0.0
        %3017 = vmatprep.subr.mxu0 0.0
        %3018 = vmatpush1.xpose.msra.mxu0 0.0
        %3019 = vmatprep.mubr.f32.mxu0 0.0
        %3020 = vmatmul.mubr.f32.gmra.mrb[0].mxu0 %v2949
        %v3021 = vpop.f32.mrb[0].mxu0
        %v3022 = vadd.f32 0.0, %v3021
        %v3023 = vpop.f32.mrb[0].mxu0
        %3024 = vdwg.mxu0
        %3025 = vrot.lane.b32.xlu0 %v2743, 112
        %v3026 = vpop.permute.xlu0 %3025
        %3027 = vrot.lane.b32.xlu0 %v2841, 112
        %v3028 = vpop.permute.xlu0 %3027
        %3029 = vrot.lane.b32.xlu0 %v2846, 112
        %v3030 = vpop.permute.xlu0 %3029
        %v3031 = vsel %vm1169, %v3026, 0
        %v3033 = vsel %vm1169, %v3028, 0
        %v3035 = vsel %vm1169, %v3030, 0
        %3037 = vmatprep.subr.mxu0 0.0
        %3038 = vmatpush1.xpose.msra.mxu0 %v3033
        %3039 = vmatprep.subr.mxu0 0.0
        %3040 = vmatpush1.xpose.msra.mxu0 %v3035
        %3041 = vmatprep.subr.mxu0 0.0
        %3042 = vmatpush1.xpose.msra.mxu0 0.0
        %3043 = vmatprep.subr.mxu0 0.0
        %3044 = vmatpush1.xpose.msra.mxu0 0.0
        %3045 = vmatprep.subr.mxu0 0.0
        %3046 = vmatpush1.xpose.msra.mxu0 0.0
        %3047 = vmatprep.subr.mxu0 0.0
        %3048 = vmatpush1.xpose.msra.mxu0 0.0
        %3049 = vmatprep.subr.mxu0 0.0
        %3050 = vmatpush1.xpose.msra.mxu0 0.0
        %3051 = vmatprep.subr.mxu0 0.0
        %3052 = vmatpush1.xpose.msra.mxu0 0.0
        %3053 = vmatprep.subr.mxu0 0.0
        %3054 = vmatpush1.xpose.msra.mxu0 0.0
        %3055 = vmatprep.subr.mxu0 0.0
        %3056 = vmatpush1.xpose.msra.mxu0 0.0
        %3057 = vmatprep.subr.mxu0 0.0
        %3058 = vmatpush1.xpose.msra.mxu0 0.0
        %3059 = vmatprep.subr.mxu0 0.0
        %3060 = vmatpush1.xpose.msra.mxu0 0.0
        %3061 = vmatprep.subr.mxu0 0.0
        %3062 = vmatpush1.xpose.msra.mxu0 0.0
        %3063 = vmatprep.subr.mxu0 0.0
        %3064 = vmatpush1.xpose.msra.mxu0 0.0
        %3065 = vmatprep.subr.mxu0 0.0
        %3066 = vmatpush1.xpose.msra.mxu0 0.0
        %3067 = vmatprep.subr.mxu0 0.0
        %3068 = vmatpush1.xpose.msra.mxu0 0.0
        %3069 = vmatprep.subr.mxu0 0.0
        %3070 = vmatpush1.xpose.msra.mxu0 0.0
        %3071 = vmatprep.subr.mxu0 0.0
        %3072 = vmatpush1.xpose.msra.mxu0 0.0
        %3073 = vmatprep.subr.mxu0 0.0
        %3074 = vmatpush1.xpose.msra.mxu0 0.0
        %3075 = vmatprep.subr.mxu0 0.0
        %3076 = vmatpush1.xpose.msra.mxu0 0.0
        %3077 = vmatprep.subr.mxu0 0.0
        %3078 = vmatpush1.xpose.msra.mxu0 0.0
        %3079 = vmatprep.subr.mxu0 0.0
        %3080 = vmatpush1.xpose.msra.mxu0 0.0
        %3081 = vmatprep.subr.mxu0 0.0
        %3082 = vmatpush1.xpose.msra.mxu0 0.0
        %3083 = vmatprep.subr.mxu0 0.0
        %3084 = vmatpush1.xpose.msra.mxu0 0.0
        %3085 = vmatprep.subr.mxu0 0.0
        %3086 = vmatpush1.xpose.msra.mxu0 0.0
        %3087 = vmatprep.subr.mxu0 0.0
        %3088 = vmatpush1.xpose.msra.mxu0 0.0
        %3089 = vmatprep.subr.mxu0 0.0
        %3090 = vmatpush1.xpose.msra.mxu0 0.0
        %3091 = vmatprep.subr.mxu0 0.0
        %3092 = vmatpush1.xpose.msra.mxu0 0.0
        %3093 = vmatprep.subr.mxu0 0.0
        %3094 = vmatpush1.xpose.msra.mxu0 0.0
        %3095 = vmatprep.subr.mxu0 0.0
        %3096 = vmatpush1.xpose.msra.mxu0 0.0
        %3097 = vmatprep.subr.mxu0 0.0
        %3098 = vmatpush1.xpose.msra.mxu0 0.0
        %3099 = vmatprep.subr.mxu0 0.0
        %3100 = vmatpush1.xpose.msra.mxu0 0.0
        %3101 = vmatprep.mubr.f32.mxu0 0.0
        %3102 = vmatmul.mubr.f32.gmra.mrb[0].mxu0 %v3031
        %v3103 = vpop.f32.mrb[0].mxu0
        %v3104 = vadd.f32 0.0, %v3103
        %v3105 = vpop.f32.mrb[0].mxu0
        %3106 = vdwg.mxu0
        %3107 = vrot.lane.b32.xlu0 %v2743, 104
        %v3108 = vpop.permute.xlu0 %3107
        %3109 = vrot.lane.b32.xlu0 %v2841, 104
        %v3110 = vpop.permute.xlu0 %3109
        %3111 = vrot.lane.b32.xlu0 %v2846, 104
        %v3112 = vpop.permute.xlu0 %3111
        %v3113 = vsel %vm1169, %v3108, 0
        %v3115 = vsel %vm1169, %v3110, 0
        %v3117 = vsel %vm1169, %v3112, 0
        %3119 = vmatprep.subr.mxu0 0.0
        %3120 = vmatpush1.xpose.msra.mxu0 %v3115
        %3121 = vmatprep.subr.mxu0 0.0
        %3122 = vmatpush1.xpose.msra.mxu0 %v3117
        %3123 = vmatprep.subr.mxu0 0.0
        %3124 = vmatpush1.xpose.msra.mxu0 0.0
        %3125 = vmatprep.subr.mxu0 0.0
        %3126 = vmatpush1.xpose.msra.mxu0 0.0
        %3127 = vmatprep.subr.mxu0 0.0
        %3128 = vmatpush1.xpose.msra.mxu0 0.0
        %3129 = vmatprep.subr.mxu0 0.0
        %3130 = vmatpush1.xpose.msra.mxu0 0.0
        %3131 = vmatprep.subr.mxu0 0.0
        %3132 = vmatpush1.xpose.msra.mxu0 0.0
        %3133 = vmatprep.subr.mxu0 0.0
        %3134 = vmatpush1.xpose.msra.mxu0 0.0
        %3135 = vmatprep.subr.mxu0 0.0
        %3136 = vmatpush1.xpose.msra.mxu0 0.0
        %3137 = vmatprep.subr.mxu0 0.0
        %3138 = vmatpush1.xpose.msra.mxu0 0.0
        %3139 = vmatprep.subr.mxu0 0.0
        %3140 = vmatpush1.xpose.msra.mxu0 0.0
        %3141 = vmatprep.subr.mxu0 0.0
        %3142 = vmatpush1.xpose.msra.mxu0 0.0
        %3143 = vmatprep.subr.mxu0 0.0
        %3144 = vmatpush1.xpose.msra.mxu0 0.0
        %3145 = vmatprep.subr.mxu0 0.0
        %3146 = vmatpush1.xpose.msra.mxu0 0.0
        %3147 = vmatprep.subr.mxu0 0.0
        %3148 = vmatpush1.xpose.msra.mxu0 0.0
        %3149 = vmatprep.subr.mxu0 0.0
        %3150 = vmatpush1.xpose.msra.mxu0 0.0
        %3151 = vmatprep.subr.mxu0 0.0
        %3152 = vmatpush1.xpose.msra.mxu0 0.0
        %3153 = vmatprep.subr.mxu0 0.0
        %3154 = vmatpush1.xpose.msra.mxu0 0.0
        %3155 = vmatprep.subr.mxu0 0.0
        %3156 = vmatpush1.xpose.msra.mxu0 0.0
        %3157 = vmatprep.subr.mxu0 0.0
        %3158 = vmatpush1.xpose.msra.mxu0 0.0
        %3159 = vmatprep.subr.mxu0 0.0
        %3160 = vmatpush1.xpose.msra.mxu0 0.0
        %3161 = vmatprep.subr.mxu0 0.0
        %3162 = vmatpush1.xpose.msra.mxu0 0.0
        %3163 = vmatprep.subr.mxu0 0.0
        %3164 = vmatpush1.xpose.msra.mxu0 0.0
        %3165 = vmatprep.subr.mxu0 0.0
        %3166 = vmatpush1.xpose.msra.mxu0 0.0
        %3167 = vmatprep.subr.mxu0 0.0
        %3168 = vmatpush1.xpose.msra.mxu0 0.0
        %3169 = vmatprep.subr.mxu0 0.0
        %3170 = vmatpush1.xpose.msra.mxu0 0.0
        %3171 = vmatprep.subr.mxu0 0.0
        %3172 = vmatpush1.xpose.msra.mxu0 0.0
        %3173 = vmatprep.subr.mxu0 0.0
        %3174 = vmatpush1.xpose.msra.mxu0 0.0
        %3175 = vmatprep.subr.mxu0 0.0
        %3176 = vmatpush1.xpose.msra.mxu0 0.0
        %3177 = vmatprep.subr.mxu0 0.0
        %3178 = vmatpush1.xpose.msra.mxu0 0.0
        %3179 = vmatprep.subr.mxu0 0.0
        %3180 = vmatpush1.xpose.msra.mxu0 0.0
        %3181 = vmatprep.subr.mxu0 0.0
        %3182 = vmatpush1.xpose.msra.mxu0 0.0
        %3183 = vmatprep.mubr.f32.mxu0 0.0
        %3184 = vmatmul.mubr.f32.gmra.mrb[0].mxu0 %v3113
        %v3185 = vpop.f32.mrb[0].mxu0
        %v3186 = vadd.f32 0.0, %v3185
        %v3187 = vpop.f32.mrb[0].mxu0
        %3188 = vdwg.mxu0
        %v3190 = vsel %vm1169, %v2748, 0
        %v3193 = vsel %vm1169, %v2851, 0
        %v3196 = vsel %vm1169, %v2856, 0
        %3198 = vmatprep.subr.mxu0 0.0
        %3199 = vmatpush1.xpose.msra.mxu0 %v3193
        %3200 = vmatprep.subr.mxu0 0.0
        %3201 = vmatpush1.xpose.msra.mxu0 %v3196
        %3202 = vmatprep.subr.mxu0 0.0
        %3203 = vmatpush1.xpose.msra.mxu0 0.0
        %3204 = vmatprep.subr.mxu0 0.0
        %3205 = vmatpush1.xpose.msra.mxu0 0.0
        %3206 = vmatprep.subr.mxu0 0.0
        %3207 = vmatpush1.xpose.msra.mxu0 0.0
        %3208 = vmatprep.subr.mxu0 0.0
        %3209 = vmatpush1.xpose.msra.mxu0 0.0
        %3210 = vmatprep.subr.mxu0 0.0
        %3211 = vmatpush1.xpose.msra.mxu0 0.0
        %3212 = vmatprep.subr.mxu0 0.0
        %3213 = vmatpush1.xpose.msra.mxu0 0.0
        %3214 = vmatprep.subr.mxu0 0.0
        %3215 = vmatpush1.xpose.msra.mxu0 0.0
        %3216 = vmatprep.subr.mxu0 0.0
        %3217 = vmatpush1.xpose.msra.mxu0 0.0
        %3218 = vmatprep.subr.mxu0 0.0
        %3219 = vmatpush1.xpose.msra.mxu0 0.0
        %3220 = vmatprep.subr.mxu0 0.0
        %3221 = vmatpush1.xpose.msra.mxu0 0.0
        %3222 = vmatprep.subr.mxu0 0.0
        %3223 = vmatpush1.xpose.msra.mxu0 0.0
        %3224 = vmatprep.subr.mxu0 0.0
        %3225 = vmatpush1.xpose.msra.mxu0 0.0
        %3226 = vmatprep.subr.mxu0 0.0
        %3227 = vmatpush1.xpose.msra.mxu0 0.0
        %3228 = vmatprep.subr.mxu0 0.0
        %3229 = vmatpush1.xpose.msra.mxu0 0.0
        %3230 = vmatprep.subr.mxu0 0.0
        %3231 = vmatpush1.xpose.msra.mxu0 0.0
        %3232 = vmatprep.subr.mxu0 0.0
        %3233 = vmatpush1.xpose.msra.mxu0 0.0
        %3234 = vmatprep.subr.mxu0 0.0
        %3235 = vmatpush1.xpose.msra.mxu0 0.0
        %3236 = vmatprep.subr.mxu0 0.0
        %3237 = vmatpush1.xpose.msra.mxu0 0.0
        %3238 = vmatprep.subr.mxu0 0.0
        %3239 = vmatpush1.xpose.msra.mxu0 0.0
        %3240 = vmatprep.subr.mxu0 0.0
        %3241 = vmatpush1.xpose.msra.mxu0 0.0
        %3242 = vmatprep.subr.mxu0 0.0
        %3243 = vmatpush1.xpose.msra.mxu0 0.0
        %3244 = vmatprep.subr.mxu0 0.0
        %3245 = vmatpush1.xpose.msra.mxu0 0.0
        %3246 = vmatprep.subr.mxu0 0.0
        %3247 = vmatpush1.xpose.msra.mxu0 0.0
        %3248 = vmatprep.subr.mxu0 0.0
        %3249 = vmatpush1.xpose.msra.mxu0 0.0
        %3250 = vmatprep.subr.mxu0 0.0
        %3251 = vmatpush1.xpose.msra.mxu0 0.0
        %3252 = vmatprep.subr.mxu0 0.0
        %3253 = vmatpush1.xpose.msra.mxu0 0.0
        %3254 = vmatprep.subr.mxu0 0.0
        %3255 = vmatpush1.xpose.msra.mxu0 0.0
        %3256 = vmatprep.subr.mxu0 0.0
        %3257 = vmatpush1.xpose.msra.mxu0 0.0
        %3258 = vmatprep.subr.mxu0 0.0
        %3259 = vmatpush1.xpose.msra.mxu0 0.0
        %3260 = vmatprep.subr.mxu0 0.0
        %3261 = vmatpush1.xpose.msra.mxu0 0.0
        %3262 = vmatprep.mubr.f32.mxu0 0.0
        %3263 = vmatmul.mubr.f32.gmra.mrb[0].mxu0 %v3190
        %v3264 = vpop.f32.mrb[0].mxu0
        %v3265 = vadd.f32 0.0, %v3264
        %v3266 = vpop.f32.mrb[0].mxu0
        %3267 = vdwg.mxu0
        %3268 = vrot.lane.b32.xlu0 %v2748, 120
        %v3269 = vpop.permute.xlu0 %3268
        %3270 = vrot.lane.b32.xlu0 %v2851, 120
        %v3271 = vpop.permute.xlu0 %3270
        %3272 = vrot.lane.b32.xlu0 %v2856, 120
        %v3273 = vpop.permute.xlu0 %3272
        %v3274 = vsel %vm1169, %v3269, 0
        %v3276 = vsel %vm1169, %v3271, 0
        %v3278 = vsel %vm1169, %v3273, 0
        %3280 = vmatprep.subr.mxu0 0.0
        %3281 = vmatpush1.xpose.msra.mxu0 %v3276
        %3282 = vmatprep.subr.mxu0 0.0
        %3283 = vmatpush1.xpose.msra.mxu0 %v3278
        %3284 = vmatprep.subr.mxu0 0.0
        %3285 = vmatpush1.xpose.msra.mxu0 0.0
        %3286 = vmatprep.subr.mxu0 0.0
        %3287 = vmatpush1.xpose.msra.mxu0 0.0
        %3288 = vmatprep.subr.mxu0 0.0
        %3289 = vmatpush1.xpose.msra.mxu0 0.0
        %3290 = vmatprep.subr.mxu0 0.0
        %3291 = vmatpush1.xpose.msra.mxu0 0.0
        %3292 = vmatprep.subr.mxu0 0.0
        %3293 = vmatpush1.xpose.msra.mxu0 0.0
        %3294 = vmatprep.subr.mxu0 0.0
        %3295 = vmatpush1.xpose.msra.mxu0 0.0
        %3296 = vmatprep.subr.mxu0 0.0
        %3297 = vmatpush1.xpose.msra.mxu0 0.0
        %3298 = vmatprep.subr.mxu0 0.0
        %3299 = vmatpush1.xpose.msra.mxu0 0.0
        %3300 = vmatprep.subr.mxu0 0.0
        %3301 = vmatpush1.xpose.msra.mxu0 0.0
        %3302 = vmatprep.subr.mxu0 0.0
        %3303 = vmatpush1.xpose.msra.mxu0 0.0
        %3304 = vmatprep.subr.mxu0 0.0
        %3305 = vmatpush1.xpose.msra.mxu0 0.0
        %3306 = vmatprep.subr.mxu0 0.0
        %3307 = vmatpush1.xpose.msra.mxu0 0.0
        %3308 = vmatprep.subr.mxu0 0.0
        %3309 = vmatpush1.xpose.msra.mxu0 0.0
        %3310 = vmatprep.subr.mxu0 0.0
        %3311 = vmatpush1.xpose.msra.mxu0 0.0
        %3312 = vmatprep.subr.mxu0 0.0
        %3313 = vmatpush1.xpose.msra.mxu0 0.0
        %3314 = vmatprep.subr.mxu0 0.0
        %3315 = vmatpush1.xpose.msra.mxu0 0.0
        %3316 = vmatprep.subr.mxu0 0.0
        %3317 = vmatpush1.xpose.msra.mxu0 0.0
        %3318 = vmatprep.subr.mxu0 0.0
        %3319 = vmatpush1.xpose.msra.mxu0 0.0
        %3320 = vmatprep.subr.mxu0 0.0
        %3321 = vmatpush1.xpose.msra.mxu0 0.0
        %3322 = vmatprep.subr.mxu0 0.0
        %3323 = vmatpush1.xpose.msra.mxu0 0.0
        %3324 = vmatprep.subr.mxu0 0.0
        %3325 = vmatpush1.xpose.msra.mxu0 0.0
        %3326 = vmatprep.subr.mxu0 0.0
        %3327 = vmatpush1.xpose.msra.mxu0 0.0
        %3328 = vmatprep.subr.mxu0 0.0
        %3329 = vmatpush1.xpose.msra.mxu0 0.0
        %3330 = vmatprep.subr.mxu0 0.0
        %3331 = vmatpush1.xpose.msra.mxu0 0.0
        %3332 = vmatprep.subr.mxu0 0.0
        %3333 = vmatpush1.xpose.msra.mxu0 0.0
        %3334 = vmatprep.subr.mxu0 0.0
        %3335 = vmatpush1.xpose.msra.mxu0 0.0
        %3336 = vmatprep.subr.mxu0 0.0
        %3337 = vmatpush1.xpose.msra.mxu0 0.0
        %3338 = vmatprep.subr.mxu0 0.0
        %3339 = vmatpush1.xpose.msra.mxu0 0.0
        %3340 = vmatprep.subr.mxu0 0.0
        %3341 = vmatpush1.xpose.msra.mxu0 0.0
        %3342 = vmatprep.subr.mxu0 0.0
        %3343 = vmatpush1.xpose.msra.mxu0 0.0
        %3344 = vmatprep.mubr.f32.mxu0 0.0
        %3345 = vmatmul.mubr.f32.gmra.mrb[0].mxu0 %v3274
        %v3346 = vpop.f32.mrb[0].mxu0
        %v3347 = vadd.f32 0.0, %v3346
        %v3348 = vpop.f32.mrb[0].mxu0
        %3349 = vdwg.mxu0
        %3350 = vrot.lane.b32.xlu0 %v2748, 112
        %v3351 = vpop.permute.xlu0 %3350
        %3352 = vrot.lane.b32.xlu0 %v2851, 112
        %v3353 = vpop.permute.xlu0 %3352
        %3354 = vrot.lane.b32.xlu0 %v2856, 112
        %v3355 = vpop.permute.xlu0 %3354
        %v3356 = vsel %vm1169, %v3351, 0
        %v3358 = vsel %vm1169, %v3353, 0
        %v3360 = vsel %vm1169, %v3355, 0
        %3362 = vmatprep.subr.mxu0 0.0
        %3363 = vmatpush1.xpose.msra.mxu0 %v3358
        %3364 = vmatprep.subr.mxu0 0.0
        %3365 = vmatpush1.xpose.msra.mxu0 %v3360
        %3366 = vmatprep.subr.mxu0 0.0
        %3367 = vmatpush1.xpose.msra.mxu0 0.0
        %3368 = vmatprep.subr.mxu0 0.0
        %3369 = vmatpush1.xpose.msra.mxu0 0.0
        %3370 = vmatprep.subr.mxu0 0.0
        %3371 = vmatpush1.xpose.msra.mxu0 0.0
        %3372 = vmatprep.subr.mxu0 0.0
        %3373 = vmatpush1.xpose.msra.mxu0 0.0
        %3374 = vmatprep.subr.mxu0 0.0
        %3375 = vmatpush1.xpose.msra.mxu0 0.0
        %3376 = vmatprep.subr.mxu0 0.0
        %3377 = vmatpush1.xpose.msra.mxu0 0.0
        %3378 = vmatprep.subr.mxu0 0.0
        %3379 = vmatpush1.xpose.msra.mxu0 0.0
        %3380 = vmatprep.subr.mxu0 0.0
        %3381 = vmatpush1.xpose.msra.mxu0 0.0
        %3382 = vmatprep.subr.mxu0 0.0
        %3383 = vmatpush1.xpose.msra.mxu0 0.0
        %3384 = vmatprep.subr.mxu0 0.0
        %3385 = vmatpush1.xpose.msra.mxu0 0.0
        %3386 = vmatprep.subr.mxu0 0.0
        %3387 = vmatpush1.xpose.msra.mxu0 0.0
        %3388 = vmatprep.subr.mxu0 0.0
        %3389 = vmatpush1.xpose.msra.mxu0 0.0
        %3390 = vmatprep.subr.mxu0 0.0
        %3391 = vmatpush1.xpose.msra.mxu0 0.0
        %3392 = vmatprep.subr.mxu0 0.0
        %3393 = vmatpush1.xpose.msra.mxu0 0.0
        %3394 = vmatprep.subr.mxu0 0.0
        %3395 = vmatpush1.xpose.msra.mxu0 0.0
        %3396 = vmatprep.subr.mxu0 0.0
        %3397 = vmatpush1.xpose.msra.mxu0 0.0
        %3398 = vmatprep.subr.mxu0 0.0
        %3399 = vmatpush1.xpose.msra.mxu0 0.0
        %3400 = vmatprep.subr.mxu0 0.0
        %3401 = vmatpush1.xpose.msra.mxu0 0.0
        %3402 = vmatprep.subr.mxu0 0.0
        %3403 = vmatpush1.xpose.msra.mxu0 0.0
        %3404 = vmatprep.subr.mxu0 0.0
        %3405 = vmatpush1.xpose.msra.mxu0 0.0
        %3406 = vmatprep.subr.mxu0 0.0
        %3407 = vmatpush1.xpose.msra.mxu0 0.0
        %3408 = vmatprep.subr.mxu0 0.0
        %3409 = vmatpush1.xpose.msra.mxu0 0.0
        %3410 = vmatprep.subr.mxu0 0.0
        %3411 = vmatpush1.xpose.msra.mxu0 0.0
        %3412 = vmatprep.subr.mxu0 0.0
        %3413 = vmatpush1.xpose.msra.mxu0 0.0
        %3414 = vmatprep.subr.mxu0 0.0
        %3415 = vmatpush1.xpose.msra.mxu0 0.0
        %3416 = vmatprep.subr.mxu0 0.0
        %3417 = vmatpush1.xpose.msra.mxu0 0.0
        %3418 = vmatprep.subr.mxu0 0.0
        %3419 = vmatpush1.xpose.msra.mxu0 0.0
        %3420 = vmatprep.subr.mxu0 0.0
        %3421 = vmatpush1.xpose.msra.mxu0 0.0
        %3422 = vmatprep.subr.mxu0 0.0
        %3423 = vmatpush1.xpose.msra.mxu0 0.0
        %3424 = vmatprep.subr.mxu0 0.0
        %3425 = vmatpush1.xpose.msra.mxu0 0.0
        %3426 = vmatprep.mubr.f32.mxu0 0.0
        %3427 = vmatmul.mubr.f32.gmra.mrb[0].mxu0 %v3356
        %v3428 = vpop.f32.mrb[0].mxu0
        %v3429 = vadd.f32 0.0, %v3428
        %v3430 = vpop.f32.mrb[0].mxu0
        %3431 = vdwg.mxu0
        %3432 = vrot.lane.b32.xlu0 %v2748, 104
        %v3433 = vpop.permute.xlu0 %3432
        %3434 = vrot.lane.b32.xlu0 %v2851, 104
        %v3435 = vpop.permute.xlu0 %3434
        %3436 = vrot.lane.b32.xlu0 %v2856, 104
        %v3437 = vpop.permute.xlu0 %3436
        %v3438 = vsel %vm1169, %v3433, 0
        %v3440 = vsel %vm1169, %v3435, 0
        %v3442 = vsel %vm1169, %v3437, 0
        %3444 = vmatprep.subr.mxu0 0.0
        %3445 = vmatpush1.xpose.msra.mxu0 %v3440
        %3446 = vmatprep.subr.mxu0 0.0
        %3447 = vmatpush1.xpose.msra.mxu0 %v3442
        %3448 = vmatprep.subr.mxu0 0.0
        %3449 = vmatpush1.xpose.msra.mxu0 0.0
        %3450 = vmatprep.subr.mxu0 0.0
        %3451 = vmatpush1.xpose.msra.mxu0 0.0
        %3452 = vmatprep.subr.mxu0 0.0
        %3453 = vmatpush1.xpose.msra.mxu0 0.0
        %3454 = vmatprep.subr.mxu0 0.0
        %3455 = vmatpush1.xpose.msra.mxu0 0.0
        %3456 = vmatprep.subr.mxu0 0.0
        %3457 = vmatpush1.xpose.msra.mxu0 0.0
        %3458 = vmatprep.subr.mxu0 0.0
        %3459 = vmatpush1.xpose.msra.mxu0 0.0
        %3460 = vmatprep.subr.mxu0 0.0
        %3461 = vmatpush1.xpose.msra.mxu0 0.0
        %3462 = vmatprep.subr.mxu0 0.0
        %3463 = vmatpush1.xpose.msra.mxu0 0.0
        %3464 = vmatprep.subr.mxu0 0.0
        %3465 = vmatpush1.xpose.msra.mxu0 0.0
        %3466 = vmatprep.subr.mxu0 0.0
        %3467 = vmatpush1.xpose.msra.mxu0 0.0
        %3468 = vmatprep.subr.mxu0 0.0
        %3469 = vmatpush1.xpose.msra.mxu0 0.0
        %3470 = vmatprep.subr.mxu0 0.0
        %3471 = vmatpush1.xpose.msra.mxu0 0.0
        %3472 = vmatprep.subr.mxu0 0.0
        %3473 = vmatpush1.xpose.msra.mxu0 0.0
        %3474 = vmatprep.subr.mxu0 0.0
        %3475 = vmatpush1.xpose.msra.mxu0 0.0
        %3476 = vmatprep.subr.mxu0 0.0
        %3477 = vmatpush1.xpose.msra.mxu0 0.0
        %3478 = vmatprep.subr.mxu0 0.0
        %3479 = vmatpush1.xpose.msra.mxu0 0.0
        %3480 = vmatprep.subr.mxu0 0.0
        %3481 = vmatpush1.xpose.msra.mxu0 0.0
        %3482 = vmatprep.subr.mxu0 0.0
        %3483 = vmatpush1.xpose.msra.mxu0 0.0
        %3484 = vmatprep.subr.mxu0 0.0
        %3485 = vmatpush1.xpose.msra.mxu0 0.0
        %3486 = vmatprep.subr.mxu0 0.0
        %3487 = vmatpush1.xpose.msra.mxu0 0.0
        %3488 = vmatprep.subr.mxu0 0.0
        %3489 = vmatpush1.xpose.msra.mxu0 0.0
        %3490 = vmatprep.subr.mxu0 0.0
        %3491 = vmatpush1.xpose.msra.mxu0 0.0
        %3492 = vmatprep.subr.mxu0 0.0
        %3493 = vmatpush1.xpose.msra.mxu0 0.0
        %3494 = vmatprep.subr.mxu0 0.0
        %3495 = vmatpush1.xpose.msra.mxu0 0.0
        %3496 = vmatprep.subr.mxu0 0.0
        %3497 = vmatpush1.xpose.msra.mxu0 0.0
        %3498 = vmatprep.subr.mxu0 0.0
        %3499 = vmatpush1.xpose.msra.mxu0 0.0
        %3500 = vmatprep.subr.mxu0 0.0
        %3501 = vmatpush1.xpose.msra.mxu0 0.0
        %3502 = vmatprep.subr.mxu0 0.0
        %3503 = vmatpush1.xpose.msra.mxu0 0.0
        %3504 = vmatprep.subr.mxu0 0.0
        %3505 = vmatpush1.xpose.msra.mxu0 0.0
        %3506 = vmatprep.subr.mxu0 0.0
        %3507 = vmatpush1.xpose.msra.mxu0 0.0
        %3508 = vmatprep.mubr.f32.mxu0 0.0
        %3509 = vmatmul.mubr.f32.gmra.mrb[0].mxu0 %v3438
        %v3510 = vpop.f32.mrb[0].mxu0
        %v3511 = vadd.f32 0.0, %v3510
        %v3512 = vpop.f32.mrb[0].mxu0
        %3513 = vdwg.mxu0
        %v3514 = vmul.f32 %v2940, 0.35355338
        %v3515 = vmul.f32 %v3022, 0.35355338
        %v3516 = vmul.f32 %v3104, 0.35355338
        %v3517 = vmul.f32 %v3186, 0.35355338
        %v3518 = vmul.f32 %v3265, 0.35355338
        %v3519 = vmul.f32 %v3347, 0.35355338
        %v3520 = vmul.f32 %v3429, 0.35355338
        %v3521 = vmul.f32 %v3511, 0.35355338
        %v3522 = vsel %vm2202, %v3514, -inf
        %3523 = vmax.xlane.f32.xlu0 %v3522
        %v3524 = vpop.xlane.xlu0 %3523
        %v3525 = vsel %vm2202, %v3515, -inf
        %3526 = vmax.xlane.f32.xlu0 %v3525
        %v3527 = vpop.xlane.xlu0 %3526
        %v3528 = vsel %vm2202, %v3516, -inf
        %3529 = vmax.xlane.f32.xlu0 %v3528
        %v3530 = vpop.xlane.xlu0 %3529
        %v3531 = vsel %vm2202, %v3517, -inf
        %3532 = vmax.xlane.f32.xlu0 %v3531
        %v3533 = vpop.xlane.xlu0 %3532
        %v3534 = vsel %vm2202, %v3518, -inf
        %3535 = vmax.xlane.f32.xlu0 %v3534
        %v3536 = vpop.xlane.xlu0 %3535
        %v3537 = vsel %vm2202, %v3519, -inf
        %3538 = vmax.xlane.f32.xlu0 %v3537
        %v3539 = vpop.xlane.xlu0 %3538
        %v3540 = vsel %vm2202, %v3520, -inf
        %3541 = vmax.xlane.f32.xlu0 %v3540
        %v3542 = vpop.xlane.xlu0 %3541
        %v3543 = vsel %vm2202, %v3521, -inf
        %3544 = vmax.xlane.f32.xlu0 %v3543
        %v3545 = vpop.xlane.xlu0 %3544
        %v3546 = vsub.f32 %v3514, %v3524
        %v3547 = vsub.f32 %v3515, %v3527
        %v3548 = vsub.f32 %v3516, %v3530
        %v3549 = vsub.f32 %v3517, %v3533
        %v3550 = vsub.f32 %v3518, %v3536
        %v3551 = vsub.f32 %v3519, %v3539
        %v3552 = vsub.f32 %v3520, %v3542
        %v3553 = vsub.f32 %v3521, %v3545
        %v3554 = vmul.f32 %v3546, 1.442695
        %v3555 = vpow.pop %v3554
        %v3556 = vmul.f32 %v3547, 1.442695
        %v3557 = vpow.pop %v3556
        %v3558 = vmul.f32 %v3548, 1.442695
        %v3559 = vpow.pop %v3558
        %v3560 = vmul.f32 %v3549, 1.442695
        %v3561 = vpow.pop %v3560
        %v3562 = vmul.f32 %v3550, 1.442695
        %v3563 = vpow.pop %v3562
        %v3564 = vmul.f32 %v3551, 1.442695
        %v3565 = vpow.pop %v3564
        %v3566 = vmul.f32 %v3552, 1.442695
        %v3567 = vpow.pop %v3566
        %v3568 = vmul.f32 %v3553, 1.442695
        %v3569 = vpow.pop %v3568
        %v3570 = vsel %vm2202, %v3555, 0.0
        %3571 = vadd.xlane.f32.xlu0 %v3570
        %v3572 = vpop.xlane.xlu0 %3571
        %v3573 = vsel %vm2202, %v3557, 0.0
        %3574 = vadd.xlane.f32.xlu0 %v3573
        %v3575 = vpop.xlane.xlu0 %3574
        %v3576 = vsel %vm2202, %v3559, 0.0
        %3577 = vadd.xlane.f32.xlu0 %v3576
        %v3578 = vpop.xlane.xlu0 %3577
        %v3579 = vsel %vm2202, %v3561, 0.0
        %3580 = vadd.xlane.f32.xlu0 %v3579
        %v3581 = vpop.xlane.xlu0 %3580
        %v3582 = vsel %vm2202, %v3563, 0.0
        %3583 = vadd.xlane.f32.xlu0 %v3582
        %v3584 = vpop.xlane.xlu0 %3583
        %v3585 = vsel %vm2202, %v3565, 0.0
        %3586 = vadd.xlane.f32.xlu0 %v3585
        %v3587 = vpop.xlane.xlu0 %3586
        %v3588 = vsel %vm2202, %v3567, 0.0
        %3589 = vadd.xlane.f32.xlu0 %v3588
        %v3590 = vpop.xlane.xlu0 %3589
        %v3591 = vsel %vm2202, %v3569, 0.0
        %3592 = vadd.xlane.f32.xlu0 %v3591
        %v3593 = vpop.xlane.xlu0 %3592
        %v3594 = vrcp.pop %v3572
        %v3595 = vrcp.pop %v3575
        %v3596 = vrcp.pop %v3578
        %v3597 = vrcp.pop %v3581
        %v3598 = vrcp.pop %v3584
        %v3599 = vrcp.pop %v3587
        %v3600 = vrcp.pop %v3590
        %v3601 = vrcp.pop %v3593
        %v3602 = vmul.f32 %v3555, %v3594
        %v3603 = vmul.f32 %v3557, %v3595
        %v3604 = vmul.f32 %v3559, %v3596
        %v3605 = vmul.f32 %v3561, %v3597
        %v3606 = vmul.f32 %v3563, %v3598
        %v3607 = vmul.f32 %v3565, %v3599
        %v3608 = vmul.f32 %v3567, %v3600
        %v3609 = vmul.f32 %v3569, %v3601
        %3610 = vrot.lane.b32.xlu0 %v2841, 96
        %v3611 = vpop.permute.xlu0 %3610
        %3612 = vrot.lane.b32.xlu0 %v2846, 96
        %v3613 = vpop.permute.xlu0 %3612
        %v3617 = vsel %vm2202, %v3602, 0
        %3619 = vmatprep.subr.mxu0 0.0
        %3620 = vmatpush1.msra.mxu0 %v3611
        %3621 = vmatprep.subr.mxu0 0.0
        %3622 = vmatpush1.msra.mxu0 %v3613
        %3623 = vmatprep.subr.mxu0 0.0
        %3624 = vmatpush1.msra.mxu0 0.0
        %3625 = vmatprep.subr.mxu0 0.0
        %3626 = vmatpush1.msra.mxu0 0.0
        %3627 = vmatprep.subr.mxu0 0.0
        %3628 = vmatpush1.msra.mxu0 0.0
        %3629 = vmatprep.subr.mxu0 0.0
        %3630 = vmatpush1.msra.mxu0 0.0
        %3631 = vmatprep.subr.mxu0 0.0
        %3632 = vmatpush1.msra.mxu0 0.0
        %3633 = vmatprep.subr.mxu0 0.0
        %3634 = vmatpush1.msra.mxu0 0.0
        %3635 = vmatprep.subr.mxu0 0.0
        %3636 = vmatpush1.msra.mxu0 0.0
        %3637 = vmatprep.subr.mxu0 0.0
        %3638 = vmatpush1.msra.mxu0 0.0
        %3639 = vmatprep.subr.mxu0 0.0
        %3640 = vmatpush1.msra.mxu0 0.0
        %3641 = vmatprep.subr.mxu0 0.0
        %3642 = vmatpush1.msra.mxu0 0.0
        %3643 = vmatprep.subr.mxu0 0.0
        %3644 = vmatpush1.msra.mxu0 0.0
        %3645 = vmatprep.subr.mxu0 0.0
        %3646 = vmatpush1.msra.mxu0 0.0
        %3647 = vmatprep.subr.mxu0 0.0
        %3648 = vmatpush1.msra.mxu0 0.0
        %3649 = vmatprep.subr.mxu0 0.0
        %3650 = vmatpush1.msra.mxu0 0.0
        %3651 = vmatprep.subr.mxu0 0.0
        %3652 = vmatpush1.msra.mxu0 0.0
        %3653 = vmatprep.subr.mxu0 0.0
        %3654 = vmatpush1.msra.mxu0 0.0
        %3655 = vmatprep.subr.mxu0 0.0
        %3656 = vmatpush1.msra.mxu0 0.0
        %3657 = vmatprep.subr.mxu0 0.0
        %3658 = vmatpush1.msra.mxu0 0.0
        %3659 = vmatprep.subr.mxu0 0.0
        %3660 = vmatpush1.msra.mxu0 0.0
        %3661 = vmatprep.subr.mxu0 0.0
        %3662 = vmatpush1.msra.mxu0 0.0
        %3663 = vmatprep.subr.mxu0 0.0
        %3664 = vmatpush1.msra.mxu0 0.0
        %3665 = vmatprep.subr.mxu0 0.0
        %3666 = vmatpush1.msra.mxu0 0.0
        %3667 = vmatprep.subr.mxu0 0.0
        %3668 = vmatpush1.msra.mxu0 0.0
        %3669 = vmatprep.subr.mxu0 0.0
        %3670 = vmatpush1.msra.mxu0 0.0
        %3671 = vmatprep.subr.mxu0 0.0
        %3672 = vmatpush1.msra.mxu0 0.0
        %3673 = vmatprep.subr.mxu0 0.0
        %3674 = vmatpush1.msra.mxu0 0.0
        %3675 = vmatprep.subr.mxu0 0.0
        %3676 = vmatpush1.msra.mxu0 0.0
        %3677 = vmatprep.subr.mxu0 0.0
        %3678 = vmatpush1.msra.mxu0 0.0
        %3679 = vmatprep.subr.mxu0 0.0
        %3680 = vmatpush1.msra.mxu0 0.0
        %3681 = vmatprep.subr.mxu0 0.0
        %3682 = vmatpush1.msra.mxu0 0.0
        %3683 = vmatprep.mubr.f32.mxu0 0.0
        %3684 = vmatmul.mubr.f32.gmra.mrb[0].mxu0 %v3617
        %v3685 = vpop.f32.mrb[0].mxu0
        %v3686 = vadd.f32 0.0, %v3685
        %v3687 = vpop.f32.mrb[0].mxu0
        %3688 = vdwg.mxu0
        %3689 = vrot.lane.b32.xlu0 %v2841, 88
        %v3690 = vpop.permute.xlu0 %3689
        %3691 = vrot.lane.b32.xlu0 %v2846, 88
        %v3692 = vpop.permute.xlu0 %3691
        %v3696 = vsel %vm2202, %v3603, 0
        %3698 = vmatprep.subr.mxu0 0.0
        %3699 = vmatpush1.msra.mxu0 %v3690
        %3700 = vmatprep.subr.mxu0 0.0
        %3701 = vmatpush1.msra.mxu0 %v3692
        %3702 = vmatprep.subr.mxu0 0.0
        %3703 = vmatpush1.msra.mxu0 0.0
        %3704 = vmatprep.subr.mxu0 0.0
        %3705 = vmatpush1.msra.mxu0 0.0
        %3706 = vmatprep.subr.mxu0 0.0
        %3707 = vmatpush1.msra.mxu0 0.0
        %3708 = vmatprep.subr.mxu0 0.0
        %3709 = vmatpush1.msra.mxu0 0.0
        %3710 = vmatprep.subr.mxu0 0.0
        %3711 = vmatpush1.msra.mxu0 0.0
        %3712 = vmatprep.subr.mxu0 0.0
        %3713 = vmatpush1.msra.mxu0 0.0
        %3714 = vmatprep.subr.mxu0 0.0
        %3715 = vmatpush1.msra.mxu0 0.0
        %3716 = vmatprep.subr.mxu0 0.0
        %3717 = vmatpush1.msra.mxu0 0.0
        %3718 = vmatprep.subr.mxu0 0.0
        %3719 = vmatpush1.msra.mxu0 0.0
        %3720 = vmatprep.subr.mxu0 0.0
        %3721 = vmatpush1.msra.mxu0 0.0
        %3722 = vmatprep.subr.mxu0 0.0
        %3723 = vmatpush1.msra.mxu0 0.0
        %3724 = vmatprep.subr.mxu0 0.0
        %3725 = vmatpush1.msra.mxu0 0.0
        %3726 = vmatprep.subr.mxu0 0.0
        %3727 = vmatpush1.msra.mxu0 0.0
        %3728 = vmatprep.subr.mxu0 0.0
        %3729 = vmatpush1.msra.mxu0 0.0
        %3730 = vmatprep.subr.mxu0 0.0
        %3731 = vmatpush1.msra.mxu0 0.0
        %3732 = vmatprep.subr.mxu0 0.0
        %3733 = vmatpush1.msra.mxu0 0.0
        %3734 = vmatprep.subr.mxu0 0.0
        %3735 = vmatpush1.msra.mxu0 0.0
        %3736 = vmatprep.subr.mxu0 0.0
        %3737 = vmatpush1.msra.mxu0 0.0
        %3738 = vmatprep.subr.mxu0 0.0
        %3739 = vmatpush1.msra.mxu0 0.0
        %3740 = vmatprep.subr.mxu0 0.0
        %3741 = vmatpush1.msra.mxu0 0.0
        %3742 = vmatprep.subr.mxu0 0.0
        %3743 = vmatpush1.msra.mxu0 0.0
        %3744 = vmatprep.subr.mxu0 0.0
        %3745 = vmatpush1.msra.mxu0 0.0
        %3746 = vmatprep.subr.mxu0 0.0
        %3747 = vmatpush1.msra.mxu0 0.0
        %3748 = vmatprep.subr.mxu0 0.0
        %3749 = vmatpush1.msra.mxu0 0.0
        %3750 = vmatprep.subr.mxu0 0.0
        %3751 = vmatpush1.msra.mxu0 0.0
        %3752 = vmatprep.subr.mxu0 0.0
        %3753 = vmatpush1.msra.mxu0 0.0
        %3754 = vmatprep.subr.mxu0 0.0
        %3755 = vmatpush1.msra.mxu0 0.0
        %3756 = vmatprep.subr.mxu0 0.0
        %3757 = vmatpush1.msra.mxu0 0.0
        %3758 = vmatprep.subr.mxu0 0.0
        %3759 = vmatpush1.msra.mxu0 0.0
        %3760 = vmatprep.subr.mxu0 0.0
        %3761 = vmatpush1.msra.mxu0 0.0
        %3762 = vmatprep.mubr.f32.mxu0 0.0
        %3763 = vmatmul.mubr.f32.gmra.mrb[0].mxu0 %v3696
        %v3764 = vpop.f32.mrb[0].mxu0
        %v3765 = vadd.f32 0.0, %v3764
        %v3766 = vpop.f32.mrb[0].mxu0
        %3767 = vdwg.mxu0
        %3768 = vrot.lane.b32.xlu0 %v2841, 80
        %v3769 = vpop.permute.xlu0 %3768
        %3770 = vrot.lane.b32.xlu0 %v2846, 80
        %v3771 = vpop.permute.xlu0 %3770
        %v3775 = vsel %vm2202, %v3604, 0
        %3777 = vmatprep.subr.mxu0 0.0
        %3778 = vmatpush1.msra.mxu0 %v3769
        %3779 = vmatprep.subr.mxu0 0.0
        %3780 = vmatpush1.msra.mxu0 %v3771
        %3781 = vmatprep.subr.mxu0 0.0
        %3782 = vmatpush1.msra.mxu0 0.0
        %3783 = vmatprep.subr.mxu0 0.0
        %3784 = vmatpush1.msra.mxu0 0.0
        %3785 = vmatprep.subr.mxu0 0.0
        %3786 = vmatpush1.msra.mxu0 0.0
        %3787 = vmatprep.subr.mxu0 0.0
        %3788 = vmatpush1.msra.mxu0 0.0
        %3789 = vmatprep.subr.mxu0 0.0
        %3790 = vmatpush1.msra.mxu0 0.0
        %3791 = vmatprep.subr.mxu0 0.0
        %3792 = vmatpush1.msra.mxu0 0.0
        %3793 = vmatprep.subr.mxu0 0.0
        %3794 = vmatpush1.msra.mxu0 0.0
        %3795 = vmatprep.subr.mxu0 0.0
        %3796 = vmatpush1.msra.mxu0 0.0
        %3797 = vmatprep.subr.mxu0 0.0
        %3798 = vmatpush1.msra.mxu0 0.0
        %3799 = vmatprep.subr.mxu0 0.0
        %3800 = vmatpush1.msra.mxu0 0.0
        %3801 = vmatprep.subr.mxu0 0.0
        %3802 = vmatpush1.msra.mxu0 0.0
        %3803 = vmatprep.subr.mxu0 0.0
        %3804 = vmatpush1.msra.mxu0 0.0
        %3805 = vmatprep.subr.mxu0 0.0
        %3806 = vmatpush1.msra.mxu0 0.0
        %3807 = vmatprep.subr.mxu0 0.0
        %3808 = vmatpush1.msra.mxu0 0.0
        %3809 = vmatprep.subr.mxu0 0.0
        %3810 = vmatpush1.msra.mxu0 0.0
        %3811 = vmatprep.subr.mxu0 0.0
        %3812 = vmatpush1.msra.mxu0 0.0
        %3813 = vmatprep.subr.mxu0 0.0
        %3814 = vmatpush1.msra.mxu0 0.0
        %3815 = vmatprep.subr.mxu0 0.0
        %3816 = vmatpush1.msra.mxu0 0.0
        %3817 = vmatprep.subr.mxu0 0.0
        %3818 = vmatpush1.msra.mxu0 0.0
        %3819 = vmatprep.subr.mxu0 0.0
        %3820 = vmatpush1.msra.mxu0 0.0
        %3821 = vmatprep.subr.mxu0 0.0
        %3822 = vmatpush1.msra.mxu0 0.0
        %3823 = vmatprep.subr.mxu0 0.0
        %3824 = vmatpush1.msra.mxu0 0.0
        %3825 = vmatprep.subr.mxu0 0.0
        %3826 = vmatpush1.msra.mxu0 0.0
        %3827 = vmatprep.subr.mxu0 0.0
        %3828 = vmatpush1.msra.mxu0 0.0
        %3829 = vmatprep.subr.mxu0 0.0
        %3830 = vmatpush1.msra.mxu0 0.0
        %3831 = vmatprep.subr.mxu0 0.0
        %3832 = vmatpush1.msra.mxu0 0.0
        %3833 = vmatprep.subr.mxu0 0.0
        %3834 = vmatpush1.msra.mxu0 0.0
        %3835 = vmatprep.subr.mxu0 0.0
        %3836 = vmatpush1.msra.mxu0 0.0
        %3837 = vmatprep.subr.mxu0 0.0
        %3838 = vmatpush1.msra.mxu0 0.0
        %3839 = vmatprep.subr.mxu0 0.0
        %3840 = vmatpush1.msra.mxu0 0.0
        %3841 = vmatprep.mubr.f32.mxu0 0.0
        %3842 = vmatmul.mubr.f32.gmra.mrb[0].mxu0 %v3775
        %v3843 = vpop.f32.mrb[0].mxu0
        %v3844 = vadd.f32 0.0, %v3843
        %v3845 = vpop.f32.mrb[0].mxu0
        %3846 = vdwg.mxu0
        %3847 = vrot.lane.b32.xlu0 %v2841, 72
        %v3848 = vpop.permute.xlu0 %3847
        %3849 = vrot.lane.b32.xlu0 %v2846, 72
        %v3850 = vpop.permute.xlu0 %3849
        %v3854 = vsel %vm2202, %v3605, 0
        %3856 = vmatprep.subr.mxu0 0.0
        %3857 = vmatpush1.msra.mxu0 %v3848
        %3858 = vmatprep.subr.mxu0 0.0
        %3859 = vmatpush1.msra.mxu0 %v3850
        %3860 = vmatprep.subr.mxu0 0.0
        %3861 = vmatpush1.msra.mxu0 0.0
        %3862 = vmatprep.subr.mxu0 0.0
        %3863 = vmatpush1.msra.mxu0 0.0
        %3864 = vmatprep.subr.mxu0 0.0
        %3865 = vmatpush1.msra.mxu0 0.0
        %3866 = vmatprep.subr.mxu0 0.0
        %3867 = vmatpush1.msra.mxu0 0.0
        %3868 = vmatprep.subr.mxu0 0.0
        %3869 = vmatpush1.msra.mxu0 0.0
        %3870 = vmatprep.subr.mxu0 0.0
        %3871 = vmatpush1.msra.mxu0 0.0
        %3872 = vmatprep.subr.mxu0 0.0
        %3873 = vmatpush1.msra.mxu0 0.0
        %3874 = vmatprep.subr.mxu0 0.0
        %3875 = vmatpush1.msra.mxu0 0.0
        %3876 = vmatprep.subr.mxu0 0.0
        %3877 = vmatpush1.msra.mxu0 0.0
        %3878 = vmatprep.subr.mxu0 0.0
        %3879 = vmatpush1.msra.mxu0 0.0
        %3880 = vmatprep.subr.mxu0 0.0
        %3881 = vmatpush1.msra.mxu0 0.0
        %3882 = vmatprep.subr.mxu0 0.0
        %3883 = vmatpush1.msra.mxu0 0.0
        %3884 = vmatprep.subr.mxu0 0.0
        %3885 = vmatpush1.msra.mxu0 0.0
        %3886 = vmatprep.subr.mxu0 0.0
        %3887 = vmatpush1.msra.mxu0 0.0
        %3888 = vmatprep.subr.mxu0 0.0
        %3889 = vmatpush1.msra.mxu0 0.0
        %3890 = vmatprep.subr.mxu0 0.0
        %3891 = vmatpush1.msra.mxu0 0.0
        %3892 = vmatprep.subr.mxu0 0.0
        %3893 = vmatpush1.msra.mxu0 0.0
        %3894 = vmatprep.subr.mxu0 0.0
        %3895 = vmatpush1.msra.mxu0 0.0
        %3896 = vmatprep.subr.mxu0 0.0
        %3897 = vmatpush1.msra.mxu0 0.0
        %3898 = vmatprep.subr.mxu0 0.0
        %3899 = vmatpush1.msra.mxu0 0.0
        %3900 = vmatprep.subr.mxu0 0.0
        %3901 = vmatpush1.msra.mxu0 0.0
        %3902 = vmatprep.subr.mxu0 0.0
        %3903 = vmatpush1.msra.mxu0 0.0
        %3904 = vmatprep.subr.mxu0 0.0
        %3905 = vmatpush1.msra.mxu0 0.0
        %3906 = vmatprep.subr.mxu0 0.0
        %3907 = vmatpush1.msra.mxu0 0.0
        %3908 = vmatprep.subr.mxu0 0.0
        %3909 = vmatpush1.msra.mxu0 0.0
        %3910 = vmatprep.subr.mxu0 0.0
        %3911 = vmatpush1.msra.mxu0 0.0
        %3912 = vmatprep.subr.mxu0 0.0
        %3913 = vmatpush1.msra.mxu0 0.0
        %3914 = vmatprep.subr.mxu0 0.0
        %3915 = vmatpush1.msra.mxu0 0.0
        %3916 = vmatprep.subr.mxu0 0.0
        %3917 = vmatpush1.msra.mxu0 0.0
        %3918 = vmatprep.subr.mxu0 0.0
        %3919 = vmatpush1.msra.mxu0 0.0
        %3920 = vmatprep.mubr.f32.mxu0 0.0
        %3921 = vmatmul.mubr.f32.gmra.mrb[0].mxu0 %v3854
        %v3922 = vpop.f32.mrb[0].mxu0
        %v3923 = vadd.f32 0.0, %v3922
        %v3924 = vpop.f32.mrb[0].mxu0
        %3925 = vdwg.mxu0
        %3927 = vrot.lane.b32.xlu0 %v3765, 8
        %v3928 = vpop.permute.xlu0 %3927
        %3931 = vrot.lane.b32.xlu0 %v3844, 16
        %v3932 = vpop.permute.xlu0 %3931
        %3935 = vrot.lane.b32.xlu0 %v3923, 24
        %v3936 = vpop.permute.xlu0 %3935
        %v3938 = vsel %vm1169, %v3686, %v3928
        %v3939 = vsel %vm2202, %v3938, %v3932
        %v3940 = vsel %vm2204, %v3939, %v3936
        %3941 = vrot.lane.b32.xlu0 %v2851, 96
        %v3942 = vpop.permute.xlu0 %3941
        %3943 = vrot.lane.b32.xlu0 %v2856, 96
        %v3944 = vpop.permute.xlu0 %3943
        %v3948 = vsel %vm2202, %v3606, 0
        %3950 = vmatprep.subr.mxu0 0.0
        %3951 = vmatpush1.msra.mxu0 %v3942
        %3952 = vmatprep.subr.mxu0 0.0
        %3953 = vmatpush1.msra.mxu0 %v3944
        %3954 = vmatprep.subr.mxu0 0.0
        %3955 = vmatpush1.msra.mxu0 0.0
        %3956 = vmatprep.subr.mxu0 0.0
        %3957 = vmatpush1.msra.mxu0 0.0
        %3958 = vmatprep.subr.mxu0 0.0
        %3959 = vmatpush1.msra.mxu0 0.0
        %3960 = vmatprep.subr.mxu0 0.0
        %3961 = vmatpush1.msra.mxu0 0.0
        %3962 = vmatprep.subr.mxu0 0.0
        %3963 = vmatpush1.msra.mxu0 0.0
        %3964 = vmatprep.subr.mxu0 0.0
        %3965 = vmatpush1.msra.mxu0 0.0
        %3966 = vmatprep.subr.mxu0 0.0
        %3967 = vmatpush1.msra.mxu0 0.0
        %3968 = vmatprep.subr.mxu0 0.0
        %3969 = vmatpush1.msra.mxu0 0.0
        %3970 = vmatprep.subr.mxu0 0.0
        %3971 = vmatpush1.msra.mxu0 0.0
        %3972 = vmatprep.subr.mxu0 0.0
        %3973 = vmatpush1.msra.mxu0 0.0
        %3974 = vmatprep.subr.mxu0 0.0
        %3975 = vmatpush1.msra.mxu0 0.0
        %3976 = vmatprep.subr.mxu0 0.0
        %3977 = vmatpush1.msra.mxu0 0.0
        %3978 = vmatprep.subr.mxu0 0.0
        %3979 = vmatpush1.msra.mxu0 0.0
        %3980 = vmatprep.subr.mxu0 0.0
        %3981 = vmatpush1.msra.mxu0 0.0
        %3982 = vmatprep.subr.mxu0 0.0
        %3983 = vmatpush1.msra.mxu0 0.0
        %3984 = vmatprep.subr.mxu0 0.0
        %3985 = vmatpush1.msra.mxu0 0.0
        %3986 = vmatprep.subr.mxu0 0.0
        %3987 = vmatpush1.msra.mxu0 0.0
        %3988 = vmatprep.subr.mxu0 0.0
        %3989 = vmatpush1.msra.mxu0 0.0
        %3990 = vmatprep.subr.mxu0 0.0
        %3991 = vmatpush1.msra.mxu0 0.0
        %3992 = vmatprep.subr.mxu0 0.0
        %3993 = vmatpush1.msra.mxu0 0.0
        %3994 = vmatprep.subr.mxu0 0.0
        %3995 = vmatpush1.msra.mxu0 0.0
        %3996 = vmatprep.subr.mxu0 0.0
        %3997 = vmatpush1.msra.mxu0 0.0
        %3998 = vmatprep.subr.mxu0 0.0
        %3999 = vmatpush1.msra.mxu0 0.0
        %4000 = vmatprep.subr.mxu0 0.0
        %4001 = vmatpush1.msra.mxu0 0.0
        %4002 = vmatprep.subr.mxu0 0.0
        %4003 = vmatpush1.msra.mxu0 0.0
        %4004 = vmatprep.subr.mxu0 0.0
        %4005 = vmatpush1.msra.mxu0 0.0
        %4006 = vmatprep.subr.mxu0 0.0
        %4007 = vmatpush1.msra.mxu0 0.0
        %4008 = vmatprep.subr.mxu0 0.0
        %4009 = vmatpush1.msra.mxu0 0.0
        %4010 = vmatprep.subr.mxu0 0.0
        %4011 = vmatpush1.msra.mxu0 0.0
        %4012 = vmatprep.subr.mxu0 0.0
        %4013 = vmatpush1.msra.mxu0 0.0
        %4014 = vmatprep.mubr.f32.mxu0 0.0
        %4015 = vmatmul.mubr.f32.gmra.mrb[0].mxu0 %v3948
        %v4016 = vpop.f32.mrb[0].mxu0
        %v4017 = vadd.f32 0.0, %v4016
        %v4018 = vpop.f32.mrb[0].mxu0
        %4019 = vdwg.mxu0
        %4020 = vrot.lane.b32.xlu0 %v2851, 88
        %v4021 = vpop.permute.xlu0 %4020
        %4022 = vrot.lane.b32.xlu0 %v2856, 88
        %v4023 = vpop.permute.xlu0 %4022
        %v4027 = vsel %vm2202, %v3607, 0
        %4029 = vmatprep.subr.mxu0 0.0
        %4030 = vmatpush1.msra.mxu0 %v4021
        %4031 = vmatprep.subr.mxu0 0.0
        %4032 = vmatpush1.msra.mxu0 %v4023
        %4033 = vmatprep.subr.mxu0 0.0
        %4034 = vmatpush1.msra.mxu0 0.0
        %4035 = vmatprep.subr.mxu0 0.0
        %4036 = vmatpush1.msra.mxu0 0.0
        %4037 = vmatprep.subr.mxu0 0.0
        %4038 = vmatpush1.msra.mxu0 0.0
        %4039 = vmatprep.subr.mxu0 0.0
        %4040 = vmatpush1.msra.mxu0 0.0
        %4041 = vmatprep.subr.mxu0 0.0
        %4042 = vmatpush1.msra.mxu0 0.0
        %4043 = vmatprep.subr.mxu0 0.0
        %4044 = vmatpush1.msra.mxu0 0.0
        %4045 = vmatprep.subr.mxu0 0.0
        %4046 = vmatpush1.msra.mxu0 0.0
        %4047 = vmatprep.subr.mxu0 0.0
        %4048 = vmatpush1.msra.mxu0 0.0
        %4049 = vmatprep.subr.mxu0 0.0
        %4050 = vmatpush1.msra.mxu0 0.0
        %4051 = vmatprep.subr.mxu0 0.0
        %4052 = vmatpush1.msra.mxu0 0.0
        %4053 = vmatprep.subr.mxu0 0.0
        %4054 = vmatpush1.msra.mxu0 0.0
        %4055 = vmatprep.subr.mxu0 0.0
        %4056 = vmatpush1.msra.mxu0 0.0
        %4057 = vmatprep.subr.mxu0 0.0
        %4058 = vmatpush1.msra.mxu0 0.0
        %4059 = vmatprep.subr.mxu0 0.0
        %4060 = vmatpush1.msra.mxu0 0.0
        %4061 = vmatprep.subr.mxu0 0.0
        %4062 = vmatpush1.msra.mxu0 0.0
        %4063 = vmatprep.subr.mxu0 0.0
        %4064 = vmatpush1.msra.mxu0 0.0
        %4065 = vmatprep.subr.mxu0 0.0
        %4066 = vmatpush1.msra.mxu0 0.0
        %4067 = vmatprep.subr.mxu0 0.0
        %4068 = vmatpush1.msra.mxu0 0.0
        %4069 = vmatprep.subr.mxu0 0.0
        %4070 = vmatpush1.msra.mxu0 0.0
        %4071 = vmatprep.subr.mxu0 0.0
        %4072 = vmatpush1.msra.mxu0 0.0
        %4073 = vmatprep.subr.mxu0 0.0
        %4074 = vmatpush1.msra.mxu0 0.0
        %4075 = vmatprep.subr.mxu0 0.0
        %4076 = vmatpush1.msra.mxu0 0.0
        %4077 = vmatprep.subr.mxu0 0.0
        %4078 = vmatpush1.msra.mxu0 0.0
        %4079 = vmatprep.subr.mxu0 0.0
        %4080 = vmatpush1.msra.mxu0 0.0
        %4081 = vmatprep.subr.mxu0 0.0
        %4082 = vmatpush1.msra.mxu0 0.0
        %4083 = vmatprep.subr.mxu0 0.0
        %4084 = vmatpush1.msra.mxu0 0.0
        %4085 = vmatprep.subr.mxu0 0.0
        %4086 = vmatpush1.msra.mxu0 0.0
        %4087 = vmatprep.subr.mxu0 0.0
        %4088 = vmatpush1.msra.mxu0 0.0
        %4089 = vmatprep.subr.mxu0 0.0
        %4090 = vmatpush1.msra.mxu0 0.0
        %4091 = vmatprep.subr.mxu0 0.0
        %4092 = vmatpush1.msra.mxu0 0.0
        %4093 = vmatprep.mubr.f32.mxu0 0.0
        %4094 = vmatmul.mubr.f32.gmra.mrb[0].mxu0 %v4027
        %v4095 = vpop.f32.mrb[0].mxu0
        %v4096 = vadd.f32 0.0, %v4095
        %v4097 = vpop.f32.mrb[0].mxu0
        %4098 = vdwg.mxu0
        %4099 = vrot.lane.b32.xlu0 %v2851, 80
        %v4100 = vpop.permute.xlu0 %4099
        %4101 = vrot.lane.b32.xlu0 %v2856, 80
        %v4102 = vpop.permute.xlu0 %4101
        %v4106 = vsel %vm2202, %v3608, 0
        %4108 = vmatprep.subr.mxu0 0.0
        %4109 = vmatpush1.msra.mxu0 %v4100
        %4110 = vmatprep.subr.mxu0 0.0
        %4111 = vmatpush1.msra.mxu0 %v4102
        %4112 = vmatprep.subr.mxu0 0.0
        %4113 = vmatpush1.msra.mxu0 0.0
        %4114 = vmatprep.subr.mxu0 0.0
        %4115 = vmatpush1.msra.mxu0 0.0
        %4116 = vmatprep.subr.mxu0 0.0
        %4117 = vmatpush1.msra.mxu0 0.0
        %4118 = vmatprep.subr.mxu0 0.0
        %4119 = vmatpush1.msra.mxu0 0.0
        %4120 = vmatprep.subr.mxu0 0.0
        %4121 = vmatpush1.msra.mxu0 0.0
        %4122 = vmatprep.subr.mxu0 0.0
        %4123 = vmatpush1.msra.mxu0 0.0
        %4124 = vmatprep.subr.mxu0 0.0
        %4125 = vmatpush1.msra.mxu0 0.0
        %4126 = vmatprep.subr.mxu0 0.0
        %4127 = vmatpush1.msra.mxu0 0.0
        %4128 = vmatprep.subr.mxu0 0.0
        %4129 = vmatpush1.msra.mxu0 0.0
        %4130 = vmatprep.subr.mxu0 0.0
        %4131 = vmatpush1.msra.mxu0 0.0
        %4132 = vmatprep.subr.mxu0 0.0
        %4133 = vmatpush1.msra.mxu0 0.0
        %4134 = vmatprep.subr.mxu0 0.0
        %4135 = vmatpush1.msra.mxu0 0.0
        %4136 = vmatprep.subr.mxu0 0.0
        %4137 = vmatpush1.msra.mxu0 0.0
        %4138 = vmatprep.subr.mxu0 0.0
        %4139 = vmatpush1.msra.mxu0 0.0
        %4140 = vmatprep.subr.mxu0 0.0
        %4141 = vmatpush1.msra.mxu0 0.0
        %4142 = vmatprep.subr.mxu0 0.0
        %4143 = vmatpush1.msra.mxu0 0.0
        %4144 = vmatprep.subr.mxu0 0.0
        %4145 = vmatpush1.msra.mxu0 0.0
        %4146 = vmatprep.subr.mxu0 0.0
        %4147 = vmatpush1.msra.mxu0 0.0
        %4148 = vmatprep.subr.mxu0 0.0
        %4149 = vmatpush1.msra.mxu0 0.0
        %4150 = vmatprep.subr.mxu0 0.0
        %4151 = vmatpush1.msra.mxu0 0.0
        %4152 = vmatprep.subr.mxu0 0.0
        %4153 = vmatpush1.msra.mxu0 0.0
        %4154 = vmatprep.subr.mxu0 0.0
        %4155 = vmatpush1.msra.mxu0 0.0
        %4156 = vmatprep.subr.mxu0 0.0
        %4157 = vmatpush1.msra.mxu0 0.0
        %4158 = vmatprep.subr.mxu0 0.0
        %4159 = vmatpush1.msra.mxu0 0.0
        %4160 = vmatprep.subr.mxu0 0.0
        %4161 = vmatpush1.msra.mxu0 0.0
        %4162 = vmatprep.subr.mxu0 0.0
        %4163 = vmatpush1.msra.mxu0 0.0
        %4164 = vmatprep.subr.mxu0 0.0
        %4165 = vmatpush1.msra.mxu0 0.0
        %4166 = vmatprep.subr.mxu0 0.0
        %4167 = vmatpush1.msra.mxu0 0.0
        %4168 = vmatprep.subr.mxu0 0.0
        %4169 = vmatpush1.msra.mxu0 0.0
        %4170 = vmatprep.subr.mxu0 0.0
        %4171 = vmatpush1.msra.mxu0 0.0
        %4172 = vmatprep.mubr.f32.mxu0 0.0
        %4173 = vmatmul.mubr.f32.gmra.mrb[0].mxu0 %v4106
        %v4174 = vpop.f32.mrb[0].mxu0
        %v4175 = vadd.f32 0.0, %v4174
        %v4176 = vpop.f32.mrb[0].mxu0
        %4177 = vdwg.mxu0
        %4178 = vrot.lane.b32.xlu0 %v2851, 72
        %v4179 = vpop.permute.xlu0 %4178
        %4180 = vrot.lane.b32.xlu0 %v2856, 72
        %v4181 = vpop.permute.xlu0 %4180
        %v4185 = vsel %vm2202, %v3609, 0
        %4187 = vmatprep.subr.mxu0 0.0
        %4188 = vmatpush1.msra.mxu0 %v4179
        %4189 = vmatprep.subr.mxu0 0.0
        %4190 = vmatpush1.msra.mxu0 %v4181
        %4191 = vmatprep.subr.mxu0 0.0
        %4192 = vmatpush1.msra.mxu0 0.0
        %4193 = vmatprep.subr.mxu0 0.0
        %4194 = vmatpush1.msra.mxu0 0.0
        %4195 = vmatprep.subr.mxu0 0.0
        %4196 = vmatpush1.msra.mxu0 0.0
        %4197 = vmatprep.subr.mxu0 0.0
        %4198 = vmatpush1.msra.mxu0 0.0
        %4199 = vmatprep.subr.mxu0 0.0
        %4200 = vmatpush1.msra.mxu0 0.0
        %4201 = vmatprep.subr.mxu0 0.0
        %4202 = vmatpush1.msra.mxu0 0.0
        %4203 = vmatprep.subr.mxu0 0.0
        %4204 = vmatpush1.msra.mxu0 0.0
        %4205 = vmatprep.subr.mxu0 0.0
        %4206 = vmatpush1.msra.mxu0 0.0
        %4207 = vmatprep.subr.mxu0 0.0
        %4208 = vmatpush1.msra.mxu0 0.0
        %4209 = vmatprep.subr.mxu0 0.0
        %4210 = vmatpush1.msra.mxu0 0.0
        %4211 = vmatprep.subr.mxu0 0.0
        %4212 = vmatpush1.msra.mxu0 0.0
        %4213 = vmatprep.subr.mxu0 0.0
        %4214 = vmatpush1.msra.mxu0 0.0
        %4215 = vmatprep.subr.mxu0 0.0
        %4216 = vmatpush1.msra.mxu0 0.0
        %4217 = vmatprep.subr.mxu0 0.0
        %4218 = vmatpush1.msra.mxu0 0.0
        %4219 = vmatprep.subr.mxu0 0.0
        %4220 = vmatpush1.msra.mxu0 0.0
        %4221 = vmatprep.subr.mxu0 0.0
        %4222 = vmatpush1.msra.mxu0 0.0
        %4223 = vmatprep.subr.mxu0 0.0
        %4224 = vmatpush1.msra.mxu0 0.0
        %4225 = vmatprep.subr.mxu0 0.0
        %4226 = vmatpush1.msra.mxu0 0.0
        %4227 = vmatprep.subr.mxu0 0.0
        %4228 = vmatpush1.msra.mxu0 0.0
        %4229 = vmatprep.subr.mxu0 0.0
        %4230 = vmatpush1.msra.mxu0 0.0
        %4231 = vmatprep.subr.mxu0 0.0
        %4232 = vmatpush1.msra.mxu0 0.0
        %4233 = vmatprep.subr.mxu0 0.0
        %4234 = vmatpush1.msra.mxu0 0.0
        %4235 = vmatprep.subr.mxu0 0.0
        %4236 = vmatpush1.msra.mxu0 0.0
        %4237 = vmatprep.subr.mxu0 0.0
        %4238 = vmatpush1.msra.mxu0 0.0
        %4239 = vmatprep.subr.mxu0 0.0
        %4240 = vmatpush1.msra.mxu0 0.0
        %4241 = vmatprep.subr.mxu0 0.0
        %4242 = vmatpush1.msra.mxu0 0.0
        %4243 = vmatprep.subr.mxu0 0.0
        %4244 = vmatpush1.msra.mxu0 0.0
        %4245 = vmatprep.subr.mxu0 0.0
        %4246 = vmatpush1.msra.mxu0 0.0
        %4247 = vmatprep.subr.mxu0 0.0
        %4248 = vmatpush1.msra.mxu0 0.0
        %4249 = vmatprep.subr.mxu0 0.0
        %4250 = vmatpush1.msra.mxu0 0.0
        %4251 = vmatprep.mubr.f32.mxu0 0.0
        %4252 = vmatmul.mubr.f32.gmra.mrb[0].mxu0 %v4185
        %v4253 = vpop.f32.mrb[0].mxu0
        %v4254 = vadd.f32 0.0, %v4253
        %v4255 = vpop.f32.mrb[0].mxu0
        %4256 = vdwg.mxu0
        %4258 = vrot.lane.b32.xlu0 %v4096, 8
        %v4259 = vpop.permute.xlu0 %4258
        %4262 = vrot.lane.b32.xlu0 %v4175, 16
        %v4263 = vpop.permute.xlu0 %4262
        %4266 = vrot.lane.b32.xlu0 %v4254, 24
        %v4267 = vpop.permute.xlu0 %4266
        %v4269 = vsel %vm1169, %v4017, %v4259
        %v4270 = vsel %vm2202, %v4269, %v4263
        %v4271 = vsel %vm2204, %v4270, %v4267
        %v4273 = vlaneseq
        %v4274 = vshrl.u32 %v4273, 7
        %v4275 = vsub.s32 0, %v4274
        %v4276 = vrot.slane %v2863, %v4275
        %v4279 = vsel %vm1079, %v3940, 0
        %v4282 = vsel %vm1079, %v4271, 0
        %4284 = vmatprep.subr.mxu0 0.0
        %4285 = vmatpush1.msra.mxu0 %v2859
        %4286 = vmatprep.subr.mxu0 0.0
        %4287 = vmatpush1.msra.mxu0 %v2860
        %4288 = vmatprep.subr.mxu0 0.0
        %4289 = vmatpush1.msra.mxu0 %v2861
        %4290 = vmatprep.subr.mxu0 0.0
        %4291 = vmatpush1.msra.mxu0 %v2862
        %4292 = vmatprep.subr.mxu0 0.0
        %4293 = vmatpush1.msra.mxu0 0.0
        %4294 = vmatprep.subr.mxu0 0.0
        %4295 = vmatpush1.msra.mxu0 0.0
        %4296 = vmatprep.subr.mxu0 0.0
        %4297 = vmatpush1.msra.mxu0 0.0
        %4298 = vmatprep.subr.mxu0 0.0
        %4299 = vmatpush1.msra.mxu0 0.0
        %4300 = vmatprep.subr.mxu0 0.0
        %4301 = vmatpush1.msra.mxu0 0.0
        %4302 = vmatprep.subr.mxu0 0.0
        %4303 = vmatpush1.msra.mxu0 0.0
        %4304 = vmatprep.subr.mxu0 0.0
        %4305 = vmatpush1.msra.mxu0 0.0
        %4306 = vmatprep.subr.mxu0 0.0
        %4307 = vmatpush1.msra.mxu0 0.0
        %4308 = vmatprep.subr.mxu0 0.0
        %4309 = vmatpush1.msra.mxu0 0.0
        %4310 = vmatprep.subr.mxu0 0.0
        %4311 = vmatpush1.msra.mxu0 0.0
        %4312 = vmatprep.subr.mxu0 0.0
        %4313 = vmatpush1.msra.mxu0 0.0
        %4314 = vmatprep.subr.mxu0 0.0
        %4315 = vmatpush1.msra.mxu0 0.0
        %4316 = vmatprep.subr.mxu0 0.0
        %4317 = vmatpush1.msra.mxu0 0.0
        %4318 = vmatprep.subr.mxu0 0.0
        %4319 = vmatpush1.msra.mxu0 0.0
        %4320 = vmatprep.subr.mxu0 0.0
        %4321 = vmatpush1.msra.mxu0 0.0
        %4322 = vmatprep.subr.mxu0 0.0
        %4323 = vmatpush1.msra.mxu0 0.0
        %4324 = vmatprep.subr.mxu0 0.0
        %4325 = vmatpush1.msra.mxu0 0.0
        %4326 = vmatprep.subr.mxu0 0.0
        %4327 = vmatpush1.msra.mxu0 0.0
        %4328 = vmatprep.subr.mxu0 0.0
        %4329 = vmatpush1.msra.mxu0 0.0
        %4330 = vmatprep.subr.mxu0 0.0
        %4331 = vmatpush1.msra.mxu0 0.0
        %4332 = vmatprep.subr.mxu0 0.0
        %4333 = vmatpush1.msra.mxu0 0.0
        %4334 = vmatprep.subr.mxu0 0.0
        %4335 = vmatpush1.msra.mxu0 0.0
        %4336 = vmatprep.subr.mxu0 0.0
        %4337 = vmatpush1.msra.mxu0 0.0
        %4338 = vmatprep.subr.mxu0 0.0
        %4339 = vmatpush1.msra.mxu0 0.0
        %4340 = vmatprep.subr.mxu0 0.0
        %4341 = vmatpush1.msra.mxu0 0.0
        %4342 = vmatprep.subr.mxu0 0.0
        %4343 = vmatpush1.msra.mxu0 0.0
        %4344 = vmatprep.subr.mxu0 0.0
        %4345 = vmatpush1.msra.mxu0 0.0
        %4346 = vmatprep.subr.mxu0 0.0
        %4347 = vmatpush1.msra.mxu0 0.0
        %4348 = vmatprep.mubr.f32.mxu0 0.0
        %4349 = vmatmul.mubr.f32.gmra.mrb[0].mxu0 %v4279
        %v4350 = vpop.f32.mrb[0].mxu0
        %v4351 = vadd.f32 %v4276, %v4350
        %v4352 = vpop.f32.mrb[0].mxu0
        %4353 = vmatprep.mubr.f32.mxu0 0.0
        %4354 = vmatmul.mubr.f32.gmra.mrb[0].mxu0 %v4282
        %v4355 = vpop.f32.mrb[0].mxu0
        %v4356 = vadd.f32 %v4276, %v4355
        %v4357 = vpop.f32.mrb[0].mxu0
        %4358 = vdwg.mxu0
        %v4359 = vadd.f32 %v2657, %v4351
        %v4360 = vadd.f32 %v2658, %v4356
        %v4361 = vld [vmem:[%s1043] sm:$0x1]
        %v4362 = vld [vmem:[%s1046] sm:$0x1]
        %v4363 = vsel %vm1079, %v4359, 0.0
        %4364 = vadd.xlane.f32.xlu0 %v4363
        %v4365 = vpop.xlane.xlu0 %4364
        %v4366 = vsel %vm1079, %v4360, 0.0
        %4367 = vadd.xlane.f32.xlu0 %v4366
        %v4368 = vpop.xlane.xlu0 %4367
        %v4369 = vmul.f32 %v4365, %v2622
        %v4370 = vmul.f32 %v4368, %v2622
        %v4371 = vsub.f32 %v4359, %v4369
        %v4372 = vsub.f32 %v4360, %v4370
        %v4373 = vmul.f32 %v4371, %v4371
        %v4374 = vmul.f32 %v4372, %v4372
        %v4375 = vsel %vm1079, %v4373, 0.0
        %4376 = vadd.xlane.f32.xlu0 %v4375
        %v4377 = vpop.xlane.xlu0 %4376
        %v4378 = vsel %vm1079, %v4374, 0.0
        %4379 = vadd.xlane.f32.xlu0 %v4378
        %v4380 = vpop.xlane.xlu0 %4379
        %v4381 = vmul.f32 %v4377, %v2622
        %v4382 = vmul.f32 %v4380, %v2622
        %v4383 = vadd.f32 %v4381, 1e-05
        %v4384 = vadd.f32 %v4382, 1e-05
        %v4385 = vrsqrt.pop %v4383
        %v4386 = vrsqrt.pop %v4384
        %v4387 = vmul.f32 %v4371, %v4385
        %v4388 = vmul.f32 %v4372, %v4386
        %v4390 = vlaneseq
        %v4391 = vshrl.u32 %v4390, 7
        %v4392 = vsub.s32 0, %v4391
        %v4393 = vrot.slane %v4361, %v4392
        %v4395 = vmul.f32 %v4387, %v4393
        %v4396 = vmul.f32 %v4388, %v4393
        %v4398 = vlaneseq
        %v4399 = vshrl.u32 %v4398, 7
        %v4400 = vsub.s32 0, %v4399
        %v4401 = vrot.slane %v4362, %v4400
        %v4403 = vadd.f32 %v4395, %v4401
        %v4404 = vadd.f32 %v4396, %v4401
        %v4405 = vld [vmem:[%s869] sm:$0xff]
        %v4406 = vld [vmem:[%s869 + $0x8] sm:$0xff]
        %v4407 = vld [vmem:[%s869 + $0x10] sm:$0xff]
        %v4408 = vld [vmem:[%s869 + $0x18] sm:$0xff]
        %v4409 = vld [vmem:[%s1026] sm:$0x1]
        %v4411 = vlaneseq
        %v4412 = vshrl.u32 %v4411, 7
        %v4413 = vsub.s32 0, %v4412
        %v4414 = vrot.slane %v4409, %v4413
        %v4417 = vsel %vm1079, %v4403, 0
        %v4420 = vsel %vm1079, %v4404, 0
        %4422 = vmatprep.subr.mxu0 0.0
        %4423 = vmatpush1.msra.mxu0 %v4405
        %4424 = vmatprep.subr.mxu0 0.0
        %4425 = vmatpush1.msra.mxu0 %v4406
        %4426 = vmatprep.subr.mxu0 0.0
        %4427 = vmatpush1.msra.mxu0 %v4407
        %4428 = vmatprep.subr.mxu0 0.0
        %4429 = vmatpush1.msra.mxu0 %v4408
        %4430 = vmatprep.subr.mxu0 0.0
        %4431 = vmatpush1.msra.mxu0 0.0
        %4432 = vmatprep.subr.mxu0 0.0
        %4433 = vmatpush1.msra.mxu0 0.0
        %4434 = vmatprep.subr.mxu0 0.0
        %4435 = vmatpush1.msra.mxu0 0.0
        %4436 = vmatprep.subr.mxu0 0.0
        %4437 = vmatpush1.msra.mxu0 0.0
        %4438 = vmatprep.subr.mxu0 0.0
        %4439 = vmatpush1.msra.mxu0 0.0
        %4440 = vmatprep.subr.mxu0 0.0
        %4441 = vmatpush1.msra.mxu0 0.0
        %4442 = vmatprep.subr.mxu0 0.0
        %4443 = vmatpush1.msra.mxu0 0.0
        %4444 = vmatprep.subr.mxu0 0.0
        %4445 = vmatpush1.msra.mxu0 0.0
        %4446 = vmatprep.subr.mxu0 0.0
        %4447 = vmatpush1.msra.mxu0 0.0
        %4448 = vmatprep.subr.mxu0 0.0
        %4449 = vmatpush1.msra.mxu0 0.0
        %4450 = vmatprep.subr.mxu0 0.0
        %4451 = vmatpush1.msra.mxu0 0.0
        %4452 = vmatprep.subr.mxu0 0.0
        %4453 = vmatpush1.msra.mxu0 0.0
        %4454 = vmatprep.subr.mxu0 0.0
        %4455 = vmatpush1.msra.mxu0 0.0
        %4456 = vmatprep.subr.mxu0 0.0
        %4457 = vmatpush1.msra.mxu0 0.0
        %4458 = vmatprep.subr.mxu0 0.0
        %4459 = vmatpush1.msra.mxu0 0.0
        %4460 = vmatprep.subr.mxu0 0.0
        %4461 = vmatpush1.msra.mxu0 0.0
        %4462 = vmatprep.subr.mxu0 0.0
        %4463 = vmatpush1.msra.mxu0 0.0
        %4464 = vmatprep.subr.mxu0 0.0
        %4465 = vmatpush1.msra.mxu0 0.0
        %4466 = vmatprep.subr.mxu0 0.0
        %4467 = vmatpush1.msra.mxu0 0.0
        %4468 = vmatprep.subr.mxu0 0.0
        %4469 = vmatpush1.msra.mxu0 0.0
        %4470 = vmatprep.subr.mxu0 0.0
        %4471 = vmatpush1.msra.mxu0 0.0
        %4472 = vmatprep.subr.mxu0 0.0
        %4473 = vmatpush1.msra.mxu0 0.0
        %4474 = vmatprep.subr.mxu0 0.0
        %4475 = vmatpush1.msra.mxu0 0.0
        %4476 = vmatprep.subr.mxu0 0.0
        %4477 = vmatpush1.msra.mxu0 0.0
        %4478 = vmatprep.subr.mxu0 0.0
        %4479 = vmatpush1.msra.mxu0 0.0
        %4480 = vmatprep.subr.mxu0 0.0
        %4481 = vmatpush1.msra.mxu0 0.0
        %4482 = vmatprep.subr.mxu0 0.0
        %4483 = vmatpush1.msra.mxu0 0.0
        %4484 = vmatprep.subr.mxu0 0.0
        %4485 = vmatpush1.msra.mxu0 0.0
        %4486 = vmatprep.mubr.f32.mxu0 0.0
        %4487 = vmatmul.mubr.f32.gmra.mrb[0].mxu0 %v4417
        %v4488 = vpop.f32.mrb[0].mxu0
        %v4489 = vadd.f32 %v4414, %v4488
        %v4490 = vpop.f32.mrb[0].mxu0
        %4491 = vmatprep.mubr.f32.mxu0 0.0
        %4492 = vmatmul.mubr.f32.gmra.mrb[0].mxu0 %v4420
        %v4493 = vpop.f32.mrb[0].mxu0
        %v4494 = vadd.f32 %v4414, %v4493
        %v4495 = vpop.f32.mrb[0].mxu0
        %4496 = vdwg.mxu0
        %v4497 = vmax.f32 %v4489, 0.0
        %v4498 = vmax.f32 %v4494, 0.0
        %v4499 = vld [vmem:[%s1031] sm:$0xff]
        %v4500 = vld [vmem:[%s1031 + $0x8] sm:$0xff]
        %v4501 = vld [vmem:[%s1031 + $0x10] sm:$0xff]
        %v4502 = vld [vmem:[%s1031 + $0x18] sm:$0xff]
        %v4503 = vld [vmem:[%s1031 + $0x20] sm:$0xff]
        %v4504 = vld [vmem:[%s1031 + $0x28] sm:$0xff]
        %v4505 = vld [vmem:[%s1031 + $0x30] sm:$0xff]
        %v4506 = vld [vmem:[%s1031 + $0x38] sm:$0xff]
        %v4507 = vld [vmem:[%s1034] sm:$0x1]
        %v4509 = vlaneseq
        %v4510 = vshrl.u32 %v4509, 7
        %v4511 = vsub.s32 0, %v4510
        %v4512 = vrot.slane %v4507, %v4511
        %vm4514 = vcmask 523264
        %v4516 = vsel %vm4514, %v4497, 0
        %v4519 = vsel %vm4514, %v4498, 0
        %4521 = vmatprep.subr.mxu0 0.0
        %4522 = vmatpush1.msra.mxu0 %v4499
        %4523 = vmatprep.subr.mxu0 0.0
        %4524 = vmatpush1.msra.mxu0 %v4500
        %4525 = vmatprep.subr.mxu0 0.0
        %4526 = vmatpush1.msra.mxu0 %v4501
        %4527 = vmatprep.subr.mxu0 0.0
        %4528 = vmatpush1.msra.mxu0 %v4502
        %4529 = vmatprep.subr.mxu0 0.0
        %4530 = vmatpush1.msra.mxu0 %v4503
        %4531 = vmatprep.subr.mxu0 0.0
        %4532 = vmatpush1.msra.mxu0 %v4504
        %4533 = vmatprep.subr.mxu0 0.0
        %4534 = vmatpush1.msra.mxu0 %v4505
        %4535 = vmatprep.subr.mxu0 0.0
        %4536 = vmatpush1.msra.mxu0 %v4506
        %4537 = vmatprep.subr.mxu0 0.0
        %4538 = vmatpush1.msra.mxu0 0.0
        %4539 = vmatprep.subr.mxu0 0.0
        %4540 = vmatpush1.msra.mxu0 0.0
        %4541 = vmatprep.subr.mxu0 0.0
        %4542 = vmatpush1.msra.mxu0 0.0
        %4543 = vmatprep.subr.mxu0 0.0
        %4544 = vmatpush1.msra.mxu0 0.0
        %4545 = vmatprep.subr.mxu0 0.0
        %4546 = vmatpush1.msra.mxu0 0.0
        %4547 = vmatprep.subr.mxu0 0.0
        %4548 = vmatpush1.msra.mxu0 0.0
        %4549 = vmatprep.subr.mxu0 0.0
        %4550 = vmatpush1.msra.mxu0 0.0
        %4551 = vmatprep.subr.mxu0 0.0
        %4552 = vmatpush1.msra.mxu0 0.0
        %4553 = vmatprep.subr.mxu0 0.0
        %4554 = vmatpush1.msra.mxu0 0.0
        %4555 = vmatprep.subr.mxu0 0.0
        %4556 = vmatpush1.msra.mxu0 0.0
        %4557 = vmatprep.subr.mxu0 0.0
        %4558 = vmatpush1.msra.mxu0 0.0
        %4559 = vmatprep.subr.mxu0 0.0
        %4560 = vmatpush1.msra.mxu0 0.0
        %4561 = vmatprep.subr.mxu0 0.0
        %4562 = vmatpush1.msra.mxu0 0.0
        %4563 = vmatprep.subr.mxu0 0.0
        %4564 = vmatpush1.msra.mxu0 0.0
        %4565 = vmatprep.subr.mxu0 0.0
        %4566 = vmatpush1.msra.mxu0 0.0
        %4567 = vmatprep.subr.mxu0 0.0
        %4568 = vmatpush1.msra.mxu0 0.0
        %4569 = vmatprep.subr.mxu0 0.0
        %4570 = vmatpush1.msra.mxu0 0.0
        %4571 = vmatprep.subr.mxu0 0.0
        %4572 = vmatpush1.msra.mxu0 0.0
        %4573 = vmatprep.subr.mxu0 0.0
        %4574 = vmatpush1.msra.mxu0 0.0
        %4575 = vmatprep.subr.mxu0 0.0
        %4576 = vmatpush1.msra.mxu0 0.0
        %4577 = vmatprep.subr.mxu0 0.0
        %4578 = vmatpush1.msra.mxu0 0.0
        %4579 = vmatprep.subr.mxu0 0.0
        %4580 = vmatpush1.msra.mxu0 0.0
        %4581 = vmatprep.subr.mxu0 0.0
        %4582 = vmatpush1.msra.mxu0 0.0
        %4583 = vmatprep.subr.mxu0 0.0
        %4584 = vmatpush1.msra.mxu0 0.0
        %4585 = vmatprep.mubr.f32.mxu0 0.0
        %4586 = vmatmul.mubr.f32.gmra.mrb[0].mxu0 %v4516
        %v4587 = vpop.f32.mrb[0].mxu0
        %v4588 = vadd.f32 %v4512, %v4587
        %v4589 = vpop.f32.mrb[0].mxu0
        %4590 = vmatprep.mubr.f32.mxu0 0.0
        %4591 = vmatmul.mubr.f32.gmra.mrb[0].mxu0 %v4519
        %v4592 = vpop.f32.mrb[0].mxu0
        %v4593 = vadd.f32 %v4512, %v4592
        %v4594 = vpop.f32.mrb[0].mxu0
        %4595 = vdwg.mxu0
        %v4596 = vadd.f32 %v4403, %v4588
        %v4597 = vadd.f32 %v4404, %v4593
        %v4598 = vld [vmem:[%s1049] sm:$0x1]
        %v4599 = vld [vmem:[%s1052] sm:$0x1]
        %v4600 = vsel %vm1079, %v4596, 0.0
        %4601 = vadd.xlane.f32.xlu0 %v4600
        %v4602 = vpop.xlane.xlu0 %4601
        %v4603 = vsel %vm1079, %v4597, 0.0
        %4604 = vadd.xlane.f32.xlu0 %v4603
        %v4605 = vpop.xlane.xlu0 %4604
        %v4606 = vmul.f32 %v4602, %v2622
        %v4607 = vmul.f32 %v4605, %v2622
        %v4608 = vsub.f32 %v4596, %v4606
        %v4609 = vsub.f32 %v4597, %v4607
        %v4610 = vmul.f32 %v4608, %v4608
        %v4611 = vmul.f32 %v4609, %v4609
        %v4612 = vsel %vm1079, %v4610, 0.0
        %4613 = vadd.xlane.f32.xlu0 %v4612
        %v4614 = vpop.xlane.xlu0 %4613
        %v4615 = vsel %vm1079, %v4611, 0.0
        %4616 = vadd.xlane.f32.xlu0 %v4615
        %v4617 = vpop.xlane.xlu0 %4616
        %v4618 = vmul.f32 %v4614, %v2622
        %v4619 = vmul.f32 %v4617, %v2622
        %v4620 = vadd.f32 %v4618, 1e-05
        %v4621 = vadd.f32 %v4619, 1e-05
        %v4622 = vrsqrt.pop %v4620
        %v4623 = vrsqrt.pop %v4621
        %v4624 = vmul.f32 %v4608, %v4622
        %v4625 = vmul.f32 %v4609, %v4623
        %v4627 = vlaneseq
        %v4628 = vshrl.u32 %v4627, 7
        %v4629 = vsub.s32 0, %v4628
        %v4630 = vrot.slane %v4598, %v4629
        %v4632 = vmul.f32 %v4624, %v4630
        %v4633 = vmul.f32 %v4625, %v4630
        %v4635 = vlaneseq
        %v4636 = vshrl.u32 %v4635, 7
        %v4637 = vsub.s32 0, %v4636
        %v4638 = vrot.slane %v4599, %v4637
        %v4640 = vadd.f32 %v4632, %v4638
        %v4641 = vadd.f32 %v4633, %v4638
        %4642 = vst.msk [vmem:[#allocation2] sm:$0xff] %vm1079, %v4640
        %4643 = vst.msk [vmem:[#allocation2 + $0x8] sm:$0xff] %vm1079, %v4641
        %p4644 = scmp.eq.s32.totalorder %s36, 1
        // Predicated region
        $region133: #{tpu_custom_call.1} parent=107 // pred_check
          %p4645 = pneg %p4644
        $region134: #{tpu_custom_call.1} parent=107 // pred_check_branch
          %4647 = sbr.rel (%p4645) target = $region136
        $region135: #{tpu_custom_call.1} parent=107 // pred_region
          %4648 = vst.msk [vmem:[#allocation11] sm:$0xff] %vm1079, %v4640
          %4649 = vst.msk [vmem:[#allocation11 + $0x8] sm:$0xff] %vm1079, %v4641
        $region136: #{tpu_custom_call.1} parent=107 // pred_fallthru
          _
        // Predicated region
        $region137: #{tpu_custom_call.1} parent=107 // pred_check
          %p4650 = pneg %p611
        $region138: #{tpu_custom_call.1} parent=107 // pred_check_branch
          %4652 = sbr.rel (%p4650) target = $region140
        $region139: #{tpu_custom_call.1} parent=107 // pred_region
          %s4654 = ssub.s32 256, 256
          %4655 = vsyncadd [#allocation5], %s4654
          %s4656 = sshll.u32 [#allocation11], 4
          %s4657 = int_to_ptr.vmem [resolvable:$true] %s4656
          %4662 = dma.vmem_to_hbm [thread:$0]  %s4657, 256, %s22, [#allocation5], 128, 128, 8
        $region140: #{tpu_custom_call.1} parent=107 // pred_fallthru
          _
        // Predicated region
        $region141: #{tpu_custom_call.1} parent=107 // pred_check
          %p4663 = pneg %p611
        $region142: #{tpu_custom_call.1} parent=107 // pred_check_branch
          %4665 = sbr.rel (%p4663) target = $region144
        $region143: #{tpu_custom_call.1} parent=107 // pred_region
          %4666 = dma.done [#allocation5], 256
        $region144: #{tpu_custom_call.1} parent=107 // pred_fallthru
          _
      $region108: #{tpu_custom_call.1} parent=5 // pred_fallthru
        _
      %p4667 = scmp.le.s32.totalorder 2, %s31
      // Predicated region
      $region145: #{tpu_custom_call.1} parent=5 // pred_check
        %p4668 = pneg %p4667
      $region146: #{tpu_custom_call.1} parent=5 // pred_check_branch
        %4670 = sbr.rel (%p4668) target = $region148
      $region147: #{tpu_custom_call.1} parent=5 // pred_region
        %s4671 = ssub.s32 %s31, 2
      $region148: #{tpu_custom_call.1} parent=5 // pred_fallthru
        _
    $region6: #{tpu_custom_call.1} parent=1 // loop_footer
      %s35 = sadd.s32 1, %s31
    $region7: #{tpu_custom_call.1} parent=1 // loop_footer_branch
      %30 = sbr.rel target = $region3
    $region8: #{tpu_custom_call.1} parent=1 // loop_exit
      _
    %4672 = vsyncpa [#allocation4], 1
    %s4673 = scalar_lea.sflag [#allocation4], 1
    %4674 = vsyncpa %s4673, 1
    %4675 = vsyncpa [#allocation7], 1
    %4676 = vsyncpa [#allocation5], 1
    %s4677 = scalar_lea.sflag [#allocation5], 1
    %4678 = vsyncpa %s4677, 1

</llo_original>
